<compile_context>
chip_gen: v6e
topology: v6e:2x2x1
jax: 0.10.0
libtpu: 0.0.40
codegen_flags: <defaults>
</compile_context>

<pallas_src>
import functools

import jax
import jax.numpy as jnp
from jax import lax
from jax.experimental import pallas as pl
from jax.experimental.pallas import tpu as pltpu

BN_EPS = 1e-5
COMPUTE_DTYPE = jnp.bfloat16   # MXU operand dtype (accumulate in f32)
LANE = 128


# ----------------------------- Pallas kernel ------------------------------- #

def _bottleneck_kernel(x_ref, w1_ref, b1_ref, w2_ref, b2_ref,
                       w3_ref, b3_ref, o_ref, h1p_ref, *, H, W):
    """One image per grid step.

    x_ref : (1, HW, Cp)  f32   padded-channel NHWC input (f32 kept for residual)
    w1    : (Cp, Pp)     bf16  BN1 scale folded in
    b1    : (1, Pp)      f32
    w2    : (9*Pp, Pp)   bf16  BN2 scale folded in, taps stacked on K
    b2    : (1, Pp)      f32
    w3    : (Pp, Cp)     bf16  BN3 scale folded in
    b3    : (1, Cp)      f32
    o_ref : (1, HW, Cp)  bf16
    h1p_ref: (H+2, W+2, Pp) bf16 VMEM scratch (zero halo + interior h1)
    """
    HW = H * W
    Pp = w1_ref.shape[1]

    x_f32 = x_ref[0]                                   # (HW, Cp) f32 residual
    x_bf = x_f32.astype(COMPUTE_DTYPE)

    # ---- conv1 (1x1) + folded BN1 bias + ReLU; single bf16 cast ----------- #
    h1 = jnp.dot(x_bf, w1_ref[...], preferred_element_type=jnp.float32)
    h1 = jnp.maximum(h1 + b1_ref[...], 0.0).astype(COMPUTE_DTYPE)   # (HW, Pp)

    # ---- zero-halo scratch: zero once, write interior ---------------------- #
    h1p_ref[...] = jnp.zeros_like(h1p_ref)
    h1p_ref[1:H + 1, 1:W + 1, :] = h1.reshape(H, W, Pp)

    # ---- conv2 (3x3, pad=1, stride=1) as ONE matmul with K = 9*Pp --------- #
    # Each tap is a static slice of the halo scratch (exactly reproduces the
    # conv's zero padding); taps are stacked along the lane/contraction dim.
    patches = jnp.concatenate(
        [h1p_ref[ky:ky + H, kx:kx + W, :]
         for ky in range(3) for kx in range(3)],
        axis=-1).reshape(HW, 9 * Pp)                   # (HW, 9*Pp) bf16
    h2 = jnp.dot(patches, w2_ref[...], preferred_element_type=jnp.float32)
    h2 = jnp.maximum(h2 + b2_ref[...], 0.0).astype(COMPUTE_DTYPE)   # (HW, Pp)

    # ---- conv3 (1x1) + BN3 bias, f32 residual add, final ReLU, bf16 store -- #
    h3 = jnp.dot(h2, w3_ref[...], preferred_element_type=jnp.float32)
    h3 = h3 + b3_ref[...] + x_f32
    o_ref[0] = jnp.maximum(h3, 0.0).astype(o_ref.dtype)


# ------------------------------ wrapper ------------------------------------ #

def _round_up(n, m=LANE):
    return ((n + m - 1) // m) * m


def _fold_bn(gamma, beta, mean, var, eps=BN_EPS):
    scale = gamma / jnp.sqrt(var + eps)
    bias = beta - mean * scale
    return scale.astype(jnp.float32), bias.astype(jnp.float32)


def prepare_kernel_params(p):
    """PyTorch-layout params -> padded, matmul-friendly layout with BN folded."""
    P = p["conv1_w"].shape[0]
    Cin = p["conv1_w"].shape[1]
    Cout = p["conv3_w"].shape[0]
    assert Cin == Cout, "downsample=None requires inplanes == 4*planes"
    Pp, Cp = _round_up(P), _round_up(Cin)

    s1, b1 = _fold_bn(*p["bn1"])
    s2, b2 = _fold_bn(*p["bn2"])
    s3, b3 = _fold_bn(*p["bn3"])

    w1 = jnp.transpose(p["conv1_w"][:, :, 0, 0], (1, 0)) * s1[None, :]          # (Cin, P)
    w2 = jnp.transpose(p["conv2_w"], (2, 3, 1, 0)) * s2[None, None, None, :]     # (3,3,P,P)
    w3 = jnp.transpose(p["conv3_w"][:, :, 0, 0], (1, 0)) * s3[None, :]           # (P, Cout)

    # Pad channels to lane-dense multiples of 128 (zero rows/cols preserve math).
    w1p = jnp.zeros((Cp, Pp), jnp.float32).at[:Cin, :P].set(w1)
    w2p = jnp.zeros((3, 3, Pp, Pp), jnp.float32).at[:, :, :P, :P].set(w2)
    w2p = w2p.reshape(9 * Pp, Pp)                       # tap-major: (ky*3+kx)*Pp + i
    w3p = jnp.zeros((Pp, Cp), jnp.float32).at[:P, :Cout].set(w3)
    b1p = jnp.zeros((1, Pp), jnp.float32).at[0, :P].set(b1)
    b2p = jnp.zeros((1, Pp), jnp.float32).at[0, :P].set(b2)
    b3p = jnp.zeros((1, Cp), jnp.float32).at[0, :Cout].set(b3)

    cd = COMPUTE_DTYPE
    return dict(w1=w1p.astype(cd), b1=b1p,
                w2=w2p.astype(cd), b2=b2p,
                w3=w3p.astype(cd), b3=b3p)


def bottleneck_forward(x_nchw, kp):
    B, Cin, H, W = x_nchw.shape
    Pp = kp["w1"].shape[1]
    Cp = kp["w3"].shape[1]
    HW = H * W
    assert kp["w1"].shape[0] == Cp, "channel padding mismatch"

    # TODO(synk): if the caller can supply/consume NHWC, drop these transposes
    # (full-tensor HBM passes outside the kernel).
    x = jnp.transpose(x_nchw, (0, 2, 3, 1)).reshape(B, HW, Cin)
    if Cp > Cin:
        x = jnp.pad(x, ((0, 0), (0, 0), (0, Cp - Cin)))
    x = x.astype(jnp.float32)          # keep f32: residual add is not double-rounded

    def full_spec(a):
        nd = a.ndim
        return pl.BlockSpec(a.shape, lambda b, _nd=nd: (0,) * _nd)

    param_bytes = sum(kp[k].size * kp[k].dtype.itemsize
                      for k in ("w1", "b1", "w2", "b2", "w3", "b3"))
    flops = 2 * B * HW * (Cp * Pp + 9 * Pp * Pp + Pp * Cp)
    bytes_accessed = int(x.size * 4 + B * HW * Cp * 2 + param_bytes)

    vmem_est = (2 * HW * Cp * 4            # input block (double-buffered, f32)
                + 2 * HW * Cp * 2          # output block (double-buffered, bf16)
                + (H + 2) * (W + 2) * Pp * 2   # halo scratch
                + HW * 9 * Pp * 2          # stacked conv2 operand
                + 2 * HW * Pp * 4          # h1/h2 f32 temporaries
                + 2 * param_bytes)         # weights (double-buffered)
    vmem_limit = int(min(max(2 * vmem_est, 32 * 1024 * 1024), 64 * 1024 * 1024))

    out = pl.pallas_call(
        functools.partial(_bottleneck_kernel, H=H, W=W),
        out_shape=jax.ShapeDtypeStruct((B, HW, Cp), COMPUTE_DTYPE),
        grid=(B,),
        in_specs=[pl.BlockSpec((1, HW, Cp), lambda b: (b, 0, 0)),
                  full_spec(kp["w1"]), full_spec(kp["b1"]),
                  full_spec(kp["w2"]), full_spec(kp["b2"]),
                  full_spec(kp["w3"]), full_spec(kp["b3"])],
        out_specs=pl.BlockSpec((1, HW, Cp), lambda b: (b, 0, 0)),
        scratch_shapes=[pltpu.VMEM((H + 2, W + 2, Pp), COMPUTE_DTYPE)],
        compiler_params=pltpu.CompilerParams(
            dimension_semantics=("parallel",),
            vmem_limit_bytes=vmem_limit),
        cost_estimate=pl.CostEstimate(
            flops=int(flops), transcendentals=0,
            bytes_accessed=bytes_accessed),
    )(x, kp["w1"], kp["b1"], kp["w2"], kp["b2"], kp["w3"], kp["b3"])

    out = out[:, :, :Cin].reshape(B, H, W, Cin)                       # drop pad
    return jnp.transpose(out, (0, 3, 1, 2)).astype(x_nchw.dtype)      # NCHW


# --------------------------- deterministic init ----------------------------- #

def init_params(key, inplanes, planes):
    P, E = planes, 4 * planes
    assert inplanes == E, "downsample=None requires inplanes == 4*planes"
    ks = jax.random.split(key, 6)

    def bn_init(k, c):
        k1, k2, k3, k4 = jax.random.split(k, 4)
        gamma = 1.0 + 0.1 * jax.random.normal(k1, (c,), jnp.float32)
        beta = 0.1 * jax.random.normal(k2, (c,), jnp.float32)
        mean = 0.1 * jax.random.normal(k3, (c,), jnp.float32)
        var = jnp.abs(jax.random.normal(k4, (c,), jnp.float32)) + 0.5
        return (gamma, beta, mean, var)

    return dict(
        conv1_w=0.1 * jax.random.normal(ks[0], (P, inplanes, 1, 1), jnp.float32),
        conv2_w=0.1 * jax.random.normal(ks[1], (P, P, 3, 3), jnp.float32),
        conv3_w=0.1 * jax.random.normal(ks[2], (E, P, 1, 1), jnp.float32),
        bn1=bn_init(ks[3], P),
        bn2=bn_init(ks[4], P),
        bn3=bn_init(ks[5], E),
    )


# ------------------------- pure-JAX reference ------------------------------- #

def reference_forward(x, p):
    # TODO(synk): PyTorch BatchNorm2d in train mode uses batch statistics;
    #             here BN is evaluated with running stats (inference mode).
    def conv(a, w, pad):
        return lax.conv_general_dilated(
            a, w, (1, 1), [(pad, pad), (pad, pad)],
            dimension_numbers=("NCHW", "OIHW", "NCHW"))

    def bn(a, stats):
        g, b, m, v = stats
        inv = g / jnp.sqrt(v + BN_EPS)
        return a * inv[None, :, None, None] + (b - m * inv)[None, :, None, None]

    out = jax.nn.relu(bn(conv(x, p["conv1_w"], 0), p["bn1"]))
    out = jax.nn.relu(bn(conv(out, p["conv2_w"], 1), p["bn2"]))
    out = bn(conv(out, p["conv3_w"], 0), p["bn3"])
    return jax.nn.relu(out + x)


# --------------------------------- main ------------------------------------- #

if __name__ == "__main__":
    key = jax.random.PRNGKey(0)
    kx, kp = jax.random.split(key)

    B, planes, H, W = 2, 8, 16, 16
    inplanes = 4 * planes                       # 32 (residual add requires this)

    x = jax.random.normal(kx, (B, inplanes, H, W), jnp.float32)   # NCHW input
    params = init_params(kp, inplanes, planes)
    kparams = prepare_kernel_params(params)

    out = bottleneck_forward(x, kparams)
    out = jax.block_until_ready(out)

    ref = jax.block_until_ready(reference_forward(x, params))
    assert out.shape == (B, 4 * planes, H, W)
    # tolerance accounts for bf16 matmul operands (f32 accumulation) + bf16 output
    if not jnp.allclose(out, ref, atol=3e-2, rtol=3e-2):
        raise AssertionError(
            f"mismatch vs reference, max abs diff = {jnp.max(jnp.abs(out - ref))}")

    print("KERNEL_OK")
</pallas_src>

<mosaic_0001>
module attributes {stable_mosaic.version = 11 : i64} {
  func.func @_bottleneck_kernel(%arg0: i32, %arg1: memref<1x256x128xf32, #tpu.memory_space<vmem>>, %arg2: memref<128x128xbf16, #tpu.memory_space<vmem>>, %arg3: memref<1x128xf32, #tpu.memory_space<vmem>>, %arg4: memref<1152x128xbf16, #tpu.memory_space<vmem>>, %arg5: memref<1x128xf32, #tpu.memory_space<vmem>>, %arg6: memref<128x128xbf16, #tpu.memory_space<vmem>>, %arg7: memref<1x128xf32, #tpu.memory_space<vmem>>, %arg8: memref<1x256x128xbf16, #tpu.memory_space<vmem>>, %arg9: memref<18x18x128xbf16, #tpu.memory_space<vmem>>) attributes {dimension_semantics = [#tpu.dimension_semantics<parallel>], iteration_bounds = array<i64: 2>, scalar_prefetch = 0 : i64, scratch_operands = 1 : i64, tpu.core_type = #tpu.core_type<tc>, window_params = [{transform_indices = @transform_0, window_bounds = array<i64: 1, 256, 128>}, {pipeline_mode = #tpu.pipeline_mode<synchronous>, transform_indices = @transform_1, window_bounds = array<i64: 128, 128>}, {pipeline_mode = #tpu.pipeline_mode<synchronous>, transform_indices = @transform_2, window_bounds = array<i64: 1, 128>}, {pipeline_mode = #tpu.pipeline_mode<synchronous>, transform_indices = @transform_3, window_bounds = array<i64: 1152, 128>}, {pipeline_mode = #tpu.pipeline_mode<synchronous>, transform_indices = @transform_4, window_bounds = array<i64: 1, 128>}, {pipeline_mode = #tpu.pipeline_mode<synchronous>, transform_indices = @transform_5, window_bounds = array<i64: 128, 128>}, {pipeline_mode = #tpu.pipeline_mode<synchronous>, transform_indices = @transform_6, window_bounds = array<i64: 1, 128>}, {transform_indices = @transform_7, window_bounds = array<i64: 1, 256, 128>}]} {
    %c0 = arith.constant 0 : index
    %c0_0 = arith.constant 0 : index
    %c0_1 = arith.constant 0 : index
    %0 = vector.load %arg1[%c0, %c0_0, %c0_1] : memref<1x256x128xf32, #tpu.memory_space<vmem>>, vector<1x256x128xf32>
    %1 = vector.shape_cast %0 : vector<1x256x128xf32> to vector<256x128xf32>
    %2 = arith.truncf %1 : vector<256x128xf32> to vector<256x128xbf16>
    %c0_2 = arith.constant 0 : index
    %c0_3 = arith.constant 0 : index
    %3 = vector.load %arg2[%c0_2, %c0_3] : memref<128x128xbf16, #tpu.memory_space<vmem>>, vector<128x128xbf16>
    %cst = arith.constant dense<0.000000e+00> : vector<256x128xf32>
    %4 = tpu.matmul %2, %3, %cst {dimension_numbers = #tpu.dot_dimension_numbers<[1], [0], [0], [1], [0, 0, 1, 1], [], []>} : vector<256x128xbf16>, vector<128x128xbf16>, vector<256x128xf32> -> vector<256x128xf32>
    %c0_4 = arith.constant 0 : index
    %c0_5 = arith.constant 0 : index
    %5 = vector.load %arg3[%c0_4, %c0_5] : memref<1x128xf32, #tpu.memory_space<vmem>>, vector<1x128xf32>
    %6 = vector.broadcast %5 : vector<1x128xf32> to vector<256x128xf32>
    %7 = arith.addf %4, %6 : vector<256x128xf32>
    %cst_6 = arith.constant 0.000000e+00 : f32
    %8 = vector.broadcast %cst_6 : f32 to vector<256x128xf32>
    %9 = arith.maximumf %7, %8 : vector<256x128xf32>
    %10 = arith.truncf %9 : vector<256x128xf32> to vector<256x128xbf16>
    %cst_7 = arith.constant 0.000000e+00 : bf16
    %11 = vector.broadcast %cst_7 : bf16 to vector<18x18x128xbf16>
    %c0_8 = arith.constant 0 : index
    %c0_9 = arith.constant 0 : index
    %c0_10 = arith.constant 0 : index
    %12 = vector.load %arg9[%c0_8, %c0_9, %c0_10] : memref<18x18x128xbf16, #tpu.memory_space<vmem>>, vector<18x18x128xbf16>
    tpu.vector_store %arg9[%c0_8, %c0_9, %c0_10], %11 {strides = array<i32>} : memref<18x18x128xbf16, #tpu.memory_space<vmem>>, vector<18x18x128xbf16>,
    %13 = vector.shape_cast %10 : vector<256x128xbf16> to vector<16x16x128xbf16>
    %c1 = arith.constant 1 : index
    %c1_11 = arith.constant 1 : index
    %c0_12 = arith.constant 0 : index
    %14 = vector.load %arg9[%c1, %c1_11, %c0_12] : memref<18x18x128xbf16, #tpu.memory_space<vmem>>, vector<16x16x128xbf16>
    tpu.vector_store %arg9[%c1, %c1_11, %c0_12], %13 {strides = array<i32>} : memref<18x18x128xbf16, #tpu.memory_space<vmem>>, vector<16x16x128xbf16>,
    %c0_13 = arith.constant 0 : index
    %c0_14 = arith.constant 0 : index
    %c0_15 = arith.constant 0 : index
    %15 = vector.load %arg9[%c0_13, %c0_14, %c0_15] : memref<18x18x128xbf16, #tpu.memory_space<vmem>>, vector<16x16x128xbf16>
    %c0_16 = arith.constant 0 : index
    %c1_17 = arith.constant 1 : index
    %c0_18 = arith.constant 0 : index
    %16 = vector.load %arg9[%c0_16, %c1_17, %c0_18] : memref<18x18x128xbf16, #tpu.memory_space<vmem>>, vector<16x16x128xbf16>
    %c0_19 = arith.constant 0 : index
    %c2 = arith.constant 2 : index
    %c0_20 = arith.constant 0 : index
    %17 = vector.load %arg9[%c0_19, %c2, %c0_20] : memref<18x18x128xbf16, #tpu.memory_space<vmem>>, vector<16x16x128xbf16>
    %c1_21 = arith.constant 1 : index
    %c0_22 = arith.constant 0 : index
    %c0_23 = arith.constant 0 : index
    %18 = vector.load %arg9[%c1_21, %c0_22, %c0_23] : memref<18x18x128xbf16, #tpu.memory_space<vmem>>, vector<16x16x128xbf16>
    %c1_24 = arith.constant 1 : index
    %c1_25 = arith.constant 1 : index
    %c0_26 = arith.constant 0 : index
    %19 = vector.load %arg9[%c1_24, %c1_25, %c0_26] : memref<18x18x128xbf16, #tpu.memory_space<vmem>>, vector<16x16x128xbf16>
    %c1_27 = arith.constant 1 : index
    %c2_28 = arith.constant 2 : index
    %c0_29 = arith.constant 0 : index
    %20 = vector.load %arg9[%c1_27, %c2_28, %c0_29] : memref<18x18x128xbf16, #tpu.memory_space<vmem>>, vector<16x16x128xbf16>
    %c2_30 = arith.constant 2 : index
    %c0_31 = arith.constant 0 : index
    %c0_32 = arith.constant 0 : index
    %21 = vector.load %arg9[%c2_30, %c0_31, %c0_32] : memref<18x18x128xbf16, #tpu.memory_space<vmem>>, vector<16x16x128xbf16>
    %c2_33 = arith.constant 2 : index
    %c1_34 = arith.constant 1 : index
    %c0_35 = arith.constant 0 : index
    %22 = vector.load %arg9[%c2_33, %c1_34, %c0_35] : memref<18x18x128xbf16, #tpu.memory_space<vmem>>, vector<16x16x128xbf16>
    %c2_36 = arith.constant 2 : index
    %c2_37 = arith.constant 2 : index
    %c0_38 = arith.constant 0 : index
    %23 = vector.load %arg9[%c2_36, %c2_37, %c0_38] : memref<18x18x128xbf16, #tpu.memory_space<vmem>>, vector<16x16x128xbf16>
    %24 = tpu.concatenate %15, %16, %17, %18, %19, %20, %21, %22, %23 in 2 : vector<16x16x128xbf16>, vector<16x16x128xbf16>, vector<16x16x128xbf16>, vector<16x16x128xbf16>, vector<16x16x128xbf16>, vector<16x16x128xbf16>, vector<16x16x128xbf16>, vector<16x16x128xbf16>, vector<16x16x128xbf16> -> vector<16x16x1152xbf16>
    %25 = vector.shape_cast %24 : vector<16x16x1152xbf16> to vector<256x1152xbf16>
    %c0_39 = arith.constant 0 : index
    %c0_40 = arith.constant 0 : index
    %26 = vector.load %arg4[%c0_39, %c0_40] : memref<1152x128xbf16, #tpu.memory_space<vmem>>, vector<1152x128xbf16>
    %cst_41 = arith.constant dense<0.000000e+00> : vector<256x128xf32>
    %27 = tpu.matmul %25, %26, %cst_41 {dimension_numbers = #tpu.dot_dimension_numbers<[1], [0], [0], [1], [0, 0, 1, 1], [], []>} : vector<256x1152xbf16>, vector<1152x128xbf16>, vector<256x128xf32> -> vector<256x128xf32>
    %c0_42 = arith.constant 0 : index
    %c0_43 = arith.constant 0 : index
    %28 = vector.load %arg5[%c0_42, %c0_43] : memref<1x128xf32, #tpu.memory_space<vmem>>, vector<1x128xf32>
    %29 = vector.broadcast %28 : vector<1x128xf32> to vector<256x128xf32>
    %30 = arith.addf %27, %29 : vector<256x128xf32>
    %cst_44 = arith.constant 0.000000e+00 : f32
    %31 = vector.broadcast %cst_44 : f32 to vector<256x128xf32>
    %32 = arith.maximumf %30, %31 : vector<256x128xf32>
    %33 = arith.truncf %32 : vector<256x128xf32> to vector<256x128xbf16>
    %c0_45 = arith.constant 0 : index
    %c0_46 = arith.constant 0 : index
    %34 = vector.load %arg6[%c0_45, %c0_46] : memref<128x128xbf16, #tpu.memory_space<vmem>>, vector<128x128xbf16>
    %cst_47 = arith.constant dense<0.000000e+00> : vector<256x128xf32>
    %35 = tpu.matmul %33, %34, %cst_47 {dimension_numbers = #tpu.dot_dimension_numbers<[1], [0], [0], [1], [0, 0, 1, 1], [], []>} : vector<256x128xbf16>, vector<128x128xbf16>, vector<256x128xf32> -> vector<256x128xf32>
    %c0_48 = arith.constant 0 : index
    %c0_49 = arith.constant 0 : index
    %36 = vector.load %arg7[%c0_48, %c0_49] : memref<1x128xf32, #tpu.memory_space<vmem>>, vector<1x128xf32>
    %37 = vector.broadcast %36 : vector<1x128xf32> to vector<256x128xf32>
    %38 = arith.addf %35, %37 : vector<256x128xf32>
    %39 = arith.addf %38, %1 : vector<256x128xf32>
    %cst_50 = arith.constant 0.000000e+00 : f32
    %40 = vector.broadcast %cst_50 : f32 to vector<256x128xf32>
    %41 = arith.maximumf %39, %40 : vector<256x128xf32>
    %42 = arith.truncf %41 : vector<256x128xf32> to vector<256x128xbf16>
    %c0_51 = arith.constant 0 : index
    %c0_52 = arith.constant 0 : index
    %c0_53 = arith.constant 0 : index
    %43 = vector.load %arg8[%c0_51, %c0_52, %c0_53] : memref<1x256x128xbf16, #tpu.memory_space<vmem>>, vector<1x256x128xbf16>
    %44 = vector.shape_cast %43 : vector<1x256x128xbf16> to vector<256x128xbf16>
    %45 = vector.shape_cast %42 : vector<256x128xbf16> to vector<1x256x128xbf16>
    tpu.vector_store %arg8[%c0_51, %c0_52, %c0_53], %45 {strides = array<i32>} : memref<1x256x128xbf16, #tpu.memory_space<vmem>>, vector<1x256x128xbf16>,
    return
  }
  func.func @transform_0(%arg0: i32) -> (i32, i32, i32) {
    %c0_i32 = arith.constant 0 : i32
    %c0_i32_0 = arith.constant 0 : i32
    %c0_i32_1 = arith.constant 0 : i32
    return %arg0, %c0_i32, %c0_i32_0 : i32, i32, i32
  }
  func.func @transform_1(%arg0: i32) -> (i32, i32) {
    %c0_i32 = arith.constant 0 : i32
    %c0_i32_0 = arith.constant 0 : i32
    %c0_i32_1 = arith.constant 0 : i32
    return %c0_i32, %c0_i32_0 : i32, i32
  }
  func.func @transform_2(%arg0: i32) -> (i32, i32) {
    %c0_i32 = arith.constant 0 : i32
    %c0_i32_0 = arith.constant 0 : i32
    %c0_i32_1 = arith.constant 0 : i32
    return %c0_i32, %c0_i32_0 : i32, i32
  }
  func.func @transform_3(%arg0: i32) -> (i32, i32) {
    %c0_i32 = arith.constant 0 : i32
    %c0_i32_0 = arith.constant 0 : i32
    %c0_i32_1 = arith.constant 0 : i32
    return %c0_i32, %c0_i32_0 : i32, i32
  }
  func.func @transform_4(%arg0: i32) -> (i32, i32) {
    %c0_i32 = arith.constant 0 : i32
    %c0_i32_0 = arith.constant 0 : i32
    %c0_i32_1 = arith.constant 0 : i32
    return %c0_i32, %c0_i32_0 : i32, i32
  }
  func.func @transform_5(%arg0: i32) -> (i32, i32) {
    %c0_i32 = arith.constant 0 : i32
    %c0_i32_0 = arith.constant 0 : i32
    %c0_i32_1 = arith.constant 0 : i32
    return %c0_i32, %c0_i32_0 : i32, i32
  }
  func.func @transform_6(%arg0: i32) -> (i32, i32) {
    %c0_i32 = arith.constant 0 : i32
    %c0_i32_0 = arith.constant 0 : i32
    %c0_i32_1 = arith.constant 0 : i32
    return %c0_i32, %c0_i32_0 : i32, i32
  }
  func.func @transform_7(%arg0: i32) -> (i32, i32, i32) {
    %c0_i32 = arith.constant 0 : i32
    %c0_i32_0 = arith.constant 0 : i32
    %c0_i32_1 = arith.constant 0 : i32
    return %arg0, %c0_i32, %c0_i32_0 : i32, i32, i32
  }
}

</mosaic_0001>

<llo_original>
// kernel: tpu_custom_call.1
$region0: #{tpu_custom_call.1}
  #allocation0 [shape = 'u32[]', space=smem, size = 0x4, offset = 0x4, fixed_abs, tag = 'smem constant byte address 0x4 - core index']
  #allocation1 [shape = 'u32[144,128]{1,0:T(1,128)}', space=vmem, size = 0x12000, scoped, tag = 'internal scratch']
  #allocation2 [shape = 'bf16[18,18,128]{2,1,0:T(8,128)(2,1)}', space=vmem, size = 0x1b000, scoped, tag = 'scratch operand']
  %s0 = inlined_call_operand.hbm [shape: f32[2,256,128], index: 0, kind: input, shape index: {}]
  %s1 = inlined_call_operand.hbm [shape: bf16[128,128], index: 1, kind: input, shape index: {}]
  %s2 = inlined_call_operand.vmem [shape: f32[1,128], index: 2, kind: input, shape index: {}]
  %s3 = inlined_call_operand.hbm [shape: bf16[1152,128], index: 3, kind: input, shape index: {}]
  %s4 = inlined_call_operand.vmem [shape: f32[1,128], index: 4, kind: input, shape index: {}]
  %s5 = inlined_call_operand.hbm [shape: bf16[128,128], index: 5, kind: input, shape index: {}]
  %s6 = inlined_call_operand.vmem [shape: f32[1,128], index: 6, kind: input, shape index: {}]
  %s7 = inlined_call_operand.hbm [shape: bf16[2,256,128], index: 7, kind: output, shape index: {}]
  %s8 = sld [smem:[#allocation0]]
  $region77: #{tpu_custom_call.1} parent=0
    _
  %s10 = ssub.s32 1, %s8
  %s11 = scalar_select 0, %s10, %s8
  $region1: #{tpu_custom_call.1} parent=0
    #allocation3 [shape = 'u8[262144]{0}', space=vmem, size = 0x40000, scoped, tag = 'input window, operand 0']
    #allocation4 [shape = 's32[2]{0}', space=sflag, size = 0x8, scoped, tag = 'scoped memory for tpu_custom_call.1']
    #allocation5 [shape = 's32[2]{0}', space=sflag, size = 0x8, scoped, tag = 'scoped memory for tpu_custom_call.1']
    #allocation6 [shape = 'u8[32768]{0}', space=vmem, size = 0x8000, scoped, tag = 'input window, operand 1, single buffered']
    #allocation7 [shape = 's32[1]{0}', space=sflag, size = 0x4, scoped, tag = 'scoped memory for tpu_custom_call.1']
    #allocation8 [shape = 'u8[294912]{0}', space=vmem, size = 0x48000, scoped, tag = 'input window, operand 3, single buffered']
    #allocation9 [shape = 'u8[32768]{0}', space=vmem, size = 0x8000, scoped, tag = 'input window, operand 5, single buffered']
    #allocation10 [shape = 's32[1]{0}', space=sflag, size = 0x4, scoped, tag = 'scoped memory for tpu_custom_call.1']
    #allocation11 [shape = 'u8[131072]{0}', space=vmem, size = 0x20000, scoped, tag = 'output window, operand 0']
    %12 = vsyncpa [#allocation4], 0
    %s13 = scalar_lea.sflag [#allocation4], 1
    %14 = vsyncpa %s13, 0
    %15 = vsyncpa [#allocation7], 0
    %16 = vsyncpa [#allocation10], 0
    %17 = vsyncpa [#allocation5], 0
    %s18 = scalar_lea.sflag [#allocation5], 1
    %19 = vsyncpa %s18, 0
    loop: start=0, step=1, limit=4
    $region2: #{tpu_custom_call.1} parent=1 // loop_pre_header
      _
    $region3: #{tpu_custom_call.1} parent=1 // loop_header
      %s21 = sphi 0, %s25
      %p22 = scmp.ge.s32.totalorder %s21, 4
      %s31 = sphi 0, %s33
      %s34 = sphi 0, %s31
      %s35 = sphi 0, %s34
      %s51 = sphi 0, %s35
      %s55 = sphi 0, %s55
      %s57 = sphi 0, %s55
      %s58 = sphi 0, %s57
      %s72 = sphi 0, %s58
      %s76 = sphi 0, %s76
      %s78 = sphi 0, %s76
      %s79 = sphi 0, %s78
      %s93 = sphi 0, %s79
      %s97 = sphi 0, %s97
      %s99 = sphi 0, %s97
      %s100 = sphi 0, %s99
      %s114 = sphi 0, %s100
      %s118 = sphi 0, %s118
      %s120 = sphi 0, %s118
      %s121 = sphi 0, %s120
      %s135 = sphi 0, %s121
      %s139 = sphi 0, %s139
      %s141 = sphi 0, %s139
      %s142 = sphi 0, %s141
      %s156 = sphi 0, %s142
      %s160 = sphi 0, %s160
      %s162 = sphi 0, %s160
      %s163 = sphi 0, %s162
      %s177 = sphi 0, %s163
      %s183 = sphi 0, %s185
      %s186 = sphi 0, %s183
      %s187 = sphi 0, %s186
      %s203 = sphi 0, %s187
    $region4: #{tpu_custom_call.1} parent=1 // loop_header_branch
      %24 = sbr.rel (%p22) target = $region8
    $region5: #{tpu_custom_call.1} parent=1 // loop_body
      %s26 = ssub.s32 %s21, 1
      %s27 = ssub.s32 %s21, 2
      %s28 = sadd.s32 %s21, 1
      %s29 = ssub.s32 %s21, %s28
      %p30 = scmp.eq.s32.totalorder %s29, 0
      %s32 = sadd.s32 %s31, 1
      %s33 = scalar_select %p30, %s31, %s32
      %p36 = pneg %p30
      %p37 = scmp.eq.s32.totalorder %s21, 1
      %p38 = por %p36, %p37
      %p39 = scmp.ne.s32.totalorder %s31, %s34
      %p40 = scmp.eq.s32.totalorder %s21, 0
      %p41 = por %p39, %p40
      %p42 = scmp.ne.s32.totalorder %s31, %s34
      %p43 = scmp.eq.s32.totalorder %s26, 1
      %p44 = por %p42, %p43
      %p45 = scmp.ne.s32.totalorder %s34, %s35
      %p46 = scmp.eq.s32.totalorder %s26, 0
      %p47 = por %p45, %p46
      %p48 = scmp.ne.s32.totalorder %s34, %s35
      %p49 = scmp.eq.s32.totalorder %s27, 1
      %p50 = por %p48, %p49
      %p52 = scmp.ne.s32.totalorder %s35, %s51
      %p53 = scmp.eq.s32.totalorder %s27, 0
      %p54 = por %p52, %p53
      %s56 = sadd.s32 %s55, 1
      %p59 = scmp.eq.s32.totalorder %s21, 1
      %p60 = scmp.ne.s32.totalorder %s55, %s57
      %p61 = scmp.eq.s32.totalorder %s21, 0
      %p62 = por %p60, %p61
      %p63 = scmp.ne.s32.totalorder %s55, %s57
      %p64 = scmp.eq.s32.totalorder %s26, 1
      %p65 = por %p63, %p64
      %p66 = scmp.ne.s32.totalorder %s57, %s58
      %p67 = scmp.eq.s32.totalorder %s26, 0
      %p68 = por %p66, %p67
      %p69 = scmp.ne.s32.totalorder %s57, %s58
      %p70 = scmp.eq.s32.totalorder %s27, 1
      %p71 = por %p69, %p70
      %p73 = scmp.ne.s32.totalorder %s58, %s72
      %p74 = scmp.eq.s32.totalorder %s27, 0
      %p75 = por %p73, %p74
      %s77 = sadd.s32 %s76, 1
      %p80 = scmp.eq.s32.totalorder %s21, 1
      %p81 = scmp.ne.s32.totalorder %s76, %s78
      %p82 = scmp.eq.s32.totalorder %s21, 0
      %p83 = por %p81, %p82
      %p84 = scmp.ne.s32.totalorder %s76, %s78
      %p85 = scmp.eq.s32.totalorder %s26, 1
      %p86 = por %p84, %p85
      %p87 = scmp.ne.s32.totalorder %s78, %s79
      %p88 = scmp.eq.s32.totalorder %s26, 0
      %p89 = por %p87, %p88
      %p90 = scmp.ne.s32.totalorder %s78, %s79
      %p91 = scmp.eq.s32.totalorder %s27, 1
      %p92 = por %p90, %p91
      %p94 = scmp.ne.s32.totalorder %s79, %s93
      %p95 = scmp.eq.s32.totalorder %s27, 0
      %p96 = por %p94, %p95
      %s98 = sadd.s32 %s97, 1
      %p101 = scmp.eq.s32.totalorder %s21, 1
      %p102 = scmp.ne.s32.totalorder %s97, %s99
      %p103 = scmp.eq.s32.totalorder %s21, 0
      %p104 = por %p102, %p103
      %p105 = scmp.ne.s32.totalorder %s97, %s99
      %p106 = scmp.eq.s32.totalorder %s26, 1
      %p107 = por %p105, %p106
      %p108 = scmp.ne.s32.totalorder %s99, %s100
      %p109 = scmp.eq.s32.totalorder %s26, 0
      %p110 = por %p108, %p109
      %p111 = scmp.ne.s32.totalorder %s99, %s100
      %p112 = scmp.eq.s32.totalorder %s27, 1
      %p113 = por %p111, %p112
      %p115 = scmp.ne.s32.totalorder %s100, %s114
      %p116 = scmp.eq.s32.totalorder %s27, 0
      %p117 = por %p115, %p116
      %s119 = sadd.s32 %s118, 1
      %p122 = scmp.eq.s32.totalorder %s21, 1
      %p123 = scmp.ne.s32.totalorder %s118, %s120
      %p124 = scmp.eq.s32.totalorder %s21, 0
      %p125 = por %p123, %p124
      %p126 = scmp.ne.s32.totalorder %s118, %s120
      %p127 = scmp.eq.s32.totalorder %s26, 1
      %p128 = por %p126, %p127
      %p129 = scmp.ne.s32.totalorder %s120, %s121
      %p130 = scmp.eq.s32.totalorder %s26, 0
      %p131 = por %p129, %p130
      %p132 = scmp.ne.s32.totalorder %s120, %s121
      %p133 = scmp.eq.s32.totalorder %s27, 1
      %p134 = por %p132, %p133
      %p136 = scmp.ne.s32.totalorder %s121, %s135
      %p137 = scmp.eq.s32.totalorder %s27, 0
      %p138 = por %p136, %p137
      %s140 = sadd.s32 %s139, 1
      %p143 = scmp.eq.s32.totalorder %s21, 1
      %p144 = scmp.ne.s32.totalorder %s139, %s141
      %p145 = scmp.eq.s32.totalorder %s21, 0
      %p146 = por %p144, %p145
      %p147 = scmp.ne.s32.totalorder %s139, %s141
      %p148 = scmp.eq.s32.totalorder %s26, 1
      %p149 = por %p147, %p148
      %p150 = scmp.ne.s32.totalorder %s141, %s142
      %p151 = scmp.eq.s32.totalorder %s26, 0
      %p152 = por %p150, %p151
      %p153 = scmp.ne.s32.totalorder %s141, %s142
      %p154 = scmp.eq.s32.totalorder %s27, 1
      %p155 = por %p153, %p154
      %p157 = scmp.ne.s32.totalorder %s142, %s156
      %p158 = scmp.eq.s32.totalorder %s27, 0
      %p159 = por %p157, %p158
      %s161 = sadd.s32 %s160, 1
      %p164 = scmp.eq.s32.totalorder %s21, 1
      %p165 = scmp.ne.s32.totalorder %s160, %s162
      %p166 = scmp.eq.s32.totalorder %s21, 0
      %p167 = por %p165, %p166
      %p168 = scmp.ne.s32.totalorder %s160, %s162
      %p169 = scmp.eq.s32.totalorder %s26, 1
      %p170 = por %p168, %p169
      %p171 = scmp.ne.s32.totalorder %s162, %s163
      %p172 = scmp.eq.s32.totalorder %s26, 0
      %p173 = por %p171, %p172
      %p174 = scmp.ne.s32.totalorder %s162, %s163
      %p175 = scmp.eq.s32.totalorder %s27, 1
      %p176 = por %p174, %p175
      %p178 = scmp.ne.s32.totalorder %s163, %s177
      %p179 = scmp.eq.s32.totalorder %s27, 0
      %p180 = por %p178, %p179
      %s181 = ssub.s32 %s21, %s28
      %p182 = scmp.eq.s32.totalorder %s181, 0
      %s184 = sadd.s32 %s183, 1
      %s185 = scalar_select %p182, %s183, %s184
      %p188 = pneg %p182
      %p189 = scmp.eq.s32.totalorder %s21, 1
      %p190 = por %p188, %p189
      %p191 = scmp.ne.s32.totalorder %s183, %s186
      %p192 = scmp.eq.s32.totalorder %s21, 0
      %p193 = por %p191, %p192
      %p194 = scmp.ne.s32.totalorder %s183, %s186
      %p195 = scmp.eq.s32.totalorder %s26, 1
      %p196 = por %p194, %p195
      %p197 = scmp.ne.s32.totalorder %s186, %s187
      %p198 = scmp.eq.s32.totalorder %s26, 0
      %p199 = por %p197, %p198
      %p200 = scmp.ne.s32.totalorder %s186, %s187
      %p201 = scmp.eq.s32.totalorder %s27, 1
      %p202 = por %p200, %p201
      %p204 = scmp.ne.s32.totalorder %s187, %s203
      %p205 = scmp.eq.s32.totalorder %s27, 0
      %p206 = por %p204, %p205
      %p207 = scmp.le.s32.totalorder 1, %s21
      %p208 = scmp.lt.s32.totalorder %s21, 3
      %p209 = pnand %p207, %p208
      %p210 = pneg %p209
      // Predicated region
      $region9: #{tpu_custom_call.1} parent=5 // pred_check
        _
      $region10: #{tpu_custom_call.1} parent=5 // pred_check_branch
        %212 = sbr.rel (%p209) target = $region12
      $region11: #{tpu_custom_call.1} parent=5 // pred_region
        %s213 = ssub.s32 %s21, 1
        // Predicated region
        $region13: #{tpu_custom_call.1} parent=11 // pred_check
          %p214 = pneg %p68
        $region14: #{tpu_custom_call.1} parent=11 // pred_check_branch
          %216 = sbr.rel (%p214) target = $region16
        $region15: #{tpu_custom_call.1} parent=11 // pred_region
          %s218 = ssub.s32 1024, 1024
          %219 = vsyncadd [#allocation7], %s218
          %s220 = sshll.u32 [#allocation6], 4
          %s221 = int_to_ptr.vmem [resolvable:$true] %s220
          %226 = dma.hbm_to_vmem [thread:$0]  %s1, 1024, %s221, [#allocation7], 64, 64, 4
        $region16: #{tpu_custom_call.1} parent=11 // pred_fallthru
          _
        // Predicated region
        $region17: #{tpu_custom_call.1} parent=11 // pred_check
          %p227 = pneg %p89
        $region18: #{tpu_custom_call.1} parent=11 // pred_check_branch
          %229 = sbr.rel (%p227) target = $region20
        $region19: #{tpu_custom_call.1} parent=11 // pred_region
          _
        $region20: #{tpu_custom_call.1} parent=11 // pred_fallthru
          _
        // Predicated region
        $region21: #{tpu_custom_call.1} parent=11 // pred_check
          %p230 = pneg %p110
        $region22: #{tpu_custom_call.1} parent=11 // pred_check_branch
          %232 = sbr.rel (%p230) target = $region24
        $region23: #{tpu_custom_call.1} parent=11 // pred_region
          %s234 = ssub.s32 9216, 9216
          %235 = vsyncadd [#allocation7], %s234
          %s236 = sshll.u32 [#allocation8], 4
          %s237 = int_to_ptr.vmem [resolvable:$true] %s236
          %242 = dma.hbm_to_vmem [thread:$0]  %s3, 9216, %s237, [#allocation7], 64, 64, 4
        $region24: #{tpu_custom_call.1} parent=11 // pred_fallthru
          _
        // Predicated region
        $region25: #{tpu_custom_call.1} parent=11 // pred_check
          %p243 = pneg %p131
        $region26: #{tpu_custom_call.1} parent=11 // pred_check_branch
          %245 = sbr.rel (%p243) target = $region28
        $region27: #{tpu_custom_call.1} parent=11 // pred_region
          _
        $region28: #{tpu_custom_call.1} parent=11 // pred_fallthru
          _
        // Predicated region
        $region29: #{tpu_custom_call.1} parent=11 // pred_check
          %p246 = pneg %p152
        $region30: #{tpu_custom_call.1} parent=11 // pred_check_branch
          %248 = sbr.rel (%p246) target = $region32
        $region31: #{tpu_custom_call.1} parent=11 // pred_region
          %s250 = ssub.s32 1024, 1024
          %251 = vsyncadd [#allocation10], %s250
          %s252 = sshll.u32 [#allocation9], 4
          %s253 = int_to_ptr.vmem [resolvable:$true] %s252
          %258 = dma.hbm_to_vmem [thread:$0]  %s5, 1024, %s253, [#allocation10], 64, 64, 4
        $region32: #{tpu_custom_call.1} parent=11 // pred_fallthru
          _
        // Predicated region
        $region33: #{tpu_custom_call.1} parent=11 // pred_check
          %p259 = pneg %p173
        $region34: #{tpu_custom_call.1} parent=11 // pred_check_branch
          %261 = sbr.rel (%p259) target = $region36
        $region35: #{tpu_custom_call.1} parent=11 // pred_region
          _
        $region36: #{tpu_custom_call.1} parent=11 // pred_fallthru
          _
      $region12: #{tpu_custom_call.1} parent=5 // pred_fallthru
        _
      %p262 = scmp.lt.s32.totalorder %s21, 2
      // Predicated region
      $region37: #{tpu_custom_call.1} parent=5 // pred_check
        %p263 = pneg %p262
      $region38: #{tpu_custom_call.1} parent=5 // pred_check_branch
        %265 = sbr.rel (%p263) target = $region40
      $region39: #{tpu_custom_call.1} parent=5 // pred_region
        // Predicated region
        $region41: #{tpu_custom_call.1} parent=39 // pred_check
          %p266 = pneg %p41
        $region42: #{tpu_custom_call.1} parent=39 // pred_check_branch
          %268 = sbr.rel (%p266) target = $region44
        $region43: #{tpu_custom_call.1} parent=39 // pred_region
          %s269 = sand.u32 %s31, 1
          %s270 = scalar_lea.sflag [#allocation4], %s269
          %s271 = sand.u32 %s31, 1
          %s272 = smul.addr %s271, 256
          %s273 = scalar_lea.vmem [#allocation3], %s272
          %s275 = ssub.s32 4096, 4096
          %276 = vsyncadd %s270, %s275
          %s277 = smul.addr %s21, 32
          %s278 = smul.addr %s277, 128
          %s279 = scalar_lea.hbm %s0, %s278
          %s280 = sshll.u32 %s273, 4
          %s281 = int_to_ptr.vmem [resolvable:$true] %s280
          %286 = dma.hbm_to_vmem [thread:$0]  %s279, 4096, %s281, %s270, 128, 128, 8
        $region44: #{tpu_custom_call.1} parent=39 // pred_fallthru
          _
      $region40: #{tpu_custom_call.1} parent=5 // pred_fallthru
        _
      %p287 = scmp.le.s32.totalorder 1, %s21
      %p288 = scmp.lt.s32.totalorder %s21, 3
      %p289 = pnand %p287, %p288
      %p290 = pneg %p289
      // Predicated region
      $region45: #{tpu_custom_call.1} parent=5 // pred_check
        _
      $region46: #{tpu_custom_call.1} parent=5 // pred_check_branch
        %292 = sbr.rel (%p289) target = $region48
      $region47: #{tpu_custom_call.1} parent=5 // pred_region
        %s293 = ssub.s32 %s21, 1
        %s294 = sand.u32 %s34, 1
        %s295 = scalar_lea.sflag [#allocation4], %s294
        %s296 = sand.u32 %s34, 1
        %s297 = smul.addr %s296, 256
        %s298 = scalar_lea.vmem [#allocation3], %s297
        // Predicated region
        $region49: #{tpu_custom_call.1} parent=47 // pred_check
          %p299 = pneg %p47
        $region50: #{tpu_custom_call.1} parent=47 // pred_check_branch
          %301 = sbr.rel (%p299) target = $region52
        $region51: #{tpu_custom_call.1} parent=47 // pred_region
          %302 = dma.done %s295, 4096
        $region52: #{tpu_custom_call.1} parent=47 // pred_fallthru
          _
        // Predicated region
        $region53: #{tpu_custom_call.1} parent=47 // pred_check
          %p303 = pneg %p68
        $region54: #{tpu_custom_call.1} parent=47 // pred_check_branch
          %305 = sbr.rel (%p303) target = $region56
        $region55: #{tpu_custom_call.1} parent=47 // pred_region
          %306 = dma.done [#allocation7], 1024
        $region56: #{tpu_custom_call.1} parent=47 // pred_fallthru
          _
        // Predicated region
        $region57: #{tpu_custom_call.1} parent=47 // pred_check
          %p307 = pneg %p110
        $region58: #{tpu_custom_call.1} parent=47 // pred_check_branch
          %309 = sbr.rel (%p307) target = $region60
        $region59: #{tpu_custom_call.1} parent=47 // pred_region
          %310 = dma.done [#allocation7], 9216
        $region60: #{tpu_custom_call.1} parent=47 // pred_fallthru
          _
        // Predicated region
        $region61: #{tpu_custom_call.1} parent=47 // pred_check
          %p311 = pneg %p152
        $region62: #{tpu_custom_call.1} parent=47 // pred_check_branch
          %313 = sbr.rel (%p311) target = $region64
        $region63: #{tpu_custom_call.1} parent=47 // pred_region
          %314 = dma.done [#allocation10], 1024
        $region64: #{tpu_custom_call.1} parent=47 // pred_fallthru
          _
        %s315 = sand.u32 %s34, 1
        %s316 = scalar_lea.sflag [#allocation4], %s315
        %s317 = sand.u32 %s34, 1
        %s318 = smul.addr %s317, 256
        %s319 = scalar_lea.vmem [#allocation3], %s318
        %p320 = pneg %p47
        %p321 = pneg %p44
        %p322 = pneg %p68
        %p323 = pneg %p65
        %p324 = pneg %p89
        %p325 = pneg %p86
        %p326 = pneg %p110
        %p327 = pneg %p107
        %p328 = pneg %p131
        %p329 = pneg %p128
        %p330 = pneg %p152
        %p331 = pneg %p149
        %p332 = pneg %p173
        %p333 = pneg %p170
        %p334 = pneg %p199
        %p335 = pneg %p196
        %s336 = sand.u32 %s186, 1
        %s337 = scalar_lea.sflag [#allocation5], %s336
        %s338 = sand.u32 %s186, 1
        %s339 = smul.addr %s338, 128
        %s340 = scalar_lea.vmem [#allocation11], %s339
        %v342 = vld [vmem:[%s298] sm:$0xff]
        %v343 = vld [vmem:[%s298 + $0x8] sm:$0xff]
        %v344 = vld [vmem:[%s298 + $0x10] sm:$0xff]
        %v345 = vld [vmem:[%s298 + $0x18] sm:$0xff]
        %v346 = vld [vmem:[%s298 + $0x20] sm:$0xff]
        %v347 = vld [vmem:[%s298 + $0x28] sm:$0xff]
        %v348 = vld [vmem:[%s298 + $0x30] sm:$0xff]
        %v349 = vld [vmem:[%s298 + $0x38] sm:$0xff]
        %v350 = vld [vmem:[%s298 + $0x40] sm:$0xff]
        %v351 = vld [vmem:[%s298 + $0x48] sm:$0xff]
        %v352 = vld [vmem:[%s298 + $0x50] sm:$0xff]
        %v353 = vld [vmem:[%s298 + $0x58] sm:$0xff]
        %v354 = vld [vmem:[%s298 + $0x60] sm:$0xff]
        %v355 = vld [vmem:[%s298 + $0x68] sm:$0xff]
        %v356 = vld [vmem:[%s298 + $0x70] sm:$0xff]
        %v357 = vld [vmem:[%s298 + $0x78] sm:$0xff]
        %v358 = vld [vmem:[%s298 + $0x80] sm:$0xff]
        %v359 = vld [vmem:[%s298 + $0x88] sm:$0xff]
        %v360 = vld [vmem:[%s298 + $0x90] sm:$0xff]
        %v361 = vld [vmem:[%s298 + $0x98] sm:$0xff]
        %v362 = vld [vmem:[%s298 + $0xa0] sm:$0xff]
        %v363 = vld [vmem:[%s298 + $0xa8] sm:$0xff]
        %v364 = vld [vmem:[%s298 + $0xb0] sm:$0xff]
        %v365 = vld [vmem:[%s298 + $0xb8] sm:$0xff]
        %v366 = vld [vmem:[%s298 + $0xc0] sm:$0xff]
        %v367 = vld [vmem:[%s298 + $0xc8] sm:$0xff]
        %v368 = vld [vmem:[%s298 + $0xd0] sm:$0xff]
        %v369 = vld [vmem:[%s298 + $0xd8] sm:$0xff]
        %v370 = vld [vmem:[%s298 + $0xe0] sm:$0xff]
        %v371 = vld [vmem:[%s298 + $0xe8] sm:$0xff]
        %v372 = vld [vmem:[%s298 + $0xf0] sm:$0xff]
        %v373 = vld [vmem:[%s298 + $0xf8] sm:$0xff]
        %v374 = vpack.c.bf16 %v343, %v342
        %v375 = vpack.c.bf16 %v345, %v344
        %v376 = vpack.c.bf16 %v347, %v346
        %v377 = vpack.c.bf16 %v349, %v348
        %v378 = vpack.c.bf16 %v351, %v350
        %v379 = vpack.c.bf16 %v353, %v352
        %v380 = vpack.c.bf16 %v355, %v354
        %v381 = vpack.c.bf16 %v357, %v356
        %v382 = vpack.c.bf16 %v359, %v358
        %v383 = vpack.c.bf16 %v361, %v360
        %v384 = vpack.c.bf16 %v363, %v362
        %v385 = vpack.c.bf16 %v365, %v364
        %v386 = vpack.c.bf16 %v367, %v366
        %v387 = vpack.c.bf16 %v369, %v368
        %v388 = vpack.c.bf16 %v371, %v370
        %v389 = vpack.c.bf16 %v373, %v372
        %v390 = vld [vmem:[#allocation6] sm:$0xf]
        %v391 = vld [vmem:[#allocation6 + $0x4] sm:$0xf]
        %v392 = vld [vmem:[#allocation6 + $0x8] sm:$0xf]
        %v393 = vld [vmem:[#allocation6 + $0xc] sm:$0xf]
        %v394 = vld [vmem:[#allocation6 + $0x10] sm:$0xf]
        %v395 = vld [vmem:[#allocation6 + $0x14] sm:$0xf]
        %v396 = vld [vmem:[#allocation6 + $0x18] sm:$0xf]
        %v397 = vld [vmem:[#allocation6 + $0x1c] sm:$0xf]
        %v398 = vld [vmem:[#allocation6 + $0x20] sm:$0xf]
        %v399 = vld [vmem:[#allocation6 + $0x24] sm:$0xf]
        %v400 = vld [vmem:[#allocation6 + $0x28] sm:$0xf]
        %v401 = vld [vmem:[#allocation6 + $0x2c] sm:$0xf]
        %v402 = vld [vmem:[#allocation6 + $0x30] sm:$0xf]
        %v403 = vld [vmem:[#allocation6 + $0x34] sm:$0xf]
        %v404 = vld [vmem:[#allocation6 + $0x38] sm:$0xf]
        %v405 = vld [vmem:[#allocation6 + $0x3c] sm:$0xf]
        %v406 = vld [vmem:[%s2] sm:$0x1]
        %v408 = vlaneseq
        %v409 = vshrl.u32 %v408, 7
        %v410 = vsub.s32 0, %v409
        %v411 = vrot.slane %v406, %v410
        %v429 = vunpack.c.l.b16 %v390
        %v430 = vunpack.c.l.b16 %v391
        %v431 = vunpack.c.l.b16 %v392
        %v432 = vunpack.c.l.b16 %v393
        %v433 = vunpack.c.l.b16 %v394
        %v434 = vunpack.c.l.b16 %v395
        %v435 = vunpack.c.l.b16 %v396
        %v436 = vunpack.c.l.b16 %v397
        %v437 = vunpack.c.l.b16 %v398
        %v438 = vunpack.c.l.b16 %v399
        %v439 = vunpack.c.l.b16 %v400
        %v440 = vunpack.c.l.b16 %v401
        %v441 = vunpack.c.l.b16 %v402
        %v442 = vunpack.c.l.b16 %v403
        %v443 = vunpack.c.l.b16 %v404
        %v444 = vunpack.c.l.b16 %v405
        %v445 = vpack.c.b16 %v430, %v429
        %v446 = vpack.c.b16 %v432, %v431
        %v447 = vpack.c.b16 %v434, %v433
        %v448 = vpack.c.b16 %v436, %v435
        %v449 = vpack.c.b16 %v438, %v437
        %v450 = vpack.c.b16 %v440, %v439
        %v451 = vpack.c.b16 %v442, %v441
        %v452 = vpack.c.b16 %v444, %v443
        %461 = vmatprep.subr.bf16.mxu0 0
        %462 = vmatpush1.bf16.msra.mxu0 %v452
        %463 = vmatprep.subr.bf16.mxu0 0
        %464 = vmatpush1.bf16.msra.mxu0 %v451
        %465 = vmatprep.subr.bf16.mxu0 0
        %466 = vmatpush1.bf16.msra.mxu0 %v450
        %467 = vmatprep.subr.bf16.mxu0 0
        %468 = vmatpush1.bf16.msra.mxu0 %v449
        %469 = vmatprep.subr.bf16.mxu0 0
        %470 = vmatpush1.bf16.msra.mxu0 %v448
        %471 = vmatprep.subr.bf16.mxu0 0
        %472 = vmatpush1.bf16.msra.mxu0 %v447
        %473 = vmatprep.subr.bf16.mxu0 0
        %474 = vmatpush1.bf16.msra.mxu0 %v446
        %475 = vmatprep.subr.bf16.mxu0 0
        %476 = vmatpush1.bf16.msra.mxu0 %v445
        %477 = vmatprep.subr.bf16.mxu0 0
        %478 = vmatpush2.bf16.msra.mxu0 0
        %479 = vmatprep.subr.bf16.mxu0 0
        %480 = vmatpush2.bf16.msra.mxu0 0
        %481 = vmatprep.subr.bf16.mxu0 0
        %482 = vmatpush2.bf16.msra.mxu0 0
        %483 = vmatprep.subr.bf16.mxu0 0
        %484 = vmatpush2.bf16.msra.mxu0 0
        %485 = vmatprep.subr.bf16.mxu0 0
        %486 = vmatpush2.bf16.msra.mxu0 0
        %487 = vmatprep.subr.bf16.mxu0 0
        %488 = vmatpush2.bf16.msra.mxu0 0
        %489 = vmatprep.subr.bf16.mxu0 0
        %490 = vmatpush2.bf16.msra.mxu0 0
        %491 = vmatprep.subr.bf16.mxu0 0
        %492 = vmatpush2.bf16.msra.mxu0 0
        %493 = vmatprep.mubr.bf16.mxu0 0
        %494 = vmatmul.mubr.bf16.gmra.mxu0 %v374
        %v495 = vpop.f32.mrf.mxu0
        %v496 = vadd.f32 %v411, %v495
        %v497 = vpop.f32.mrf.mxu0
        %v498 = vpop.f32.mrf.mxu0
        %v499 = vadd.f32 %v411, %v498
        %v500 = vpop.f32.mrf.mxu0
        %501 = vmatprep.mubr.bf16.mxu0 0
        %502 = vmatmul.mubr.bf16.gmra.mxu0 %v375
        %v503 = vpop.f32.mrf.mxu0
        %v504 = vadd.f32 %v411, %v503
        %v505 = vpop.f32.mrf.mxu0
        %v506 = vpop.f32.mrf.mxu0
        %v507 = vadd.f32 %v411, %v506
        %v508 = vpop.f32.mrf.mxu0
        %509 = vmatprep.mubr.bf16.mxu0 0
        %510 = vmatmul.mubr.bf16.gmra.mxu0 %v376
        %v511 = vpop.f32.mrf.mxu0
        %v512 = vadd.f32 %v411, %v511
        %v513 = vpop.f32.mrf.mxu0
        %v514 = vpop.f32.mrf.mxu0
        %v515 = vadd.f32 %v411, %v514
        %v516 = vpop.f32.mrf.mxu0
        %517 = vmatprep.mubr.bf16.mxu0 0
        %518 = vmatmul.mubr.bf16.gmra.mxu0 %v377
        %v519 = vpop.f32.mrf.mxu0
        %v520 = vadd.f32 %v411, %v519
        %v521 = vpop.f32.mrf.mxu0
        %v522 = vpop.f32.mrf.mxu0
        %v523 = vadd.f32 %v411, %v522
        %v524 = vpop.f32.mrf.mxu0
        %525 = vmatprep.mubr.bf16.mxu0 0
        %526 = vmatmul.mubr.bf16.gmra.mxu0 %v378
        %v527 = vpop.f32.mrf.mxu0
        %v528 = vadd.f32 %v411, %v527
        %v529 = vpop.f32.mrf.mxu0
        %v530 = vpop.f32.mrf.mxu0
        %v531 = vadd.f32 %v411, %v530
        %v532 = vpop.f32.mrf.mxu0
        %533 = vmatprep.mubr.bf16.mxu0 0
        %534 = vmatmul.mubr.bf16.gmra.mxu0 %v379
        %v535 = vpop.f32.mrf.mxu0
        %v536 = vadd.f32 %v411, %v535
        %v537 = vpop.f32.mrf.mxu0
        %v538 = vpop.f32.mrf.mxu0
        %v539 = vadd.f32 %v411, %v538
        %v540 = vpop.f32.mrf.mxu0
        %541 = vmatprep.mubr.bf16.mxu0 0
        %542 = vmatmul.mubr.bf16.gmra.mxu0 %v380
        %v543 = vpop.f32.mrf.mxu0
        %v544 = vadd.f32 %v411, %v543
        %v545 = vpop.f32.mrf.mxu0
        %v546 = vpop.f32.mrf.mxu0
        %v547 = vadd.f32 %v411, %v546
        %v548 = vpop.f32.mrf.mxu0
        %549 = vmatprep.mubr.bf16.mxu0 0
        %550 = vmatmul.mubr.bf16.gmra.mxu0 %v381
        %v551 = vpop.f32.mrf.mxu0
        %v552 = vadd.f32 %v411, %v551
        %v553 = vpop.f32.mrf.mxu0
        %v554 = vpop.f32.mrf.mxu0
        %v555 = vadd.f32 %v411, %v554
        %v556 = vpop.f32.mrf.mxu0
        %557 = vmatprep.mubr.bf16.mxu0 0
        %558 = vmatmul.mubr.bf16.gmra.mxu0 %v382
        %v559 = vpop.f32.mrf.mxu0
        %v560 = vadd.f32 %v411, %v559
        %v561 = vpop.f32.mrf.mxu0
        %v562 = vpop.f32.mrf.mxu0
        %v563 = vadd.f32 %v411, %v562
        %v564 = vpop.f32.mrf.mxu0
        %565 = vmatprep.mubr.bf16.mxu0 0
        %566 = vmatmul.mubr.bf16.gmra.mxu0 %v383
        %v567 = vpop.f32.mrf.mxu0
        %v568 = vadd.f32 %v411, %v567
        %v569 = vpop.f32.mrf.mxu0
        %v570 = vpop.f32.mrf.mxu0
        %v571 = vadd.f32 %v411, %v570
        %v572 = vpop.f32.mrf.mxu0
        %573 = vmatprep.mubr.bf16.mxu0 0
        %574 = vmatmul.mubr.bf16.gmra.mxu0 %v384
        %v575 = vpop.f32.mrf.mxu0
        %v576 = vadd.f32 %v411, %v575
        %v577 = vpop.f32.mrf.mxu0
        %v578 = vpop.f32.mrf.mxu0
        %v579 = vadd.f32 %v411, %v578
        %v580 = vpop.f32.mrf.mxu0
        %581 = vmatprep.mubr.bf16.mxu0 0
        %582 = vmatmul.mubr.bf16.gmra.mxu0 %v385
        %v583 = vpop.f32.mrf.mxu0
        %v584 = vadd.f32 %v411, %v583
        %v585 = vpop.f32.mrf.mxu0
        %v586 = vpop.f32.mrf.mxu0
        %v587 = vadd.f32 %v411, %v586
        %v588 = vpop.f32.mrf.mxu0
        %589 = vmatprep.mubr.bf16.mxu0 0
        %590 = vmatmul.mubr.bf16.gmra.mxu0 %v386
        %v591 = vpop.f32.mrf.mxu0
        %v592 = vadd.f32 %v411, %v591
        %v593 = vpop.f32.mrf.mxu0
        %v594 = vpop.f32.mrf.mxu0
        %v595 = vadd.f32 %v411, %v594
        %v596 = vpop.f32.mrf.mxu0
        %597 = vmatprep.mubr.bf16.mxu0 0
        %598 = vmatmul.mubr.bf16.gmra.mxu0 %v387
        %v599 = vpop.f32.mrf.mxu0
        %v600 = vadd.f32 %v411, %v599
        %v601 = vpop.f32.mrf.mxu0
        %v602 = vpop.f32.mrf.mxu0
        %v603 = vadd.f32 %v411, %v602
        %v604 = vpop.f32.mrf.mxu0
        %605 = vmatprep.mubr.bf16.mxu0 0
        %606 = vmatmul.mubr.bf16.gmra.mxu0 %v388
        %v607 = vpop.f32.mrf.mxu0
        %v608 = vadd.f32 %v411, %v607
        %v609 = vpop.f32.mrf.mxu0
        %v610 = vpop.f32.mrf.mxu0
        %v611 = vadd.f32 %v411, %v610
        %v612 = vpop.f32.mrf.mxu0
        %613 = vmatprep.mubr.bf16.mxu0 0
        %614 = vmatmul.mubr.bf16.gmra.mxu0 %v389
        %v615 = vpop.f32.mrf.mxu0
        %v616 = vadd.f32 %v411, %v615
        %v617 = vpop.f32.mrf.mxu0
        %v618 = vpop.f32.mrf.mxu0
        %v619 = vadd.f32 %v411, %v618
        %v620 = vpop.f32.mrf.mxu0
        %621 = vdwg.mxu0
        %v622 = vmax.f32 %v496, 0.0
        %v623 = vmax.f32 %v499, 0.0
        %v624 = vmax.f32 %v504, 0.0
        %v625 = vmax.f32 %v507, 0.0
        %v626 = vmax.f32 %v512, 0.0
        %v627 = vmax.f32 %v515, 0.0
        %v628 = vmax.f32 %v520, 0.0
        %v629 = vmax.f32 %v523, 0.0
        %v630 = vmax.f32 %v528, 0.0
        %v631 = vmax.f32 %v531, 0.0
        %v632 = vmax.f32 %v536, 0.0
        %v633 = vmax.f32 %v539, 0.0
        %v634 = vmax.f32 %v544, 0.0
        %v635 = vmax.f32 %v547, 0.0
        %v636 = vmax.f32 %v552, 0.0
        %v637 = vmax.f32 %v555, 0.0
        %v638 = vmax.f32 %v560, 0.0
        %v639 = vmax.f32 %v563, 0.0
        %v640 = vmax.f32 %v568, 0.0
        %v641 = vmax.f32 %v571, 0.0
        %v642 = vmax.f32 %v576, 0.0
        %v643 = vmax.f32 %v579, 0.0
        %v644 = vmax.f32 %v584, 0.0
        %v645 = vmax.f32 %v587, 0.0
        %v646 = vmax.f32 %v592, 0.0
        %v647 = vmax.f32 %v595, 0.0
        %v648 = vmax.f32 %v600, 0.0
        %v649 = vmax.f32 %v603, 0.0
        %v650 = vmax.f32 %v608, 0.0
        %v651 = vmax.f32 %v611, 0.0
        %v652 = vmax.f32 %v616, 0.0
        %v653 = vmax.f32 %v619, 0.0
        %v654 = vpack.c.bf16 %v623, %v622
        %v655 = vpack.c.bf16 %v625, %v624
        %v656 = vpack.c.bf16 %v627, %v626
        %v657 = vpack.c.bf16 %v629, %v628
        %v658 = vpack.c.bf16 %v631, %v630
        %v659 = vpack.c.bf16 %v633, %v632
        %v660 = vpack.c.bf16 %v635, %v634
        %v661 = vpack.c.bf16 %v637, %v636
        %v662 = vpack.c.bf16 %v639, %v638
        %v663 = vpack.c.bf16 %v641, %v640
        %v664 = vpack.c.bf16 %v643, %v642
        %v665 = vpack.c.bf16 %v645, %v644
        %v666 = vpack.c.bf16 %v647, %v646
        %v667 = vpack.c.bf16 %v649, %v648
        %v668 = vpack.c.bf16 %v651, %v650
        %v669 = vpack.c.bf16 %v653, %v652
        %670 = vst [vmem:[#allocation2] sm:$0xf] 0
        %671 = vst [vmem:[#allocation2 + $0x4] sm:$0xf] 0
        %672 = vst [vmem:[#allocation2 + $0x8] sm:$0x1] 0
        %673 = vst [vmem:[#allocation2 + $0xc] sm:$0xf] 0
        %674 = vst [vmem:[#allocation2 + $0x10] sm:$0xf] 0
        %675 = vst [vmem:[#allocation2 + $0x14] sm:$0x1] 0
        %676 = vst [vmem:[#allocation2 + $0x18] sm:$0xf] 0
        %677 = vst [vmem:[#allocation2 + $0x1c] sm:$0xf] 0
        %678 = vst [vmem:[#allocation2 + $0x20] sm:$0x1] 0
        %679 = vst [vmem:[#allocation2 + $0x24] sm:$0xf] 0
        %680 = vst [vmem:[#allocation2 + $0x28] sm:$0xf] 0
        %681 = vst [vmem:[#allocation2 + $0x2c] sm:$0x1] 0
        %682 = vst [vmem:[#allocation2 + $0x30] sm:$0xf] 0
        %683 = vst [vmem:[#allocation2 + $0x34] sm:$0xf] 0
        %684 = vst [vmem:[#allocation2 + $0x38] sm:$0x1] 0
        %685 = vst [vmem:[#allocation2 + $0x3c] sm:$0xf] 0
        %686 = vst [vmem:[#allocation2 + $0x40] sm:$0xf] 0
        %687 = vst [vmem:[#allocation2 + $0x44] sm:$0x1] 0
        %688 = vst [vmem:[#allocation2 + $0x48] sm:$0xf] 0
        %689 = vst [vmem:[#allocation2 + $0x4c] sm:$0xf] 0
        %690 = vst [vmem:[#allocation2 + $0x50] sm:$0x1] 0
        %691 = vst [vmem:[#allocation2 + $0x54] sm:$0xf] 0
        %692 = vst [vmem:[#allocation2 + $0x58] sm:$0xf] 0
        %693 = vst [vmem:[#allocation2 + $0x5c] sm:$0x1] 0
        %694 = vst [vmem:[#allocation2 + $0x60] sm:$0xf] 0
        %695 = vst [vmem:[#allocation2 + $0x64] sm:$0xf] 0
        %696 = vst [vmem:[#allocation2 + $0x68] sm:$0x1] 0
        %697 = vst [vmem:[#allocation2 + $0x6c] sm:$0xf] 0
        %698 = vst [vmem:[#allocation2 + $0x70] sm:$0xf] 0
        %699 = vst [vmem:[#allocation2 + $0x74] sm:$0x1] 0
        %700 = vst [vmem:[#allocation2 + $0x78] sm:$0xf] 0
        %701 = vst [vmem:[#allocation2 + $0x7c] sm:$0xf] 0
        %702 = vst [vmem:[#allocation2 + $0x80] sm:$0x1] 0
        %703 = vst [vmem:[#allocation2 + $0x84] sm:$0xf] 0
        %704 = vst [vmem:[#allocation2 + $0x88] sm:$0xf] 0
        %705 = vst [vmem:[#allocation2 + $0x8c] sm:$0x1] 0
        %706 = vst [vmem:[#allocation2 + $0x90] sm:$0xf] 0
        %707 = vst [vmem:[#allocation2 + $0x94] sm:$0xf] 0
        %708 = vst [vmem:[#allocation2 + $0x98] sm:$0x1] 0
        %709 = vst [vmem:[#allocation2 + $0x9c] sm:$0xf] 0
        %710 = vst [vmem:[#allocation2 + $0xa0] sm:$0xf] 0
        %711 = vst [vmem:[#allocation2 + $0xa4] sm:$0x1] 0
        %712 = vst [vmem:[#allocation2 + $0xa8] sm:$0xf] 0
        %713 = vst [vmem:[#allocation2 + $0xac] sm:$0xf] 0
        %714 = vst [vmem:[#allocation2 + $0xb0] sm:$0x1] 0
        %715 = vst [vmem:[#allocation2 + $0xb4] sm:$0xf] 0
        %716 = vst [vmem:[#allocation2 + $0xb8] sm:$0xf] 0
        %717 = vst [vmem:[#allocation2 + $0xbc] sm:$0x1] 0
        %718 = vst [vmem:[#allocation2 + $0xc0] sm:$0xf] 0
        %719 = vst [vmem:[#allocation2 + $0xc4] sm:$0xf] 0
        %720 = vst [vmem:[#allocation2 + $0xc8] sm:$0x1] 0
        %721 = vst [vmem:[#allocation2 + $0xcc] sm:$0xf] 0
        %722 = vst [vmem:[#allocation2 + $0xd0] sm:$0xf] 0
        %723 = vst [vmem:[#allocation2 + $0xd4] sm:$0x1] 0
        %v740 = vunpack.c.l.b16 %v654
        %v741 = vunpack.c.h.b16 %v654
        %v742 = vunpack.c.l.b16 %v655
        %v743 = vunpack.c.h.b16 %v655
        %v744 = vunpack.c.l.b16 %v656
        %v745 = vunpack.c.h.b16 %v656
        %v746 = vunpack.c.l.b16 %v657
        %v747 = vunpack.c.h.b16 %v657
        %v748 = vunpack.c.l.b16 %v658
        %v749 = vunpack.c.h.b16 %v658
        %v750 = vunpack.c.l.b16 %v659
        %v751 = vunpack.c.h.b16 %v659
        %v752 = vunpack.c.l.b16 %v660
        %v753 = vunpack.c.h.b16 %v660
        %v754 = vunpack.c.l.b16 %v661
        %v755 = vunpack.c.h.b16 %v661
        %v756 = vunpack.c.l.b16 %v662
        %v757 = vunpack.c.h.b16 %v662
        %v758 = vunpack.c.l.b16 %v663
        %v759 = vunpack.c.h.b16 %v663
        %v760 = vunpack.c.l.b16 %v664
        %v761 = vunpack.c.h.b16 %v664
        %v762 = vunpack.c.l.b16 %v665
        %v763 = vunpack.c.h.b16 %v665
        %v764 = vunpack.c.l.b16 %v666
        %v765 = vunpack.c.h.b16 %v666
        %v766 = vunpack.c.l.b16 %v667
        %v767 = vunpack.c.h.b16 %v667
        %v768 = vunpack.c.l.b16 %v668
        %v769 = vunpack.c.h.b16 %v668
        %v770 = vunpack.c.l.b16 %v669
        %v771 = vunpack.c.h.b16 %v669
        %v772 = vpack.c.b16 %v740, %v740
        %v773 = vpack.c.b16 %v741, %v741
        %v774 = vpack.c.b16 %v742, %v742
        %v775 = vpack.c.b16 %v743, %v743
        %v776 = vpack.c.b16 %v744, %v744
        %v777 = vpack.c.b16 %v745, %v745
        %v778 = vpack.c.b16 %v746, %v746
        %v779 = vpack.c.b16 %v747, %v747
        %v780 = vpack.c.b16 %v748, %v748
        %v781 = vpack.c.b16 %v749, %v749
        %v782 = vpack.c.b16 %v750, %v750
        %v783 = vpack.c.b16 %v751, %v751
        %v784 = vpack.c.b16 %v752, %v752
        %v785 = vpack.c.b16 %v753, %v753
        %v786 = vpack.c.b16 %v754, %v754
        %v787 = vpack.c.b16 %v755, %v755
        %v788 = vpack.c.b16 %v756, %v756
        %v789 = vpack.c.b16 %v757, %v757
        %v790 = vpack.c.b16 %v758, %v758
        %v791 = vpack.c.b16 %v759, %v759
        %v792 = vpack.c.b16 %v760, %v760
        %v793 = vpack.c.b16 %v761, %v761
        %v794 = vpack.c.b16 %v762, %v762
        %v795 = vpack.c.b16 %v763, %v763
        %v796 = vpack.c.b16 %v764, %v764
        %v797 = vpack.c.b16 %v765, %v765
        %v798 = vpack.c.b16 %v766, %v766
        %v799 = vpack.c.b16 %v767, %v767
        %v800 = vpack.c.b16 %v768, %v768
        %v801 = vpack.c.b16 %v769, %v769
        %v802 = vpack.c.b16 %v770, %v770
        %v803 = vpack.c.b16 %v771, %v771
        %vm804 = vsmask.f32 256
        %vm805 = vsmask.f32 4368
        %vm806 = vmor %vm804, %vm805
        %v808 = vshrl.u32 %v772, 16
        %v810 = vrot.slane %v808, 7
        %v811 = vshll.u32 %v772, 16
        %v813 = vor.u32 %v810, %v811
        %v814 = vrot.slane %v810, 4
        %v816 = vshrl.u32 %v773, 16
        %v818 = vrot.slane %v816, 7
        %v819 = vshll.u32 %v773, 16
        %v821 = vor.u32 %v818, %v819
        %v822 = vsel %vm806, %v814, %v821
        %v823 = vrot.slane %v818, 4
        %v825 = vshrl.u32 %v774, 16
        %v827 = vrot.slane %v825, 7
        %v828 = vshll.u32 %v774, 16
        %v830 = vor.u32 %v827, %v828
        %v831 = vrot.slane %v827, 4
        %v833 = vshrl.u32 %v775, 16
        %v835 = vrot.slane %v833, 7
        %v836 = vshll.u32 %v775, 16
        %v838 = vor.u32 %v835, %v836
        %v839 = vsel %vm806, %v831, %v838
        %v840 = vrot.slane %v835, 4
        %v842 = vshrl.u32 %v776, 16
        %v844 = vrot.slane %v842, 7
        %v845 = vshll.u32 %v776, 16
        %v847 = vor.u32 %v844, %v845
        %v848 = vrot.slane %v844, 4
        %v850 = vshrl.u32 %v777, 16
        %v852 = vrot.slane %v850, 7
        %v853 = vshll.u32 %v777, 16
        %v855 = vor.u32 %v852, %v853
        %v856 = vsel %vm806, %v848, %v855
        %v857 = vrot.slane %v852, 4
        %v859 = vshrl.u32 %v778, 16
        %v861 = vrot.slane %v859, 7
        %v862 = vshll.u32 %v778, 16
        %v864 = vor.u32 %v861, %v862
        %v865 = vrot.slane %v861, 4
        %v867 = vshrl.u32 %v779, 16
        %v869 = vrot.slane %v867, 7
        %v870 = vshll.u32 %v779, 16
        %v872 = vor.u32 %v869, %v870
        %v873 = vsel %vm806, %v865, %v872
        %v874 = vrot.slane %v869, 4
        %v876 = vshrl.u32 %v780, 16
        %v878 = vrot.slane %v876, 7
        %v879 = vshll.u32 %v780, 16
        %v881 = vor.u32 %v878, %v879
        %v882 = vrot.slane %v878, 4
        %v884 = vshrl.u32 %v781, 16
        %v886 = vrot.slane %v884, 7
        %v887 = vshll.u32 %v781, 16
        %v889 = vor.u32 %v886, %v887
        %v890 = vsel %vm806, %v882, %v889
        %v891 = vrot.slane %v886, 4
        %v893 = vshrl.u32 %v782, 16
        %v895 = vrot.slane %v893, 7
        %v896 = vshll.u32 %v782, 16
        %v898 = vor.u32 %v895, %v896
        %v899 = vrot.slane %v895, 4
        %v901 = vshrl.u32 %v783, 16
        %v903 = vrot.slane %v901, 7
        %v904 = vshll.u32 %v783, 16
        %v906 = vor.u32 %v903, %v904
        %v907 = vsel %vm806, %v899, %v906
        %v908 = vrot.slane %v903, 4
        %v910 = vshrl.u32 %v784, 16
        %v912 = vrot.slane %v910, 7
        %v913 = vshll.u32 %v784, 16
        %v915 = vor.u32 %v912, %v913
        %v916 = vrot.slane %v912, 4
        %v918 = vshrl.u32 %v785, 16
        %v920 = vrot.slane %v918, 7
        %v921 = vshll.u32 %v785, 16
        %v923 = vor.u32 %v920, %v921
        %v924 = vsel %vm806, %v916, %v923
        %v925 = vrot.slane %v920, 4
        %v927 = vshrl.u32 %v786, 16
        %v929 = vrot.slane %v927, 7
        %v930 = vshll.u32 %v786, 16
        %v932 = vor.u32 %v929, %v930
        %v933 = vrot.slane %v929, 4
        %v935 = vshrl.u32 %v787, 16
        %v937 = vrot.slane %v935, 7
        %v938 = vshll.u32 %v787, 16
        %v940 = vor.u32 %v937, %v938
        %v941 = vsel %vm806, %v933, %v940
        %v942 = vrot.slane %v937, 4
        %v944 = vshrl.u32 %v788, 16
        %v946 = vrot.slane %v944, 7
        %v947 = vshll.u32 %v788, 16
        %v949 = vor.u32 %v946, %v947
        %v950 = vrot.slane %v946, 4
        %v952 = vshrl.u32 %v789, 16
        %v954 = vrot.slane %v952, 7
        %v955 = vshll.u32 %v789, 16
        %v957 = vor.u32 %v954, %v955
        %v958 = vsel %vm806, %v950, %v957
        %v959 = vrot.slane %v954, 4
        %v961 = vshrl.u32 %v790, 16
        %v963 = vrot.slane %v961, 7
        %v964 = vshll.u32 %v790, 16
        %v966 = vor.u32 %v963, %v964
        %v967 = vrot.slane %v963, 4
        %v969 = vshrl.u32 %v791, 16
        %v971 = vrot.slane %v969, 7
        %v972 = vshll.u32 %v791, 16
        %v974 = vor.u32 %v971, %v972
        %v975 = vsel %vm806, %v967, %v974
        %v976 = vrot.slane %v971, 4
        %v978 = vshrl.u32 %v792, 16
        %v980 = vrot.slane %v978, 7
        %v981 = vshll.u32 %v792, 16
        %v983 = vor.u32 %v980, %v981
        %v984 = vrot.slane %v980, 4
        %v986 = vshrl.u32 %v793, 16
        %v988 = vrot.slane %v986, 7
        %v989 = vshll.u32 %v793, 16
        %v991 = vor.u32 %v988, %v989
        %v992 = vsel %vm806, %v984, %v991
        %v993 = vrot.slane %v988, 4
        %v995 = vshrl.u32 %v794, 16
        %v997 = vrot.slane %v995, 7
        %v998 = vshll.u32 %v794, 16
        %v1000 = vor.u32 %v997, %v998
        %v1001 = vrot.slane %v997, 4
        %v1003 = vshrl.u32 %v795, 16
        %v1005 = vrot.slane %v1003, 7
        %v1006 = vshll.u32 %v795, 16
        %v1008 = vor.u32 %v1005, %v1006
        %v1009 = vsel %vm806, %v1001, %v1008
        %v1010 = vrot.slane %v1005, 4
        %v1012 = vshrl.u32 %v796, 16
        %v1014 = vrot.slane %v1012, 7
        %v1015 = vshll.u32 %v796, 16
        %v1017 = vor.u32 %v1014, %v1015
        %v1018 = vrot.slane %v1014, 4
        %v1020 = vshrl.u32 %v797, 16
        %v1022 = vrot.slane %v1020, 7
        %v1023 = vshll.u32 %v797, 16
        %v1025 = vor.u32 %v1022, %v1023
        %v1026 = vsel %vm806, %v1018, %v1025
        %v1027 = vrot.slane %v1022, 4
        %v1029 = vshrl.u32 %v798, 16
        %v1031 = vrot.slane %v1029, 7
        %v1032 = vshll.u32 %v798, 16
        %v1034 = vor.u32 %v1031, %v1032
        %v1035 = vrot.slane %v1031, 4
        %v1037 = vshrl.u32 %v799, 16
        %v1039 = vrot.slane %v1037, 7
        %v1040 = vshll.u32 %v799, 16
        %v1042 = vor.u32 %v1039, %v1040
        %v1043 = vsel %vm806, %v1035, %v1042
        %v1044 = vrot.slane %v1039, 4
        %v1046 = vshrl.u32 %v800, 16
        %v1048 = vrot.slane %v1046, 7
        %v1049 = vshll.u32 %v800, 16
        %v1051 = vor.u32 %v1048, %v1049
        %v1052 = vrot.slane %v1048, 4
        %v1054 = vshrl.u32 %v801, 16
        %v1056 = vrot.slane %v1054, 7
        %v1057 = vshll.u32 %v801, 16
        %v1059 = vor.u32 %v1056, %v1057
        %v1060 = vsel %vm806, %v1052, %v1059
        %v1061 = vrot.slane %v1056, 4
        %v1063 = vshrl.u32 %v802, 16
        %v1065 = vrot.slane %v1063, 7
        %v1066 = vshll.u32 %v802, 16
        %v1068 = vor.u32 %v1065, %v1066
        %v1069 = vrot.slane %v1065, 4
        %v1071 = vshrl.u32 %v803, 16
        %v1073 = vrot.slane %v1071, 7
        %v1074 = vshll.u32 %v803, 16
        %v1076 = vor.u32 %v1073, %v1074
        %v1077 = vsel %vm806, %v1069, %v1076
        %v1078 = vrot.slane %v1073, 4
        %s1127 = scalar_lea.vmem [#allocation2], 12
        %vm1128 = vcmask 1043456
        %vm1129 = vsmask.f32 7938
        %vm1130 = vmand %vm1128, %vm1129
        %v1131 = vld [vmem:[%s1127] sm:$0xf]
        %v1132 = vsel %vm1130, %v813, %v1131
        %1133 = vst [vmem:[%s1127] sm:$0xf] %v1132
        %1134 = vst [vmem:[%s1127 + $0x4] sm:$0xf] %v822
        %vm1135 = vcmask 1040384
        %vm1136 = vmand %vm1135, %vm804
        %v1137 = vld [vmem:[%s1127 + $0x8] sm:$0x1]
        %v1138 = vsel %vm1136, %v823, %v1137
        %1139 = vst [vmem:[%s1127 + $0x8] sm:$0x1] %v1138
        %v1140 = vld [vmem:[%s1127 + $0xc] sm:$0xf]
        %v1141 = vsel %vm1130, %v830, %v1140
        %1142 = vst [vmem:[%s1127 + $0xc] sm:$0xf] %v1141
        %1143 = vst [vmem:[%s1127 + $0x10] sm:$0xf] %v839
        %v1144 = vld [vmem:[%s1127 + $0x14] sm:$0x1]
        %v1145 = vsel %vm1136, %v840, %v1144
        %1146 = vst [vmem:[%s1127 + $0x14] sm:$0x1] %v1145
        %v1147 = vld [vmem:[%s1127 + $0x18] sm:$0xf]
        %v1148 = vsel %vm1130, %v847, %v1147
        %1149 = vst [vmem:[%s1127 + $0x18] sm:$0xf] %v1148
        %1150 = vst [vmem:[%s1127 + $0x1c] sm:$0xf] %v856
        %v1151 = vld [vmem:[%s1127 + $0x20] sm:$0x1]
        %v1152 = vsel %vm1136, %v857, %v1151
        %1153 = vst [vmem:[%s1127 + $0x20] sm:$0x1] %v1152
        %v1154 = vld [vmem:[%s1127 + $0x24] sm:$0xf]
        %v1155 = vsel %vm1130, %v864, %v1154
        %1156 = vst [vmem:[%s1127 + $0x24] sm:$0xf] %v1155
        %1157 = vst [vmem:[%s1127 + $0x28] sm:$0xf] %v873
        %v1158 = vld [vmem:[%s1127 + $0x2c] sm:$0x1]
        %v1159 = vsel %vm1136, %v874, %v1158
        %1160 = vst [vmem:[%s1127 + $0x2c] sm:$0x1] %v1159
        %v1161 = vld [vmem:[%s1127 + $0x30] sm:$0xf]
        %v1162 = vsel %vm1130, %v881, %v1161
        %1163 = vst [vmem:[%s1127 + $0x30] sm:$0xf] %v1162
        %1164 = vst [vmem:[%s1127 + $0x34] sm:$0xf] %v890
        %v1165 = vld [vmem:[%s1127 + $0x38] sm:$0x1]
        %v1166 = vsel %vm1136, %v891, %v1165
        %1167 = vst [vmem:[%s1127 + $0x38] sm:$0x1] %v1166
        %v1168 = vld [vmem:[%s1127 + $0x3c] sm:$0xf]
        %v1169 = vsel %vm1130, %v898, %v1168
        %1170 = vst [vmem:[%s1127 + $0x3c] sm:$0xf] %v1169
        %1171 = vst [vmem:[%s1127 + $0x40] sm:$0xf] %v907
        %v1172 = vld [vmem:[%s1127 + $0x44] sm:$0x1]
        %v1173 = vsel %vm1136, %v908, %v1172
        %1174 = vst [vmem:[%s1127 + $0x44] sm:$0x1] %v1173
        %v1175 = vld [vmem:[%s1127 + $0x48] sm:$0xf]
        %v1176 = vsel %vm1130, %v915, %v1175
        %1177 = vst [vmem:[%s1127 + $0x48] sm:$0xf] %v1176
        %1178 = vst [vmem:[%s1127 + $0x4c] sm:$0xf] %v924
        %v1179 = vld [vmem:[%s1127 + $0x50] sm:$0x1]
        %v1180 = vsel %vm1136, %v925, %v1179
        %1181 = vst [vmem:[%s1127 + $0x50] sm:$0x1] %v1180
        %v1182 = vld [vmem:[%s1127 + $0x54] sm:$0xf]
        %v1183 = vsel %vm1130, %v932, %v1182
        %1184 = vst [vmem:[%s1127 + $0x54] sm:$0xf] %v1183
        %1185 = vst [vmem:[%s1127 + $0x58] sm:$0xf] %v941
        %v1186 = vld [vmem:[%s1127 + $0x5c] sm:$0x1]
        %v1187 = vsel %vm1136, %v942, %v1186
        %1188 = vst [vmem:[%s1127 + $0x5c] sm:$0x1] %v1187
        %v1189 = vld [vmem:[%s1127 + $0x60] sm:$0xf]
        %v1190 = vsel %vm1130, %v949, %v1189
        %1191 = vst [vmem:[%s1127 + $0x60] sm:$0xf] %v1190
        %1192 = vst [vmem:[%s1127 + $0x64] sm:$0xf] %v958
        %v1193 = vld [vmem:[%s1127 + $0x68] sm:$0x1]
        %v1194 = vsel %vm1136, %v959, %v1193
        %1195 = vst [vmem:[%s1127 + $0x68] sm:$0x1] %v1194
        %v1196 = vld [vmem:[%s1127 + $0x6c] sm:$0xf]
        %v1197 = vsel %vm1130, %v966, %v1196
        %1198 = vst [vmem:[%s1127 + $0x6c] sm:$0xf] %v1197
        %1199 = vst [vmem:[%s1127 + $0x70] sm:$0xf] %v975
        %v1200 = vld [vmem:[%s1127 + $0x74] sm:$0x1]
        %v1201 = vsel %vm1136, %v976, %v1200
        %1202 = vst [vmem:[%s1127 + $0x74] sm:$0x1] %v1201
        %v1203 = vld [vmem:[%s1127 + $0x78] sm:$0xf]
        %v1204 = vsel %vm1130, %v983, %v1203
        %1205 = vst [vmem:[%s1127 + $0x78] sm:$0xf] %v1204
        %1206 = vst [vmem:[%s1127 + $0x7c] sm:$0xf] %v992
        %v1207 = vld [vmem:[%s1127 + $0x80] sm:$0x1]
        %v1208 = vsel %vm1136, %v993, %v1207
        %1209 = vst [vmem:[%s1127 + $0x80] sm:$0x1] %v1208
        %v1210 = vld [vmem:[%s1127 + $0x84] sm:$0xf]
        %v1211 = vsel %vm1130, %v1000, %v1210
        %1212 = vst [vmem:[%s1127 + $0x84] sm:$0xf] %v1211
        %1213 = vst [vmem:[%s1127 + $0x88] sm:$0xf] %v1009
        %v1214 = vld [vmem:[%s1127 + $0x8c] sm:$0x1]
        %v1215 = vsel %vm1136, %v1010, %v1214
        %1216 = vst [vmem:[%s1127 + $0x8c] sm:$0x1] %v1215
        %v1217 = vld [vmem:[%s1127 + $0x90] sm:$0xf]
        %v1218 = vsel %vm1130, %v1017, %v1217
        %1219 = vst [vmem:[%s1127 + $0x90] sm:$0xf] %v1218
        %1220 = vst [vmem:[%s1127 + $0x94] sm:$0xf] %v1026
        %v1221 = vld [vmem:[%s1127 + $0x98] sm:$0x1]
        %v1222 = vsel %vm1136, %v1027, %v1221
        %1223 = vst [vmem:[%s1127 + $0x98] sm:$0x1] %v1222
        %v1224 = vld [vmem:[%s1127 + $0x9c] sm:$0xf]
        %v1225 = vsel %vm1130, %v1034, %v1224
        %1226 = vst [vmem:[%s1127 + $0x9c] sm:$0xf] %v1225
        %1227 = vst [vmem:[%s1127 + $0xa0] sm:$0xf] %v1043
        %v1228 = vld [vmem:[%s1127 + $0xa4] sm:$0x1]
        %v1229 = vsel %vm1136, %v1044, %v1228
        %1230 = vst [vmem:[%s1127 + $0xa4] sm:$0x1] %v1229
        %v1231 = vld [vmem:[%s1127 + $0xa8] sm:$0xf]
        %v1232 = vsel %vm1130, %v1051, %v1231
        %1233 = vst [vmem:[%s1127 + $0xa8] sm:$0xf] %v1232
        %1234 = vst [vmem:[%s1127 + $0xac] sm:$0xf] %v1060
        %v1235 = vld [vmem:[%s1127 + $0xb0] sm:$0x1]
        %v1236 = vsel %vm1136, %v1061, %v1235
        %1237 = vst [vmem:[%s1127 + $0xb0] sm:$0x1] %v1236
        %v1238 = vld [vmem:[%s1127 + $0xb4] sm:$0xf]
        %v1239 = vsel %vm1130, %v1068, %v1238
        %1240 = vst [vmem:[%s1127 + $0xb4] sm:$0xf] %v1239
        %1241 = vst [vmem:[%s1127 + $0xb8] sm:$0xf] %v1077
        %v1242 = vld [vmem:[%s1127 + $0xbc] sm:$0x1]
        %v1243 = vsel %vm1136, %v1078, %v1242
        %1244 = vst [vmem:[%s1127 + $0xbc] sm:$0x1] %v1243
        %v1245 = vld [vmem:[#allocation2] sm:$0xf]
        %v1246 = vld [vmem:[#allocation2 + $0x4] sm:$0xf]
        %v1247 = vld [vmem:[#allocation2 + $0xc] sm:$0xf]
        %v1248 = vld [vmem:[#allocation2 + $0x10] sm:$0xf]
        %v1249 = vld [vmem:[#allocation2 + $0x18] sm:$0xf]
        %v1250 = vld [vmem:[#allocation2 + $0x1c] sm:$0xf]
        %v1251 = vld [vmem:[#allocation2 + $0x24] sm:$0xf]
        %v1252 = vld [vmem:[#allocation2 + $0x28] sm:$0xf]
        %v1253 = vld [vmem:[#allocation2 + $0x30] sm:$0xf]
        %v1254 = vld [vmem:[#allocation2 + $0x34] sm:$0xf]
        %v1255 = vld [vmem:[#allocation2 + $0x3c] sm:$0xf]
        %v1256 = vld [vmem:[#allocation2 + $0x40] sm:$0xf]
        %v1257 = vld [vmem:[#allocation2 + $0x48] sm:$0xf]
        %v1258 = vld [vmem:[#allocation2 + $0x4c] sm:$0xf]
        %v1259 = vld [vmem:[#allocation2 + $0x54] sm:$0xf]
        %v1260 = vld [vmem:[#allocation2 + $0x58] sm:$0xf]
        %v1261 = vld [vmem:[#allocation2 + $0x60] sm:$0xf]
        %v1262 = vld [vmem:[#allocation2 + $0x64] sm:$0xf]
        %v1263 = vld [vmem:[#allocation2 + $0x6c] sm:$0xf]
        %v1264 = vld [vmem:[#allocation2 + $0x70] sm:$0xf]
        %v1265 = vld [vmem:[#allocation2 + $0x78] sm:$0xf]
        %v1266 = vld [vmem:[#allocation2 + $0x7c] sm:$0xf]
        %v1267 = vld [vmem:[#allocation2 + $0x84] sm:$0xf]
        %v1268 = vld [vmem:[#allocation2 + $0x88] sm:$0xf]
        %v1269 = vld [vmem:[#allocation2 + $0x90] sm:$0xf]
        %v1270 = vld [vmem:[#allocation2 + $0x94] sm:$0xf]
        %v1271 = vld [vmem:[#allocation2 + $0x9c] sm:$0xf]
        %v1272 = vld [vmem:[#allocation2 + $0xa0] sm:$0xf]
        %v1273 = vld [vmem:[#allocation2 + $0xa8] sm:$0xf]
        %v1274 = vld [vmem:[#allocation2 + $0xac] sm:$0xf]
        %v1275 = vld [vmem:[#allocation2 + $0xb4] sm:$0xf]
        %v1276 = vld [vmem:[#allocation2 + $0xb8] sm:$0xf]
        %v1277 = vld [vmem:[#allocation2 + $0x8] sm:$0x1]
        %v1278 = vld [vmem:[#allocation2 + $0x14] sm:$0x1]
        %v1279 = vld [vmem:[#allocation2 + $0x20] sm:$0x1]
        %v1280 = vld [vmem:[#allocation2 + $0x2c] sm:$0x1]
        %v1281 = vld [vmem:[#allocation2 + $0x38] sm:$0x1]
        %v1282 = vld [vmem:[#allocation2 + $0x44] sm:$0x1]
        %v1283 = vld [vmem:[#allocation2 + $0x50] sm:$0x1]
        %v1284 = vld [vmem:[#allocation2 + $0x5c] sm:$0x1]
        %v1285 = vld [vmem:[#allocation2 + $0x68] sm:$0x1]
        %v1286 = vld [vmem:[#allocation2 + $0x74] sm:$0x1]
        %v1287 = vld [vmem:[#allocation2 + $0x80] sm:$0x1]
        %v1288 = vld [vmem:[#allocation2 + $0x8c] sm:$0x1]
        %v1289 = vld [vmem:[#allocation2 + $0x98] sm:$0x1]
        %v1290 = vld [vmem:[#allocation2 + $0xa4] sm:$0x1]
        %v1291 = vld [vmem:[#allocation2 + $0xb0] sm:$0x1]
        %v1292 = vld [vmem:[#allocation2 + $0xbc] sm:$0x1]
        %v1293 = vld [vmem:[#allocation2] sm:$0xe]
        %v1294 = vld [vmem:[#allocation2 + $0xc] sm:$0xe]
        %v1295 = vld [vmem:[#allocation2 + $0x18] sm:$0xe]
        %v1296 = vld [vmem:[#allocation2 + $0x24] sm:$0xe]
        %v1297 = vld [vmem:[#allocation2 + $0x30] sm:$0xe]
        %v1298 = vld [vmem:[#allocation2 + $0x3c] sm:$0xe]
        %v1299 = vld [vmem:[#allocation2 + $0x48] sm:$0xe]
        %v1300 = vld [vmem:[#allocation2 + $0x54] sm:$0xe]
        %v1301 = vld [vmem:[#allocation2 + $0x60] sm:$0xe]
        %v1302 = vld [vmem:[#allocation2 + $0x6c] sm:$0xe]
        %v1303 = vld [vmem:[#allocation2 + $0x78] sm:$0xe]
        %v1304 = vld [vmem:[#allocation2 + $0x84] sm:$0xe]
        %v1305 = vld [vmem:[#allocation2 + $0x90] sm:$0xe]
        %v1306 = vld [vmem:[#allocation2 + $0x9c] sm:$0xe]
        %v1307 = vld [vmem:[#allocation2 + $0xa8] sm:$0xe]
        %v1308 = vld [vmem:[#allocation2 + $0xb4] sm:$0xe]
        %v1309 = vld [vmem:[%s1127] sm:$0xf]
        %v1310 = vld [vmem:[%s1127 + $0x4] sm:$0xf]
        %v1311 = vld [vmem:[%s1127 + $0xc] sm:$0xf]
        %v1312 = vld [vmem:[%s1127 + $0x10] sm:$0xf]
        %v1313 = vld [vmem:[%s1127 + $0x18] sm:$0xf]
        %v1314 = vld [vmem:[%s1127 + $0x1c] sm:$0xf]
        %v1315 = vld [vmem:[%s1127 + $0x24] sm:$0xf]
        %v1316 = vld [vmem:[%s1127 + $0x28] sm:$0xf]
        %v1317 = vld [vmem:[%s1127 + $0x30] sm:$0xf]
        %v1318 = vld [vmem:[%s1127 + $0x34] sm:$0xf]
        %v1319 = vld [vmem:[%s1127 + $0x3c] sm:$0xf]
        %v1320 = vld [vmem:[%s1127 + $0x40] sm:$0xf]
        %v1321 = vld [vmem:[%s1127 + $0x48] sm:$0xf]
        %v1322 = vld [vmem:[%s1127 + $0x4c] sm:$0xf]
        %v1323 = vld [vmem:[%s1127 + $0x54] sm:$0xf]
        %v1324 = vld [vmem:[%s1127 + $0x58] sm:$0xf]
        %v1325 = vld [vmem:[%s1127 + $0x60] sm:$0xf]
        %v1326 = vld [vmem:[%s1127 + $0x64] sm:$0xf]
        %v1327 = vld [vmem:[%s1127 + $0x6c] sm:$0xf]
        %v1328 = vld [vmem:[%s1127 + $0x70] sm:$0xf]
        %v1329 = vld [vmem:[%s1127 + $0x78] sm:$0xf]
        %v1330 = vld [vmem:[%s1127 + $0x7c] sm:$0xf]
        %v1331 = vld [vmem:[%s1127 + $0x84] sm:$0xf]
        %v1332 = vld [vmem:[%s1127 + $0x88] sm:$0xf]
        %v1333 = vld [vmem:[%s1127 + $0x90] sm:$0xf]
        %v1334 = vld [vmem:[%s1127 + $0x94] sm:$0xf]
        %v1335 = vld [vmem:[%s1127 + $0x9c] sm:$0xf]
        %v1336 = vld [vmem:[%s1127 + $0xa0] sm:$0xf]
        %v1337 = vld [vmem:[%s1127 + $0xa8] sm:$0xf]
        %v1338 = vld [vmem:[%s1127 + $0xac] sm:$0xf]
        %v1339 = vld [vmem:[%s1127 + $0xb4] sm:$0xf]
        %v1340 = vld [vmem:[%s1127 + $0xb8] sm:$0xf]
        %v1341 = vld [vmem:[%s1127 + $0x8] sm:$0x1]
        %v1342 = vld [vmem:[%s1127 + $0x14] sm:$0x1]
        %v1343 = vld [vmem:[%s1127 + $0x20] sm:$0x1]
        %v1344 = vld [vmem:[%s1127 + $0x2c] sm:$0x1]
        %v1345 = vld [vmem:[%s1127 + $0x38] sm:$0x1]
        %v1346 = vld [vmem:[%s1127 + $0x44] sm:$0x1]
        %v1347 = vld [vmem:[%s1127 + $0x50] sm:$0x1]
        %v1348 = vld [vmem:[%s1127 + $0x5c] sm:$0x1]
        %v1349 = vld [vmem:[%s1127 + $0x68] sm:$0x1]
        %v1350 = vld [vmem:[%s1127 + $0x74] sm:$0x1]
        %v1351 = vld [vmem:[%s1127 + $0x80] sm:$0x1]
        %v1352 = vld [vmem:[%s1127 + $0x8c] sm:$0x1]
        %v1353 = vld [vmem:[%s1127 + $0x98] sm:$0x1]
        %v1354 = vld [vmem:[%s1127 + $0xa4] sm:$0x1]
        %v1355 = vld [vmem:[%s1127 + $0xb0] sm:$0x1]
        %v1356 = vld [vmem:[%s1127 + $0xbc] sm:$0x1]
        %v1357 = vld [vmem:[%s1127] sm:$0xe]
        %v1358 = vld [vmem:[%s1127 + $0xc] sm:$0xe]
        %v1359 = vld [vmem:[%s1127 + $0x18] sm:$0xe]
        %v1360 = vld [vmem:[%s1127 + $0x24] sm:$0xe]
        %v1361 = vld [vmem:[%s1127 + $0x30] sm:$0xe]
        %v1362 = vld [vmem:[%s1127 + $0x3c] sm:$0xe]
        %v1363 = vld [vmem:[%s1127 + $0x48] sm:$0xe]
        %v1364 = vld [vmem:[%s1127 + $0x54] sm:$0xe]
        %v1365 = vld [vmem:[%s1127 + $0x60] sm:$0xe]
        %v1366 = vld [vmem:[%s1127 + $0x6c] sm:$0xe]
        %v1367 = vld [vmem:[%s1127 + $0x78] sm:$0xe]
        %v1368 = vld [vmem:[%s1127 + $0x84] sm:$0xe]
        %v1369 = vld [vmem:[%s1127 + $0x90] sm:$0xe]
        %v1370 = vld [vmem:[%s1127 + $0x9c] sm:$0xe]
        %v1371 = vld [vmem:[%s1127 + $0xa8] sm:$0xe]
        %v1372 = vld [vmem:[%s1127 + $0xb4] sm:$0xe]
        %s1373 = scalar_lea.vmem [#allocation2], 24
        %v1374 = vld [vmem:[%s1373] sm:$0xf]
        %v1375 = vld [vmem:[%s1373 + $0x4] sm:$0xf]
        %v1376 = vld [vmem:[%s1373 + $0xc] sm:$0xf]
        %v1377 = vld [vmem:[%s1373 + $0x10] sm:$0xf]
        %v1378 = vld [vmem:[%s1373 + $0x18] sm:$0xf]
        %v1379 = vld [vmem:[%s1373 + $0x1c] sm:$0xf]
        %v1380 = vld [vmem:[%s1373 + $0x24] sm:$0xf]
        %v1381 = vld [vmem:[%s1373 + $0x28] sm:$0xf]
        %v1382 = vld [vmem:[%s1373 + $0x30] sm:$0xf]
        %v1383 = vld [vmem:[%s1373 + $0x34] sm:$0xf]
        %v1384 = vld [vmem:[%s1373 + $0x3c] sm:$0xf]
        %v1385 = vld [vmem:[%s1373 + $0x40] sm:$0xf]
        %v1386 = vld [vmem:[%s1373 + $0x48] sm:$0xf]
        %v1387 = vld [vmem:[%s1373 + $0x4c] sm:$0xf]
        %v1388 = vld [vmem:[%s1373 + $0x54] sm:$0xf]
        %v1389 = vld [vmem:[%s1373 + $0x58] sm:$0xf]
        %v1390 = vld [vmem:[%s1373 + $0x60] sm:$0xf]
        %v1391 = vld [vmem:[%s1373 + $0x64] sm:$0xf]
        %v1392 = vld [vmem:[%s1373 + $0x6c] sm:$0xf]
        %v1393 = vld [vmem:[%s1373 + $0x70] sm:$0xf]
        %v1394 = vld [vmem:[%s1373 + $0x78] sm:$0xf]
        %v1395 = vld [vmem:[%s1373 + $0x7c] sm:$0xf]
        %v1396 = vld [vmem:[%s1373 + $0x84] sm:$0xf]
        %v1397 = vld [vmem:[%s1373 + $0x88] sm:$0xf]
        %v1398 = vld [vmem:[%s1373 + $0x90] sm:$0xf]
        %v1399 = vld [vmem:[%s1373 + $0x94] sm:$0xf]
        %v1400 = vld [vmem:[%s1373 + $0x9c] sm:$0xf]
        %v1401 = vld [vmem:[%s1373 + $0xa0] sm:$0xf]
        %v1402 = vld [vmem:[%s1373 + $0xa8] sm:$0xf]
        %v1403 = vld [vmem:[%s1373 + $0xac] sm:$0xf]
        %v1404 = vld [vmem:[%s1373 + $0xb4] sm:$0xf]
        %v1405 = vld [vmem:[%s1373 + $0xb8] sm:$0xf]
        %v1406 = vld [vmem:[%s1373 + $0x8] sm:$0x1]
        %v1407 = vld [vmem:[%s1373 + $0x14] sm:$0x1]
        %v1408 = vld [vmem:[%s1373 + $0x20] sm:$0x1]
        %v1409 = vld [vmem:[%s1373 + $0x2c] sm:$0x1]
        %v1410 = vld [vmem:[%s1373 + $0x38] sm:$0x1]
        %v1411 = vld [vmem:[%s1373 + $0x44] sm:$0x1]
        %v1412 = vld [vmem:[%s1373 + $0x50] sm:$0x1]
        %v1413 = vld [vmem:[%s1373 + $0x5c] sm:$0x1]
        %v1414 = vld [vmem:[%s1373 + $0x68] sm:$0x1]
        %v1415 = vld [vmem:[%s1373 + $0x74] sm:$0x1]
        %v1416 = vld [vmem:[%s1373 + $0x80] sm:$0x1]
        %v1417 = vld [vmem:[%s1373 + $0x8c] sm:$0x1]
        %v1418 = vld [vmem:[%s1373 + $0x98] sm:$0x1]
        %v1419 = vld [vmem:[%s1373 + $0xa4] sm:$0x1]
        %v1420 = vld [vmem:[%s1373 + $0xb0] sm:$0x1]
        %v1421 = vld [vmem:[%s1373 + $0xbc] sm:$0x1]
        %v1422 = vld [vmem:[%s1373] sm:$0xe]
        %v1423 = vld [vmem:[%s1373 + $0xc] sm:$0xe]
        %v1424 = vld [vmem:[%s1373 + $0x18] sm:$0xe]
        %v1425 = vld [vmem:[%s1373 + $0x24] sm:$0xe]
        %v1426 = vld [vmem:[%s1373 + $0x30] sm:$0xe]
        %v1427 = vld [vmem:[%s1373 + $0x3c] sm:$0xe]
        %v1428 = vld [vmem:[%s1373 + $0x48] sm:$0xe]
        %v1429 = vld [vmem:[%s1373 + $0x54] sm:$0xe]
        %v1430 = vld [vmem:[%s1373 + $0x60] sm:$0xe]
        %v1431 = vld [vmem:[%s1373 + $0x6c] sm:$0xe]
        %v1432 = vld [vmem:[%s1373 + $0x78] sm:$0xe]
        %v1433 = vld [vmem:[%s1373 + $0x84] sm:$0xe]
        %v1434 = vld [vmem:[%s1373 + $0x90] sm:$0xe]
        %v1435 = vld [vmem:[%s1373 + $0x9c] sm:$0xe]
        %v1436 = vld [vmem:[%s1373 + $0xa8] sm:$0xe]
        %v1437 = vld [vmem:[%s1373 + $0xb4] sm:$0xe]
        %v1470 = vunpack.c.l.b16 %v1245
        %v1471 = vunpack.c.l.b16 %v1246
        %v1472 = vunpack.c.l.b16 %v1247
        %v1473 = vunpack.c.l.b16 %v1248
        %v1474 = vunpack.c.l.b16 %v1249
        %v1475 = vunpack.c.l.b16 %v1250
        %v1476 = vunpack.c.l.b16 %v1251
        %v1477 = vunpack.c.l.b16 %v1252
        %v1478 = vunpack.c.l.b16 %v1253
        %v1479 = vunpack.c.l.b16 %v1254
        %v1480 = vunpack.c.l.b16 %v1255
        %v1481 = vunpack.c.l.b16 %v1256
        %v1482 = vunpack.c.l.b16 %v1257
        %v1483 = vunpack.c.l.b16 %v1258
        %v1484 = vunpack.c.l.b16 %v1259
        %v1485 = vunpack.c.l.b16 %v1260
        %v1486 = vunpack.c.l.b16 %v1261
        %v1487 = vunpack.c.l.b16 %v1262
        %v1488 = vunpack.c.l.b16 %v1263
        %v1489 = vunpack.c.l.b16 %v1264
        %v1490 = vunpack.c.l.b16 %v1265
        %v1491 = vunpack.c.l.b16 %v1266
        %v1492 = vunpack.c.l.b16 %v1267
        %v1493 = vunpack.c.l.b16 %v1268
        %v1494 = vunpack.c.l.b16 %v1269
        %v1495 = vunpack.c.l.b16 %v1270
        %v1496 = vunpack.c.l.b16 %v1271
        %v1497 = vunpack.c.l.b16 %v1272
        %v1498 = vunpack.c.l.b16 %v1273
        %v1499 = vunpack.c.l.b16 %v1274
        %v1500 = vunpack.c.l.b16 %v1275
        %v1501 = vunpack.c.l.b16 %v1276
        %v1502 = vpack.c.b16 %v1471, %v1470
        %v1503 = vpack.c.b16 %v1473, %v1472
        %v1504 = vpack.c.b16 %v1475, %v1474
        %v1505 = vpack.c.b16 %v1477, %v1476
        %v1506 = vpack.c.b16 %v1479, %v1478
        %v1507 = vpack.c.b16 %v1481, %v1480
        %v1508 = vpack.c.b16 %v1483, %v1482
        %v1509 = vpack.c.b16 %v1485, %v1484
        %v1510 = vpack.c.b16 %v1487, %v1486
        %v1511 = vpack.c.b16 %v1489, %v1488
        %v1512 = vpack.c.b16 %v1491, %v1490
        %v1513 = vpack.c.b16 %v1493, %v1492
        %v1514 = vpack.c.b16 %v1495, %v1494
        %v1515 = vpack.c.b16 %v1497, %v1496
        %v1516 = vpack.c.b16 %v1499, %v1498
        %v1517 = vpack.c.b16 %v1501, %v1500
        %v1550 = vunpack.c.l.b16 %v1277
        %v1551 = vunpack.c.l.b16 %v1278
        %v1552 = vunpack.c.l.b16 %v1279
        %v1553 = vunpack.c.l.b16 %v1280
        %v1554 = vunpack.c.l.b16 %v1281
        %v1555 = vunpack.c.l.b16 %v1282
        %v1556 = vunpack.c.l.b16 %v1283
        %v1557 = vunpack.c.l.b16 %v1284
        %v1558 = vunpack.c.l.b16 %v1285
        %v1559 = vunpack.c.l.b16 %v1286
        %v1560 = vunpack.c.l.b16 %v1287
        %v1561 = vunpack.c.l.b16 %v1288
        %v1562 = vunpack.c.l.b16 %v1289
        %v1563 = vunpack.c.l.b16 %v1290
        %v1564 = vunpack.c.l.b16 %v1291
        %v1565 = vunpack.c.l.b16 %v1292
        %v1566 = vpack.c.b16 %v1550, %v1550
        %v1567 = vpack.c.b16 %v1551, %v1551
        %v1568 = vpack.c.b16 %v1552, %v1552
        %v1569 = vpack.c.b16 %v1553, %v1553
        %v1570 = vpack.c.b16 %v1554, %v1554
        %v1571 = vpack.c.b16 %v1555, %v1555
        %v1572 = vpack.c.b16 %v1556, %v1556
        %v1573 = vpack.c.b16 %v1557, %v1557
        %v1574 = vpack.c.b16 %v1558, %v1558
        %v1575 = vpack.c.b16 %v1559, %v1559
        %v1576 = vpack.c.b16 %v1560, %v1560
        %v1577 = vpack.c.b16 %v1561, %v1561
        %v1578 = vpack.c.b16 %v1562, %v1562
        %v1579 = vpack.c.b16 %v1563, %v1563
        %v1580 = vpack.c.b16 %v1564, %v1564
        %v1581 = vpack.c.b16 %v1565, %v1565
        %vm1582 = vsmask.f32 7424
        %v1584 = vshrl.u32 %v1502, 16
        %v1586 = vshll.u32 %v1502, 16
        %v1588 = vrot.slane %v1586, 1
        %v1589 = vor.u32 %v1584, %v1588
        %v1591 = vshll.u32 %v1566, 16
        %v1593 = vrot.slane %v1591, 1
        %v1594 = vsel %vm1582, %v1589, %v1593
        %v1596 = vshrl.u32 %v1503, 16
        %v1598 = vshll.u32 %v1503, 16
        %v1600 = vrot.slane %v1598, 1
        %v1601 = vor.u32 %v1596, %v1600
        %v1603 = vshll.u32 %v1567, 16
        %v1605 = vrot.slane %v1603, 1
        %v1606 = vsel %vm1582, %v1601, %v1605
        %v1608 = vshrl.u32 %v1504, 16
        %v1610 = vshll.u32 %v1504, 16
        %v1612 = vrot.slane %v1610, 1
        %v1613 = vor.u32 %v1608, %v1612
        %v1615 = vshll.u32 %v1568, 16
        %v1617 = vrot.slane %v1615, 1
        %v1618 = vsel %vm1582, %v1613, %v1617
        %v1620 = vshrl.u32 %v1505, 16
        %v1622 = vshll.u32 %v1505, 16
        %v1624 = vrot.slane %v1622, 1
        %v1625 = vor.u32 %v1620, %v1624
        %v1627 = vshll.u32 %v1569, 16
        %v1629 = vrot.slane %v1627, 1
        %v1630 = vsel %vm1582, %v1625, %v1629
        %v1632 = vshrl.u32 %v1506, 16
        %v1634 = vshll.u32 %v1506, 16
        %v1636 = vrot.slane %v1634, 1
        %v1637 = vor.u32 %v1632, %v1636
        %v1639 = vshll.u32 %v1570, 16
        %v1641 = vrot.slane %v1639, 1
        %v1642 = vsel %vm1582, %v1637, %v1641
        %v1644 = vshrl.u32 %v1507, 16
        %v1646 = vshll.u32 %v1507, 16
        %v1648 = vrot.slane %v1646, 1
        %v1649 = vor.u32 %v1644, %v1648
        %v1651 = vshll.u32 %v1571, 16
        %v1653 = vrot.slane %v1651, 1
        %v1654 = vsel %vm1582, %v1649, %v1653
        %v1656 = vshrl.u32 %v1508, 16
        %v1658 = vshll.u32 %v1508, 16
        %v1660 = vrot.slane %v1658, 1
        %v1661 = vor.u32 %v1656, %v1660
        %v1663 = vshll.u32 %v1572, 16
        %v1665 = vrot.slane %v1663, 1
        %v1666 = vsel %vm1582, %v1661, %v1665
        %v1668 = vshrl.u32 %v1509, 16
        %v1670 = vshll.u32 %v1509, 16
        %v1672 = vrot.slane %v1670, 1
        %v1673 = vor.u32 %v1668, %v1672
        %v1675 = vshll.u32 %v1573, 16
        %v1677 = vrot.slane %v1675, 1
        %v1678 = vsel %vm1582, %v1673, %v1677
        %v1680 = vshrl.u32 %v1510, 16
        %v1682 = vshll.u32 %v1510, 16
        %v1684 = vrot.slane %v1682, 1
        %v1685 = vor.u32 %v1680, %v1684
        %v1687 = vshll.u32 %v1574, 16
        %v1689 = vrot.slane %v1687, 1
        %v1690 = vsel %vm1582, %v1685, %v1689
        %v1692 = vshrl.u32 %v1511, 16
        %v1694 = vshll.u32 %v1511, 16
        %v1696 = vrot.slane %v1694, 1
        %v1697 = vor.u32 %v1692, %v1696
        %v1699 = vshll.u32 %v1575, 16
        %v1701 = vrot.slane %v1699, 1
        %v1702 = vsel %vm1582, %v1697, %v1701
        %v1704 = vshrl.u32 %v1512, 16
        %v1706 = vshll.u32 %v1512, 16
        %v1708 = vrot.slane %v1706, 1
        %v1709 = vor.u32 %v1704, %v1708
        %v1711 = vshll.u32 %v1576, 16
        %v1713 = vrot.slane %v1711, 1
        %v1714 = vsel %vm1582, %v1709, %v1713
        %v1716 = vshrl.u32 %v1513, 16
        %v1718 = vshll.u32 %v1513, 16
        %v1720 = vrot.slane %v1718, 1
        %v1721 = vor.u32 %v1716, %v1720
        %v1723 = vshll.u32 %v1577, 16
        %v1725 = vrot.slane %v1723, 1
        %v1726 = vsel %vm1582, %v1721, %v1725
        %v1728 = vshrl.u32 %v1514, 16
        %v1730 = vshll.u32 %v1514, 16
        %v1732 = vrot.slane %v1730, 1
        %v1733 = vor.u32 %v1728, %v1732
        %v1735 = vshll.u32 %v1578, 16
        %v1737 = vrot.slane %v1735, 1
        %v1738 = vsel %vm1582, %v1733, %v1737
        %v1740 = vshrl.u32 %v1515, 16
        %v1742 = vshll.u32 %v1515, 16
        %v1744 = vrot.slane %v1742, 1
        %v1745 = vor.u32 %v1740, %v1744
        %v1747 = vshll.u32 %v1579, 16
        %v1749 = vrot.slane %v1747, 1
        %v1750 = vsel %vm1582, %v1745, %v1749
        %v1752 = vshrl.u32 %v1516, 16
        %v1754 = vshll.u32 %v1516, 16
        %v1756 = vrot.slane %v1754, 1
        %v1757 = vor.u32 %v1752, %v1756
        %v1759 = vshll.u32 %v1580, 16
        %v1761 = vrot.slane %v1759, 1
        %v1762 = vsel %vm1582, %v1757, %v1761
        %v1764 = vshrl.u32 %v1517, 16
        %v1766 = vshll.u32 %v1517, 16
        %v1768 = vrot.slane %v1766, 1
        %v1769 = vor.u32 %v1764, %v1768
        %v1771 = vshll.u32 %v1581, 16
        %v1773 = vrot.slane %v1771, 1
        %v1774 = vsel %vm1582, %v1769, %v1773
        %v1807 = vunpack.c.l.b16 %v1293
        %v1808 = vunpack.c.l.b16 %v1294
        %v1809 = vunpack.c.l.b16 %v1295
        %v1810 = vunpack.c.l.b16 %v1296
        %v1811 = vunpack.c.l.b16 %v1297
        %v1812 = vunpack.c.l.b16 %v1298
        %v1813 = vunpack.c.l.b16 %v1299
        %v1814 = vunpack.c.l.b16 %v1300
        %v1815 = vunpack.c.l.b16 %v1301
        %v1816 = vunpack.c.l.b16 %v1302
        %v1817 = vunpack.c.l.b16 %v1303
        %v1818 = vunpack.c.l.b16 %v1304
        %v1819 = vunpack.c.l.b16 %v1305
        %v1820 = vunpack.c.l.b16 %v1306
        %v1821 = vunpack.c.l.b16 %v1307
        %v1822 = vunpack.c.l.b16 %v1308
        %v1823 = vpack.c.b16 %v1471, %v1807
        %v1824 = vpack.c.b16 %v1473, %v1808
        %v1825 = vpack.c.b16 %v1475, %v1809
        %v1826 = vpack.c.b16 %v1477, %v1810
        %v1827 = vpack.c.b16 %v1479, %v1811
        %v1828 = vpack.c.b16 %v1481, %v1812
        %v1829 = vpack.c.b16 %v1483, %v1813
        %v1830 = vpack.c.b16 %v1485, %v1814
        %v1831 = vpack.c.b16 %v1487, %v1815
        %v1832 = vpack.c.b16 %v1489, %v1816
        %v1833 = vpack.c.b16 %v1491, %v1817
        %v1834 = vpack.c.b16 %v1493, %v1818
        %v1835 = vpack.c.b16 %v1495, %v1819
        %v1836 = vpack.c.b16 %v1497, %v1820
        %v1837 = vpack.c.b16 %v1499, %v1821
        %v1838 = vpack.c.b16 %v1501, %v1822
        %vm1839 = vcmask 1046528
        %v1840 = vrot.slane %v1823, 1
        %v1841 = vrot.slane %v1566, 1
        %v1842 = vsel %vm1839, %v1840, %v1841
        %v1843 = vrot.slane %v1824, 1
        %v1844 = vrot.slane %v1567, 1
        %v1845 = vsel %vm1839, %v1843, %v1844
        %v1846 = vrot.slane %v1825, 1
        %v1847 = vrot.slane %v1568, 1
        %v1848 = vsel %vm1839, %v1846, %v1847
        %v1849 = vrot.slane %v1826, 1
        %v1850 = vrot.slane %v1569, 1
        %v1851 = vsel %vm1839, %v1849, %v1850
        %v1852 = vrot.slane %v1827, 1
        %v1853 = vrot.slane %v1570, 1
        %v1854 = vsel %vm1839, %v1852, %v1853
        %v1855 = vrot.slane %v1828, 1
        %v1856 = vrot.slane %v1571, 1
        %v1857 = vsel %vm1839, %v1855, %v1856
        %v1858 = vrot.slane %v1829, 1
        %v1859 = vrot.slane %v1572, 1
        %v1860 = vsel %vm1839, %v1858, %v1859
        %v1861 = vrot.slane %v1830, 1
        %v1862 = vrot.slane %v1573, 1
        %v1863 = vsel %vm1839, %v1861, %v1862
        %v1864 = vrot.slane %v1831, 1
        %v1865 = vrot.slane %v1574, 1
        %v1866 = vsel %vm1839, %v1864, %v1865
        %v1867 = vrot.slane %v1832, 1
        %v1868 = vrot.slane %v1575, 1
        %v1869 = vsel %vm1839, %v1867, %v1868
        %v1870 = vrot.slane %v1833, 1
        %v1871 = vrot.slane %v1576, 1
        %v1872 = vsel %vm1839, %v1870, %v1871
        %v1873 = vrot.slane %v1834, 1
        %v1874 = vrot.slane %v1577, 1
        %v1875 = vsel %vm1839, %v1873, %v1874
        %v1876 = vrot.slane %v1835, 1
        %v1877 = vrot.slane %v1578, 1
        %v1878 = vsel %vm1839, %v1876, %v1877
        %v1879 = vrot.slane %v1836, 1
        %v1880 = vrot.slane %v1579, 1
        %v1881 = vsel %vm1839, %v1879, %v1880
        %v1882 = vrot.slane %v1837, 1
        %v1883 = vrot.slane %v1580, 1
        %v1884 = vsel %vm1839, %v1882, %v1883
        %v1885 = vrot.slane %v1838, 1
        %v1886 = vrot.slane %v1581, 1
        %v1887 = vsel %vm1839, %v1885, %v1886
        %v1936 = vunpack.c.l.b16 %v1309
        %v1937 = vunpack.c.l.b16 %v1310
        %v1938 = vunpack.c.l.b16 %v1311
        %v1939 = vunpack.c.l.b16 %v1312
        %v1940 = vunpack.c.l.b16 %v1313
        %v1941 = vunpack.c.l.b16 %v1314
        %v1942 = vunpack.c.l.b16 %v1315
        %v1943 = vunpack.c.l.b16 %v1316
        %v1944 = vunpack.c.l.b16 %v1317
        %v1945 = vunpack.c.l.b16 %v1318
        %v1946 = vunpack.c.l.b16 %v1319
        %v1947 = vunpack.c.l.b16 %v1320
        %v1948 = vunpack.c.l.b16 %v1321
        %v1949 = vunpack.c.l.b16 %v1322
        %v1950 = vunpack.c.l.b16 %v1323
        %v1951 = vunpack.c.l.b16 %v1324
        %v1952 = vunpack.c.l.b16 %v1325
        %v1953 = vunpack.c.l.b16 %v1326
        %v1954 = vunpack.c.l.b16 %v1327
        %v1955 = vunpack.c.l.b16 %v1328
        %v1956 = vunpack.c.l.b16 %v1329
        %v1957 = vunpack.c.l.b16 %v1330
        %v1958 = vunpack.c.l.b16 %v1331
        %v1959 = vunpack.c.l.b16 %v1332
        %v1960 = vunpack.c.l.b16 %v1333
        %v1961 = vunpack.c.l.b16 %v1334
        %v1962 = vunpack.c.l.b16 %v1335
        %v1963 = vunpack.c.l.b16 %v1336
        %v1964 = vunpack.c.l.b16 %v1337
        %v1965 = vunpack.c.l.b16 %v1338
        %v1966 = vunpack.c.l.b16 %v1339
        %v1967 = vunpack.c.l.b16 %v1340
        %v1968 = vpack.c.b16 %v1937, %v1936
        %v1969 = vpack.c.b16 %v1939, %v1938
        %v1970 = vpack.c.b16 %v1941, %v1940
        %v1971 = vpack.c.b16 %v1943, %v1942
        %v1972 = vpack.c.b16 %v1945, %v1944
        %v1973 = vpack.c.b16 %v1947, %v1946
        %v1974 = vpack.c.b16 %v1949, %v1948
        %v1975 = vpack.c.b16 %v1951, %v1950
        %v1976 = vpack.c.b16 %v1953, %v1952
        %v1977 = vpack.c.b16 %v1955, %v1954
        %v1978 = vpack.c.b16 %v1957, %v1956
        %v1979 = vpack.c.b16 %v1959, %v1958
        %v1980 = vpack.c.b16 %v1961, %v1960
        %v1981 = vpack.c.b16 %v1963, %v1962
        %v1982 = vpack.c.b16 %v1965, %v1964
        %v1983 = vpack.c.b16 %v1967, %v1966
        %v2016 = vunpack.c.l.b16 %v1341
        %v2017 = vunpack.c.l.b16 %v1342
        %v2018 = vunpack.c.l.b16 %v1343
        %v2019 = vunpack.c.l.b16 %v1344
        %v2020 = vunpack.c.l.b16 %v1345
        %v2021 = vunpack.c.l.b16 %v1346
        %v2022 = vunpack.c.l.b16 %v1347
        %v2023 = vunpack.c.l.b16 %v1348
        %v2024 = vunpack.c.l.b16 %v1349
        %v2025 = vunpack.c.l.b16 %v1350
        %v2026 = vunpack.c.l.b16 %v1351
        %v2027 = vunpack.c.l.b16 %v1352
        %v2028 = vunpack.c.l.b16 %v1353
        %v2029 = vunpack.c.l.b16 %v1354
        %v2030 = vunpack.c.l.b16 %v1355
        %v2031 = vunpack.c.l.b16 %v1356
        %v2032 = vpack.c.b16 %v2016, %v2016
        %v2033 = vpack.c.b16 %v2017, %v2017
        %v2034 = vpack.c.b16 %v2018, %v2018
        %v2035 = vpack.c.b16 %v2019, %v2019
        %v2036 = vpack.c.b16 %v2020, %v2020
        %v2037 = vpack.c.b16 %v2021, %v2021
        %v2038 = vpack.c.b16 %v2022, %v2022
        %v2039 = vpack.c.b16 %v2023, %v2023
        %v2040 = vpack.c.b16 %v2024, %v2024
        %v2041 = vpack.c.b16 %v2025, %v2025
        %v2042 = vpack.c.b16 %v2026, %v2026
        %v2043 = vpack.c.b16 %v2027, %v2027
        %v2044 = vpack.c.b16 %v2028, %v2028
        %v2045 = vpack.c.b16 %v2029, %v2029
        %v2046 = vpack.c.b16 %v2030, %v2030
        %v2047 = vpack.c.b16 %v2031, %v2031
        %v2049 = vshrl.u32 %v1968, 16
        %v2051 = vshll.u32 %v1968, 16
        %v2053 = vrot.slane %v2051, 1
        %v2054 = vor.u32 %v2049, %v2053
        %v2056 = vshll.u32 %v2032, 16
        %v2058 = vrot.slane %v2056, 1
        %v2059 = vsel %vm1582, %v2054, %v2058
        %v2061 = vshrl.u32 %v1969, 16
        %v2063 = vshll.u32 %v1969, 16
        %v2065 = vrot.slane %v2063, 1
        %v2066 = vor.u32 %v2061, %v2065
        %v2068 = vshll.u32 %v2033, 16
        %v2070 = vrot.slane %v2068, 1
        %v2071 = vsel %vm1582, %v2066, %v2070
        %v2073 = vshrl.u32 %v1970, 16
        %v2075 = vshll.u32 %v1970, 16
        %v2077 = vrot.slane %v2075, 1
        %v2078 = vor.u32 %v2073, %v2077
        %v2080 = vshll.u32 %v2034, 16
        %v2082 = vrot.slane %v2080, 1
        %v2083 = vsel %vm1582, %v2078, %v2082
        %v2085 = vshrl.u32 %v1971, 16
        %v2087 = vshll.u32 %v1971, 16
        %v2089 = vrot.slane %v2087, 1
        %v2090 = vor.u32 %v2085, %v2089
        %v2092 = vshll.u32 %v2035, 16
        %v2094 = vrot.slane %v2092, 1
        %v2095 = vsel %vm1582, %v2090, %v2094
        %v2097 = vshrl.u32 %v1972, 16
        %v2099 = vshll.u32 %v1972, 16
        %v2101 = vrot.slane %v2099, 1
        %v2102 = vor.u32 %v2097, %v2101
        %v2104 = vshll.u32 %v2036, 16
        %v2106 = vrot.slane %v2104, 1
        %v2107 = vsel %vm1582, %v2102, %v2106
        %v2109 = vshrl.u32 %v1973, 16
        %v2111 = vshll.u32 %v1973, 16
        %v2113 = vrot.slane %v2111, 1
        %v2114 = vor.u32 %v2109, %v2113
        %v2116 = vshll.u32 %v2037, 16
        %v2118 = vrot.slane %v2116, 1
        %v2119 = vsel %vm1582, %v2114, %v2118
        %v2121 = vshrl.u32 %v1974, 16
        %v2123 = vshll.u32 %v1974, 16
        %v2125 = vrot.slane %v2123, 1
        %v2126 = vor.u32 %v2121, %v2125
        %v2128 = vshll.u32 %v2038, 16
        %v2130 = vrot.slane %v2128, 1
        %v2131 = vsel %vm1582, %v2126, %v2130
        %v2133 = vshrl.u32 %v1975, 16
        %v2135 = vshll.u32 %v1975, 16
        %v2137 = vrot.slane %v2135, 1
        %v2138 = vor.u32 %v2133, %v2137
        %v2140 = vshll.u32 %v2039, 16
        %v2142 = vrot.slane %v2140, 1
        %v2143 = vsel %vm1582, %v2138, %v2142
        %v2145 = vshrl.u32 %v1976, 16
        %v2147 = vshll.u32 %v1976, 16
        %v2149 = vrot.slane %v2147, 1
        %v2150 = vor.u32 %v2145, %v2149
        %v2152 = vshll.u32 %v2040, 16
        %v2154 = vrot.slane %v2152, 1
        %v2155 = vsel %vm1582, %v2150, %v2154
        %v2157 = vshrl.u32 %v1977, 16
        %v2159 = vshll.u32 %v1977, 16
        %v2161 = vrot.slane %v2159, 1
        %v2162 = vor.u32 %v2157, %v2161
        %v2164 = vshll.u32 %v2041, 16
        %v2166 = vrot.slane %v2164, 1
        %v2167 = vsel %vm1582, %v2162, %v2166
        %v2169 = vshrl.u32 %v1978, 16
        %v2171 = vshll.u32 %v1978, 16
        %v2173 = vrot.slane %v2171, 1
        %v2174 = vor.u32 %v2169, %v2173
        %v2176 = vshll.u32 %v2042, 16
        %v2178 = vrot.slane %v2176, 1
        %v2179 = vsel %vm1582, %v2174, %v2178
        %v2181 = vshrl.u32 %v1979, 16
        %v2183 = vshll.u32 %v1979, 16
        %v2185 = vrot.slane %v2183, 1
        %v2186 = vor.u32 %v2181, %v2185
        %v2188 = vshll.u32 %v2043, 16
        %v2190 = vrot.slane %v2188, 1
        %v2191 = vsel %vm1582, %v2186, %v2190
        %v2193 = vshrl.u32 %v1980, 16
        %v2195 = vshll.u32 %v1980, 16
        %v2197 = vrot.slane %v2195, 1
        %v2198 = vor.u32 %v2193, %v2197
        %v2200 = vshll.u32 %v2044, 16
        %v2202 = vrot.slane %v2200, 1
        %v2203 = vsel %vm1582, %v2198, %v2202
        %v2205 = vshrl.u32 %v1981, 16
        %v2207 = vshll.u32 %v1981, 16
        %v2209 = vrot.slane %v2207, 1
        %v2210 = vor.u32 %v2205, %v2209
        %v2212 = vshll.u32 %v2045, 16
        %v2214 = vrot.slane %v2212, 1
        %v2215 = vsel %vm1582, %v2210, %v2214
        %v2217 = vshrl.u32 %v1982, 16
        %v2219 = vshll.u32 %v1982, 16
        %v2221 = vrot.slane %v2219, 1
        %v2222 = vor.u32 %v2217, %v2221
        %v2224 = vshll.u32 %v2046, 16
        %v2226 = vrot.slane %v2224, 1
        %v2227 = vsel %vm1582, %v2222, %v2226
        %v2229 = vshrl.u32 %v1983, 16
        %v2231 = vshll.u32 %v1983, 16
        %v2233 = vrot.slane %v2231, 1
        %v2234 = vor.u32 %v2229, %v2233
        %v2236 = vshll.u32 %v2047, 16
        %v2238 = vrot.slane %v2236, 1
        %v2239 = vsel %vm1582, %v2234, %v2238
        %v2272 = vunpack.c.l.b16 %v1357
        %v2273 = vunpack.c.l.b16 %v1358
        %v2274 = vunpack.c.l.b16 %v1359
        %v2275 = vunpack.c.l.b16 %v1360
        %v2276 = vunpack.c.l.b16 %v1361
        %v2277 = vunpack.c.l.b16 %v1362
        %v2278 = vunpack.c.l.b16 %v1363
        %v2279 = vunpack.c.l.b16 %v1364
        %v2280 = vunpack.c.l.b16 %v1365
        %v2281 = vunpack.c.l.b16 %v1366
        %v2282 = vunpack.c.l.b16 %v1367
        %v2283 = vunpack.c.l.b16 %v1368
        %v2284 = vunpack.c.l.b16 %v1369
        %v2285 = vunpack.c.l.b16 %v1370
        %v2286 = vunpack.c.l.b16 %v1371
        %v2287 = vunpack.c.l.b16 %v1372
        %v2288 = vpack.c.b16 %v1937, %v2272
        %v2289 = vpack.c.b16 %v1939, %v2273
        %v2290 = vpack.c.b16 %v1941, %v2274
        %v2291 = vpack.c.b16 %v1943, %v2275
        %v2292 = vpack.c.b16 %v1945, %v2276
        %v2293 = vpack.c.b16 %v1947, %v2277
        %v2294 = vpack.c.b16 %v1949, %v2278
        %v2295 = vpack.c.b16 %v1951, %v2279
        %v2296 = vpack.c.b16 %v1953, %v2280
        %v2297 = vpack.c.b16 %v1955, %v2281
        %v2298 = vpack.c.b16 %v1957, %v2282
        %v2299 = vpack.c.b16 %v1959, %v2283
        %v2300 = vpack.c.b16 %v1961, %v2284
        %v2301 = vpack.c.b16 %v1963, %v2285
        %v2302 = vpack.c.b16 %v1965, %v2286
        %v2303 = vpack.c.b16 %v1967, %v2287
        %v2304 = vrot.slane %v2288, 1
        %v2305 = vrot.slane %v2032, 1
        %v2306 = vsel %vm1839, %v2304, %v2305
        %v2307 = vrot.slane %v2289, 1
        %v2308 = vrot.slane %v2033, 1
        %v2309 = vsel %vm1839, %v2307, %v2308
        %v2310 = vrot.slane %v2290, 1
        %v2311 = vrot.slane %v2034, 1
        %v2312 = vsel %vm1839, %v2310, %v2311
        %v2313 = vrot.slane %v2291, 1
        %v2314 = vrot.slane %v2035, 1
        %v2315 = vsel %vm1839, %v2313, %v2314
        %v2316 = vrot.slane %v2292, 1
        %v2317 = vrot.slane %v2036, 1
        %v2318 = vsel %vm1839, %v2316, %v2317
        %v2319 = vrot.slane %v2293, 1
        %v2320 = vrot.slane %v2037, 1
        %v2321 = vsel %vm1839, %v2319, %v2320
        %v2322 = vrot.slane %v2294, 1
        %v2323 = vrot.slane %v2038, 1
        %v2324 = vsel %vm1839, %v2322, %v2323
        %v2325 = vrot.slane %v2295, 1
        %v2326 = vrot.slane %v2039, 1
        %v2327 = vsel %vm1839, %v2325, %v2326
        %v2328 = vrot.slane %v2296, 1
        %v2329 = vrot.slane %v2040, 1
        %v2330 = vsel %vm1839, %v2328, %v2329
        %v2331 = vrot.slane %v2297, 1
        %v2332 = vrot.slane %v2041, 1
        %v2333 = vsel %vm1839, %v2331, %v2332
        %v2334 = vrot.slane %v2298, 1
        %v2335 = vrot.slane %v2042, 1
        %v2336 = vsel %vm1839, %v2334, %v2335
        %v2337 = vrot.slane %v2299, 1
        %v2338 = vrot.slane %v2043, 1
        %v2339 = vsel %vm1839, %v2337, %v2338
        %v2340 = vrot.slane %v2300, 1
        %v2341 = vrot.slane %v2044, 1
        %v2342 = vsel %vm1839, %v2340, %v2341
        %v2343 = vrot.slane %v2301, 1
        %v2344 = vrot.slane %v2045, 1
        %v2345 = vsel %vm1839, %v2343, %v2344
        %v2346 = vrot.slane %v2302, 1
        %v2347 = vrot.slane %v2046, 1
        %v2348 = vsel %vm1839, %v2346, %v2347
        %v2349 = vrot.slane %v2303, 1
        %v2350 = vrot.slane %v2047, 1
        %v2351 = vsel %vm1839, %v2349, %v2350
        %v2400 = vunpack.c.l.b16 %v1374
        %v2401 = vunpack.c.l.b16 %v1375
        %v2402 = vunpack.c.l.b16 %v1376
        %v2403 = vunpack.c.l.b16 %v1377
        %v2404 = vunpack.c.l.b16 %v1378
        %v2405 = vunpack.c.l.b16 %v1379
        %v2406 = vunpack.c.l.b16 %v1380
        %v2407 = vunpack.c.l.b16 %v1381
        %v2408 = vunpack.c.l.b16 %v1382
        %v2409 = vunpack.c.l.b16 %v1383
        %v2410 = vunpack.c.l.b16 %v1384
        %v2411 = vunpack.c.l.b16 %v1385
        %v2412 = vunpack.c.l.b16 %v1386
        %v2413 = vunpack.c.l.b16 %v1387
        %v2414 = vunpack.c.l.b16 %v1388
        %v2415 = vunpack.c.l.b16 %v1389
        %v2416 = vunpack.c.l.b16 %v1390
        %v2417 = vunpack.c.l.b16 %v1391
        %v2418 = vunpack.c.l.b16 %v1392
        %v2419 = vunpack.c.l.b16 %v1393
        %v2420 = vunpack.c.l.b16 %v1394
        %v2421 = vunpack.c.l.b16 %v1395
        %v2422 = vunpack.c.l.b16 %v1396
        %v2423 = vunpack.c.l.b16 %v1397
        %v2424 = vunpack.c.l.b16 %v1398
        %v2425 = vunpack.c.l.b16 %v1399
        %v2426 = vunpack.c.l.b16 %v1400
        %v2427 = vunpack.c.l.b16 %v1401
        %v2428 = vunpack.c.l.b16 %v1402
        %v2429 = vunpack.c.l.b16 %v1403
        %v2430 = vunpack.c.l.b16 %v1404
        %v2431 = vunpack.c.l.b16 %v1405
        %v2432 = vpack.c.b16 %v2401, %v2400
        %v2433 = vpack.c.b16 %v2403, %v2402
        %v2434 = vpack.c.b16 %v2405, %v2404
        %v2435 = vpack.c.b16 %v2407, %v2406
        %v2436 = vpack.c.b16 %v2409, %v2408
        %v2437 = vpack.c.b16 %v2411, %v2410
        %v2438 = vpack.c.b16 %v2413, %v2412
        %v2439 = vpack.c.b16 %v2415, %v2414
        %v2440 = vpack.c.b16 %v2417, %v2416
        %v2441 = vpack.c.b16 %v2419, %v2418
        %v2442 = vpack.c.b16 %v2421, %v2420
        %v2443 = vpack.c.b16 %v2423, %v2422
        %v2444 = vpack.c.b16 %v2425, %v2424
        %v2445 = vpack.c.b16 %v2427, %v2426
        %v2446 = vpack.c.b16 %v2429, %v2428
        %v2447 = vpack.c.b16 %v2431, %v2430
        %v2480 = vunpack.c.l.b16 %v1406
        %v2481 = vunpack.c.l.b16 %v1407
        %v2482 = vunpack.c.l.b16 %v1408
        %v2483 = vunpack.c.l.b16 %v1409
        %v2484 = vunpack.c.l.b16 %v1410
        %v2485 = vunpack.c.l.b16 %v1411
        %v2486 = vunpack.c.l.b16 %v1412
        %v2487 = vunpack.c.l.b16 %v1413
        %v2488 = vunpack.c.l.b16 %v1414
        %v2489 = vunpack.c.l.b16 %v1415
        %v2490 = vunpack.c.l.b16 %v1416
        %v2491 = vunpack.c.l.b16 %v1417
        %v2492 = vunpack.c.l.b16 %v1418
        %v2493 = vunpack.c.l.b16 %v1419
        %v2494 = vunpack.c.l.b16 %v1420
        %v2495 = vunpack.c.l.b16 %v1421
        %v2496 = vpack.c.b16 %v2480, %v2480
        %v2497 = vpack.c.b16 %v2481, %v2481
        %v2498 = vpack.c.b16 %v2482, %v2482
        %v2499 = vpack.c.b16 %v2483, %v2483
        %v2500 = vpack.c.b16 %v2484, %v2484
        %v2501 = vpack.c.b16 %v2485, %v2485
        %v2502 = vpack.c.b16 %v2486, %v2486
        %v2503 = vpack.c.b16 %v2487, %v2487
        %v2504 = vpack.c.b16 %v2488, %v2488
        %v2505 = vpack.c.b16 %v2489, %v2489
        %v2506 = vpack.c.b16 %v2490, %v2490
        %v2507 = vpack.c.b16 %v2491, %v2491
        %v2508 = vpack.c.b16 %v2492, %v2492
        %v2509 = vpack.c.b16 %v2493, %v2493
        %v2510 = vpack.c.b16 %v2494, %v2494
        %v2511 = vpack.c.b16 %v2495, %v2495
        %v2513 = vshrl.u32 %v2432, 16
        %v2515 = vshll.u32 %v2432, 16
        %v2517 = vrot.slane %v2515, 1
        %v2518 = vor.u32 %v2513, %v2517
        %v2520 = vshll.u32 %v2496, 16
        %v2522 = vrot.slane %v2520, 1
        %v2523 = vsel %vm1582, %v2518, %v2522
        %v2525 = vshrl.u32 %v2433, 16
        %v2527 = vshll.u32 %v2433, 16
        %v2529 = vrot.slane %v2527, 1
        %v2530 = vor.u32 %v2525, %v2529
        %v2532 = vshll.u32 %v2497, 16
        %v2534 = vrot.slane %v2532, 1
        %v2535 = vsel %vm1582, %v2530, %v2534
        %v2537 = vshrl.u32 %v2434, 16
        %v2539 = vshll.u32 %v2434, 16
        %v2541 = vrot.slane %v2539, 1
        %v2542 = vor.u32 %v2537, %v2541
        %v2544 = vshll.u32 %v2498, 16
        %v2546 = vrot.slane %v2544, 1
        %v2547 = vsel %vm1582, %v2542, %v2546
        %v2549 = vshrl.u32 %v2435, 16
        %v2551 = vshll.u32 %v2435, 16
        %v2553 = vrot.slane %v2551, 1
        %v2554 = vor.u32 %v2549, %v2553
        %v2556 = vshll.u32 %v2499, 16
        %v2558 = vrot.slane %v2556, 1
        %v2559 = vsel %vm1582, %v2554, %v2558
        %v2561 = vshrl.u32 %v2436, 16
        %v2563 = vshll.u32 %v2436, 16
        %v2565 = vrot.slane %v2563, 1
        %v2566 = vor.u32 %v2561, %v2565
        %v2568 = vshll.u32 %v2500, 16
        %v2570 = vrot.slane %v2568, 1
        %v2571 = vsel %vm1582, %v2566, %v2570
        %v2573 = vshrl.u32 %v2437, 16
        %v2575 = vshll.u32 %v2437, 16
        %v2577 = vrot.slane %v2575, 1
        %v2578 = vor.u32 %v2573, %v2577
        %v2580 = vshll.u32 %v2501, 16
        %v2582 = vrot.slane %v2580, 1
        %v2583 = vsel %vm1582, %v2578, %v2582
        %v2585 = vshrl.u32 %v2438, 16
        %v2587 = vshll.u32 %v2438, 16
        %v2589 = vrot.slane %v2587, 1
        %v2590 = vor.u32 %v2585, %v2589
        %v2592 = vshll.u32 %v2502, 16
        %v2594 = vrot.slane %v2592, 1
        %v2595 = vsel %vm1582, %v2590, %v2594
        %v2597 = vshrl.u32 %v2439, 16
        %v2599 = vshll.u32 %v2439, 16
        %v2601 = vrot.slane %v2599, 1
        %v2602 = vor.u32 %v2597, %v2601
        %v2604 = vshll.u32 %v2503, 16
        %v2606 = vrot.slane %v2604, 1
        %v2607 = vsel %vm1582, %v2602, %v2606
        %v2609 = vshrl.u32 %v2440, 16
        %v2611 = vshll.u32 %v2440, 16
        %v2613 = vrot.slane %v2611, 1
        %v2614 = vor.u32 %v2609, %v2613
        %v2616 = vshll.u32 %v2504, 16
        %v2618 = vrot.slane %v2616, 1
        %v2619 = vsel %vm1582, %v2614, %v2618
        %v2621 = vshrl.u32 %v2441, 16
        %v2623 = vshll.u32 %v2441, 16
        %v2625 = vrot.slane %v2623, 1
        %v2626 = vor.u32 %v2621, %v2625
        %v2628 = vshll.u32 %v2505, 16
        %v2630 = vrot.slane %v2628, 1
        %v2631 = vsel %vm1582, %v2626, %v2630
        %v2633 = vshrl.u32 %v2442, 16
        %v2635 = vshll.u32 %v2442, 16
        %v2637 = vrot.slane %v2635, 1
        %v2638 = vor.u32 %v2633, %v2637
        %v2640 = vshll.u32 %v2506, 16
        %v2642 = vrot.slane %v2640, 1
        %v2643 = vsel %vm1582, %v2638, %v2642
        %v2645 = vshrl.u32 %v2443, 16
        %v2647 = vshll.u32 %v2443, 16
        %v2649 = vrot.slane %v2647, 1
        %v2650 = vor.u32 %v2645, %v2649
        %v2652 = vshll.u32 %v2507, 16
        %v2654 = vrot.slane %v2652, 1
        %v2655 = vsel %vm1582, %v2650, %v2654
        %v2657 = vshrl.u32 %v2444, 16
        %v2659 = vshll.u32 %v2444, 16
        %v2661 = vrot.slane %v2659, 1
        %v2662 = vor.u32 %v2657, %v2661
        %v2664 = vshll.u32 %v2508, 16
        %v2666 = vrot.slane %v2664, 1
        %v2667 = vsel %vm1582, %v2662, %v2666
        %v2669 = vshrl.u32 %v2445, 16
        %v2671 = vshll.u32 %v2445, 16
        %v2673 = vrot.slane %v2671, 1
        %v2674 = vor.u32 %v2669, %v2673
        %v2676 = vshll.u32 %v2509, 16
        %v2678 = vrot.slane %v2676, 1
        %v2679 = vsel %vm1582, %v2674, %v2678
        %v2681 = vshrl.u32 %v2446, 16
        %v2683 = vshll.u32 %v2446, 16
        %v2685 = vrot.slane %v2683, 1
        %v2686 = vor.u32 %v2681, %v2685
        %v2688 = vshll.u32 %v2510, 16
        %v2690 = vrot.slane %v2688, 1
        %v2691 = vsel %vm1582, %v2686, %v2690
        %v2693 = vshrl.u32 %v2447, 16
        %v2695 = vshll.u32 %v2447, 16
        %v2697 = vrot.slane %v2695, 1
        %v2698 = vor.u32 %v2693, %v2697
        %v2700 = vshll.u32 %v2511, 16
        %v2702 = vrot.slane %v2700, 1
        %v2703 = vsel %vm1582, %v2698, %v2702
        %v2736 = vunpack.c.l.b16 %v1422
        %v2737 = vunpack.c.l.b16 %v1423
        %v2738 = vunpack.c.l.b16 %v1424
        %v2739 = vunpack.c.l.b16 %v1425
        %v2740 = vunpack.c.l.b16 %v1426
        %v2741 = vunpack.c.l.b16 %v1427
        %v2742 = vunpack.c.l.b16 %v1428
        %v2743 = vunpack.c.l.b16 %v1429
        %v2744 = vunpack.c.l.b16 %v1430
        %v2745 = vunpack.c.l.b16 %v1431
        %v2746 = vunpack.c.l.b16 %v1432
        %v2747 = vunpack.c.l.b16 %v1433
        %v2748 = vunpack.c.l.b16 %v1434
        %v2749 = vunpack.c.l.b16 %v1435
        %v2750 = vunpack.c.l.b16 %v1436
        %v2751 = vunpack.c.l.b16 %v1437
        %v2752 = vpack.c.b16 %v2401, %v2736
        %v2753 = vpack.c.b16 %v2403, %v2737
        %v2754 = vpack.c.b16 %v2405, %v2738
        %v2755 = vpack.c.b16 %v2407, %v2739
        %v2756 = vpack.c.b16 %v2409, %v2740
        %v2757 = vpack.c.b16 %v2411, %v2741
        %v2758 = vpack.c.b16 %v2413, %v2742
        %v2759 = vpack.c.b16 %v2415, %v2743
        %v2760 = vpack.c.b16 %v2417, %v2744
        %v2761 = vpack.c.b16 %v2419, %v2745
        %v2762 = vpack.c.b16 %v2421, %v2746
        %v2763 = vpack.c.b16 %v2423, %v2747
        %v2764 = vpack.c.b16 %v2425, %v2748
        %v2765 = vpack.c.b16 %v2427, %v2749
        %v2766 = vpack.c.b16 %v2429, %v2750
        %v2767 = vpack.c.b16 %v2431, %v2751
        %v2768 = vrot.slane %v2752, 1
        %v2769 = vrot.slane %v2496, 1
        %v2770 = vsel %vm1839, %v2768, %v2769
        %v2771 = vrot.slane %v2753, 1
        %v2772 = vrot.slane %v2497, 1
        %v2773 = vsel %vm1839, %v2771, %v2772
        %v2774 = vrot.slane %v2754, 1
        %v2775 = vrot.slane %v2498, 1
        %v2776 = vsel %vm1839, %v2774, %v2775
        %v2777 = vrot.slane %v2755, 1
        %v2778 = vrot.slane %v2499, 1
        %v2779 = vsel %vm1839, %v2777, %v2778
        %v2780 = vrot.slane %v2756, 1
        %v2781 = vrot.slane %v2500, 1
        %v2782 = vsel %vm1839, %v2780, %v2781
        %v2783 = vrot.slane %v2757, 1
        %v2784 = vrot.slane %v2501, 1
        %v2785 = vsel %vm1839, %v2783, %v2784
        %v2786 = vrot.slane %v2758, 1
        %v2787 = vrot.slane %v2502, 1
        %v2788 = vsel %vm1839, %v2786, %v2787
        %v2789 = vrot.slane %v2759, 1
        %v2790 = vrot.slane %v2503, 1
        %v2791 = vsel %vm1839, %v2789, %v2790
        %v2792 = vrot.slane %v2760, 1
        %v2793 = vrot.slane %v2504, 1
        %v2794 = vsel %vm1839, %v2792, %v2793
        %v2795 = vrot.slane %v2761, 1
        %v2796 = vrot.slane %v2505, 1
        %v2797 = vsel %vm1839, %v2795, %v2796
        %v2798 = vrot.slane %v2762, 1
        %v2799 = vrot.slane %v2506, 1
        %v2800 = vsel %vm1839, %v2798, %v2799
        %v2801 = vrot.slane %v2763, 1
        %v2802 = vrot.slane %v2507, 1
        %v2803 = vsel %vm1839, %v2801, %v2802
        %v2804 = vrot.slane %v2764, 1
        %v2805 = vrot.slane %v2508, 1
        %v2806 = vsel %vm1839, %v2804, %v2805
        %v2807 = vrot.slane %v2765, 1
        %v2808 = vrot.slane %v2509, 1
        %v2809 = vsel %vm1839, %v2807, %v2808
        %v2810 = vrot.slane %v2766, 1
        %v2811 = vrot.slane %v2510, 1
        %v2812 = vsel %vm1839, %v2810, %v2811
        %v2813 = vrot.slane %v2767, 1
        %v2814 = vrot.slane %v2511, 1
        %v2815 = vsel %vm1839, %v2813, %v2814
        %v2832 = vld [vmem:[#allocation8] sm:$0xf]
        %v2833 = vld [vmem:[#allocation8 + $0x4] sm:$0xf]
        %v2834 = vld [vmem:[#allocation8 + $0x8] sm:$0xf]
        %v2835 = vld [vmem:[#allocation8 + $0xc] sm:$0xf]
        %v2836 = vld [vmem:[#allocation8 + $0x10] sm:$0xf]
        %v2837 = vld [vmem:[#allocation8 + $0x14] sm:$0xf]
        %v2838 = vld [vmem:[#allocation8 + $0x18] sm:$0xf]
        %v2839 = vld [vmem:[#allocation8 + $0x1c] sm:$0xf]
        %v2840 = vld [vmem:[#allocation8 + $0x20] sm:$0xf]
        %v2841 = vld [vmem:[#allocation8 + $0x24] sm:$0xf]
        %v2842 = vld [vmem:[#allocation8 + $0x28] sm:$0xf]
        %v2843 = vld [vmem:[#allocation8 + $0x2c] sm:$0xf]
        %v2844 = vld [vmem:[#allocation8 + $0x30] sm:$0xf]
        %v2845 = vld [vmem:[#allocation8 + $0x34] sm:$0xf]
        %v2846 = vld [vmem:[#allocation8 + $0x38] sm:$0xf]
        %v2847 = vld [vmem:[#allocation8 + $0x3c] sm:$0xf]
        %v2848 = vld [vmem:[#allocation8 + $0x40] sm:$0xf]
        %v2849 = vld [vmem:[#allocation8 + $0x44] sm:$0xf]
        %v2850 = vld [vmem:[#allocation8 + $0x48] sm:$0xf]
        %v2851 = vld [vmem:[#allocation8 + $0x4c] sm:$0xf]
        %v2852 = vld [vmem:[#allocation8 + $0x50] sm:$0xf]
        %v2853 = vld [vmem:[#allocation8 + $0x54] sm:$0xf]
        %v2854 = vld [vmem:[#allocation8 + $0x58] sm:$0xf]
        %v2855 = vld [vmem:[#allocation8 + $0x5c] sm:$0xf]
        %v2856 = vld [vmem:[#allocation8 + $0x60] sm:$0xf]
        %v2857 = vld [vmem:[#allocation8 + $0x64] sm:$0xf]
        %v2858 = vld [vmem:[#allocation8 + $0x68] sm:$0xf]
        %v2859 = vld [vmem:[#allocation8 + $0x6c] sm:$0xf]
        %v2860 = vld [vmem:[#allocation8 + $0x70] sm:$0xf]
        %v2861 = vld [vmem:[#allocation8 + $0x74] sm:$0xf]
        %v2862 = vld [vmem:[#allocation8 + $0x78] sm:$0xf]
        %v2863 = vld [vmem:[#allocation8 + $0x7c] sm:$0xf]
        %v2864 = vld [vmem:[#allocation8 + $0x80] sm:$0xf]
        %v2865 = vld [vmem:[#allocation8 + $0x84] sm:$0xf]
        %v2866 = vld [vmem:[#allocation8 + $0x88] sm:$0xf]
        %v2867 = vld [vmem:[#allocation8 + $0x8c] sm:$0xf]
        %v2868 = vld [vmem:[#allocation8 + $0x90] sm:$0xf]
        %v2869 = vld [vmem:[#allocation8 + $0x94] sm:$0xf]
        %v2870 = vld [vmem:[#allocation8 + $0x98] sm:$0xf]
        %v2871 = vld [vmem:[#allocation8 + $0x9c] sm:$0xf]
        %v2872 = vld [vmem:[#allocation8 + $0xa0] sm:$0xf]
        %v2873 = vld [vmem:[#allocation8 + $0xa4] sm:$0xf]
        %v2874 = vld [vmem:[#allocation8 + $0xa8] sm:$0xf]
        %v2875 = vld [vmem:[#allocation8 + $0xac] sm:$0xf]
        %v2876 = vld [vmem:[#allocation8 + $0xb0] sm:$0xf]
        %v2877 = vld [vmem:[#allocation8 + $0xb4] sm:$0xf]
        %v2878 = vld [vmem:[#allocation8 + $0xb8] sm:$0xf]
        %v2879 = vld [vmem:[#allocation8 + $0xbc] sm:$0xf]
        %v2880 = vld [vmem:[#allocation8 + $0xc0] sm:$0xf]
        %v2881 = vld [vmem:[#allocation8 + $0xc4] sm:$0xf]
        %v2882 = vld [vmem:[#allocation8 + $0xc8] sm:$0xf]
        %v2883 = vld [vmem:[#allocation8 + $0xcc] sm:$0xf]
        %v2884 = vld [vmem:[#allocation8 + $0xd0] sm:$0xf]
        %v2885 = vld [vmem:[#allocation8 + $0xd4] sm:$0xf]
        %v2886 = vld [vmem:[#allocation8 + $0xd8] sm:$0xf]
        %v2887 = vld [vmem:[#allocation8 + $0xdc] sm:$0xf]
        %v2888 = vld [vmem:[#allocation8 + $0xe0] sm:$0xf]
        %v2889 = vld [vmem:[#allocation8 + $0xe4] sm:$0xf]
        %v2890 = vld [vmem:[#allocation8 + $0xe8] sm:$0xf]
        %v2891 = vld [vmem:[#allocation8 + $0xec] sm:$0xf]
        %v2892 = vld [vmem:[#allocation8 + $0xf0] sm:$0xf]
        %v2893 = vld [vmem:[#allocation8 + $0xf4] sm:$0xf]
        %v2894 = vld [vmem:[#allocation8 + $0xf8] sm:$0xf]
        %v2895 = vld [vmem:[#allocation8 + $0xfc] sm:$0xf]
        %v2896 = vld [vmem:[#allocation8 + $0x100] sm:$0xf]
        %v2897 = vld [vmem:[#allocation8 + $0x104] sm:$0xf]
        %v2898 = vld [vmem:[#allocation8 + $0x108] sm:$0xf]
        %v2899 = vld [vmem:[#allocation8 + $0x10c] sm:$0xf]
        %v2900 = vld [vmem:[#allocation8 + $0x110] sm:$0xf]
        %v2901 = vld [vmem:[#allocation8 + $0x114] sm:$0xf]
        %v2902 = vld [vmem:[#allocation8 + $0x118] sm:$0xf]
        %v2903 = vld [vmem:[#allocation8 + $0x11c] sm:$0xf]
        %v2904 = vld [vmem:[#allocation8 + $0x120] sm:$0xf]
        %v2905 = vld [vmem:[#allocation8 + $0x124] sm:$0xf]
        %v2906 = vld [vmem:[#allocation8 + $0x128] sm:$0xf]
        %v2907 = vld [vmem:[#allocation8 + $0x12c] sm:$0xf]
        %v2908 = vld [vmem:[#allocation8 + $0x130] sm:$0xf]
        %v2909 = vld [vmem:[#allocation8 + $0x134] sm:$0xf]
        %v2910 = vld [vmem:[#allocation8 + $0x138] sm:$0xf]
        %v2911 = vld [vmem:[#allocation8 + $0x13c] sm:$0xf]
        %v2912 = vld [vmem:[#allocation8 + $0x140] sm:$0xf]
        %v2913 = vld [vmem:[#allocation8 + $0x144] sm:$0xf]
        %v2914 = vld [vmem:[#allocation8 + $0x148] sm:$0xf]
        %v2915 = vld [vmem:[#allocation8 + $0x14c] sm:$0xf]
        %v2916 = vld [vmem:[#allocation8 + $0x150] sm:$0xf]
        %v2917 = vld [vmem:[#allocation8 + $0x154] sm:$0xf]
        %v2918 = vld [vmem:[#allocation8 + $0x158] sm:$0xf]
        %v2919 = vld [vmem:[#allocation8 + $0x15c] sm:$0xf]
        %v2920 = vld [vmem:[#allocation8 + $0x160] sm:$0xf]
        %v2921 = vld [vmem:[#allocation8 + $0x164] sm:$0xf]
        %v2922 = vld [vmem:[#allocation8 + $0x168] sm:$0xf]
        %v2923 = vld [vmem:[#allocation8 + $0x16c] sm:$0xf]
        %v2924 = vld [vmem:[#allocation8 + $0x170] sm:$0xf]
        %v2925 = vld [vmem:[#allocation8 + $0x174] sm:$0xf]
        %v2926 = vld [vmem:[#allocation8 + $0x178] sm:$0xf]
        %v2927 = vld [vmem:[#allocation8 + $0x17c] sm:$0xf]
        %v2928 = vld [vmem:[#allocation8 + $0x180] sm:$0xf]
        %v2929 = vld [vmem:[#allocation8 + $0x184] sm:$0xf]
        %v2930 = vld [vmem:[#allocation8 + $0x188] sm:$0xf]
        %v2931 = vld [vmem:[#allocation8 + $0x18c] sm:$0xf]
        %v2932 = vld [vmem:[#allocation8 + $0x190] sm:$0xf]
        %v2933 = vld [vmem:[#allocation8 + $0x194] sm:$0xf]
        %v2934 = vld [vmem:[#allocation8 + $0x198] sm:$0xf]
        %v2935 = vld [vmem:[#allocation8 + $0x19c] sm:$0xf]
        %v2936 = vld [vmem:[#allocation8 + $0x1a0] sm:$0xf]
        %v2937 = vld [vmem:[#allocation8 + $0x1a4] sm:$0xf]
        %v2938 = vld [vmem:[#allocation8 + $0x1a8] sm:$0xf]
        %v2939 = vld [vmem:[#allocation8 + $0x1ac] sm:$0xf]
        %v2940 = vld [vmem:[#allocation8 + $0x1b0] sm:$0xf]
        %v2941 = vld [vmem:[#allocation8 + $0x1b4] sm:$0xf]
        %v2942 = vld [vmem:[#allocation8 + $0x1b8] sm:$0xf]
        %v2943 = vld [vmem:[#allocation8 + $0x1bc] sm:$0xf]
        %v2944 = vld [vmem:[#allocation8 + $0x1c0] sm:$0xf]
        %v2945 = vld [vmem:[#allocation8 + $0x1c4] sm:$0xf]
        %v2946 = vld [vmem:[#allocation8 + $0x1c8] sm:$0xf]
        %v2947 = vld [vmem:[#allocation8 + $0x1cc] sm:$0xf]
        %v2948 = vld [vmem:[#allocation8 + $0x1d0] sm:$0xf]
        %v2949 = vld [vmem:[#allocation8 + $0x1d4] sm:$0xf]
        %v2950 = vld [vmem:[#allocation8 + $0x1d8] sm:$0xf]
        %v2951 = vld [vmem:[#allocation8 + $0x1dc] sm:$0xf]
        %v2952 = vld [vmem:[#allocation8 + $0x1e0] sm:$0xf]
        %v2953 = vld [vmem:[#allocation8 + $0x1e4] sm:$0xf]
        %v2954 = vld [vmem:[#allocation8 + $0x1e8] sm:$0xf]
        %v2955 = vld [vmem:[#allocation8 + $0x1ec] sm:$0xf]
        %v2956 = vld [vmem:[#allocation8 + $0x1f0] sm:$0xf]
        %v2957 = vld [vmem:[#allocation8 + $0x1f4] sm:$0xf]
        %v2958 = vld [vmem:[#allocation8 + $0x1f8] sm:$0xf]
        %v2959 = vld [vmem:[#allocation8 + $0x1fc] sm:$0xf]
        %v2960 = vld [vmem:[#allocation8 + $0x200] sm:$0xf]
        %v2961 = vld [vmem:[#allocation8 + $0x204] sm:$0xf]
        %v2962 = vld [vmem:[#allocation8 + $0x208] sm:$0xf]
        %v2963 = vld [vmem:[#allocation8 + $0x20c] sm:$0xf]
        %v2964 = vld [vmem:[#allocation8 + $0x210] sm:$0xf]
        %v2965 = vld [vmem:[#allocation8 + $0x214] sm:$0xf]
        %v2966 = vld [vmem:[#allocation8 + $0x218] sm:$0xf]
        %v2967 = vld [vmem:[#allocation8 + $0x21c] sm:$0xf]
        %v2968 = vld [vmem:[#allocation8 + $0x220] sm:$0xf]
        %v2969 = vld [vmem:[#allocation8 + $0x224] sm:$0xf]
        %v2970 = vld [vmem:[#allocation8 + $0x228] sm:$0xf]
        %v2971 = vld [vmem:[#allocation8 + $0x22c] sm:$0xf]
        %v2972 = vld [vmem:[#allocation8 + $0x230] sm:$0xf]
        %v2973 = vld [vmem:[#allocation8 + $0x234] sm:$0xf]
        %v2974 = vld [vmem:[#allocation8 + $0x238] sm:$0xf]
        %v2975 = vld [vmem:[#allocation8 + $0x23c] sm:$0xf]
        %v2976 = vld [vmem:[%s4] sm:$0x1]
        %v2978 = vlaneseq
        %v2979 = vshrl.u32 %v2978, 7
        %v2980 = vsub.s32 0, %v2979
        %v2981 = vrot.slane %v2976, %v2980
        %v3127 = vunpack.c.l.b16 %v2832
        %v3128 = vunpack.c.l.b16 %v2833
        %v3129 = vunpack.c.l.b16 %v2834
        %v3130 = vunpack.c.l.b16 %v2835
        %v3131 = vunpack.c.l.b16 %v2836
        %v3132 = vunpack.c.l.b16 %v2837
        %v3133 = vunpack.c.l.b16 %v2838
        %v3134 = vunpack.c.l.b16 %v2839
        %v3135 = vunpack.c.l.b16 %v2840
        %v3136 = vunpack.c.l.b16 %v2841
        %v3137 = vunpack.c.l.b16 %v2842
        %v3138 = vunpack.c.l.b16 %v2843
        %v3139 = vunpack.c.l.b16 %v2844
        %v3140 = vunpack.c.l.b16 %v2845
        %v3141 = vunpack.c.l.b16 %v2846
        %v3142 = vunpack.c.l.b16 %v2847
        %v3143 = vunpack.c.l.b16 %v2848
        %v3144 = vunpack.c.l.b16 %v2849
        %v3145 = vunpack.c.l.b16 %v2850
        %v3146 = vunpack.c.l.b16 %v2851
        %v3147 = vunpack.c.l.b16 %v2852
        %v3148 = vunpack.c.l.b16 %v2853
        %v3149 = vunpack.c.l.b16 %v2854
        %v3150 = vunpack.c.l.b16 %v2855
        %v3151 = vunpack.c.l.b16 %v2856
        %v3152 = vunpack.c.l.b16 %v2857
        %v3153 = vunpack.c.l.b16 %v2858
        %v3154 = vunpack.c.l.b16 %v2859
        %v3155 = vunpack.c.l.b16 %v2860
        %v3156 = vunpack.c.l.b16 %v2861
        %v3157 = vunpack.c.l.b16 %v2862
        %v3158 = vunpack.c.l.b16 %v2863
        %v3159 = vunpack.c.l.b16 %v2864
        %v3160 = vunpack.c.l.b16 %v2865
        %v3161 = vunpack.c.l.b16 %v2866
        %v3162 = vunpack.c.l.b16 %v2867
        %v3163 = vunpack.c.l.b16 %v2868
        %v3164 = vunpack.c.l.b16 %v2869
        %v3165 = vunpack.c.l.b16 %v2870
        %v3166 = vunpack.c.l.b16 %v2871
        %v3167 = vunpack.c.l.b16 %v2872
        %v3168 = vunpack.c.l.b16 %v2873
        %v3169 = vunpack.c.l.b16 %v2874
        %v3170 = vunpack.c.l.b16 %v2875
        %v3171 = vunpack.c.l.b16 %v2876
        %v3172 = vunpack.c.l.b16 %v2877
        %v3173 = vunpack.c.l.b16 %v2878
        %v3174 = vunpack.c.l.b16 %v2879
        %v3175 = vunpack.c.l.b16 %v2880
        %v3176 = vunpack.c.l.b16 %v2881
        %v3177 = vunpack.c.l.b16 %v2882
        %v3178 = vunpack.c.l.b16 %v2883
        %v3179 = vunpack.c.l.b16 %v2884
        %v3180 = vunpack.c.l.b16 %v2885
        %v3181 = vunpack.c.l.b16 %v2886
        %v3182 = vunpack.c.l.b16 %v2887
        %v3183 = vunpack.c.l.b16 %v2888
        %v3184 = vunpack.c.l.b16 %v2889
        %v3185 = vunpack.c.l.b16 %v2890
        %v3186 = vunpack.c.l.b16 %v2891
        %v3187 = vunpack.c.l.b16 %v2892
        %v3188 = vunpack.c.l.b16 %v2893
        %v3189 = vunpack.c.l.b16 %v2894
        %v3190 = vunpack.c.l.b16 %v2895
        %v3191 = vunpack.c.l.b16 %v2896
        %v3192 = vunpack.c.l.b16 %v2897
        %v3193 = vunpack.c.l.b16 %v2898
        %v3194 = vunpack.c.l.b16 %v2899
        %v3195 = vunpack.c.l.b16 %v2900
        %v3196 = vunpack.c.l.b16 %v2901
        %v3197 = vunpack.c.l.b16 %v2902
        %v3198 = vunpack.c.l.b16 %v2903
        %v3199 = vunpack.c.l.b16 %v2904
        %v3200 = vunpack.c.l.b16 %v2905
        %v3201 = vunpack.c.l.b16 %v2906
        %v3202 = vunpack.c.l.b16 %v2907
        %v3203 = vunpack.c.l.b16 %v2908
        %v3204 = vunpack.c.l.b16 %v2909
        %v3205 = vunpack.c.l.b16 %v2910
        %v3206 = vunpack.c.l.b16 %v2911
        %v3207 = vunpack.c.l.b16 %v2912
        %v3208 = vunpack.c.l.b16 %v2913
        %v3209 = vunpack.c.l.b16 %v2914
        %v3210 = vunpack.c.l.b16 %v2915
        %v3211 = vunpack.c.l.b16 %v2916
        %v3212 = vunpack.c.l.b16 %v2917
        %v3213 = vunpack.c.l.b16 %v2918
        %v3214 = vunpack.c.l.b16 %v2919
        %v3215 = vunpack.c.l.b16 %v2920
        %v3216 = vunpack.c.l.b16 %v2921
        %v3217 = vunpack.c.l.b16 %v2922
        %v3218 = vunpack.c.l.b16 %v2923
        %v3219 = vunpack.c.l.b16 %v2924
        %v3220 = vunpack.c.l.b16 %v2925
        %v3221 = vunpack.c.l.b16 %v2926
        %v3222 = vunpack.c.l.b16 %v2927
        %v3223 = vunpack.c.l.b16 %v2928
        %v3224 = vunpack.c.l.b16 %v2929
        %v3225 = vunpack.c.l.b16 %v2930
        %v3226 = vunpack.c.l.b16 %v2931
        %v3227 = vunpack.c.l.b16 %v2932
        %v3228 = vunpack.c.l.b16 %v2933
        %v3229 = vunpack.c.l.b16 %v2934
        %v3230 = vunpack.c.l.b16 %v2935
        %v3231 = vunpack.c.l.b16 %v2936
        %v3232 = vunpack.c.l.b16 %v2937
        %v3233 = vunpack.c.l.b16 %v2938
        %v3234 = vunpack.c.l.b16 %v2939
        %v3235 = vunpack.c.l.b16 %v2940
        %v3236 = vunpack.c.l.b16 %v2941
        %v3237 = vunpack.c.l.b16 %v2942
        %v3238 = vunpack.c.l.b16 %v2943
        %v3239 = vunpack.c.l.b16 %v2944
        %v3240 = vunpack.c.l.b16 %v2945
        %v3241 = vunpack.c.l.b16 %v2946
        %v3242 = vunpack.c.l.b16 %v2947
        %v3243 = vunpack.c.l.b16 %v2948
        %v3244 = vunpack.c.l.b16 %v2949
        %v3245 = vunpack.c.l.b16 %v2950
        %v3246 = vunpack.c.l.b16 %v2951
        %v3247 = vunpack.c.l.b16 %v2952
        %v3248 = vunpack.c.l.b16 %v2953
        %v3249 = vunpack.c.l.b16 %v2954
        %v3250 = vunpack.c.l.b16 %v2955
        %v3251 = vunpack.c.l.b16 %v2956
        %v3252 = vunpack.c.l.b16 %v2957
        %v3253 = vunpack.c.l.b16 %v2958
        %v3254 = vunpack.c.l.b16 %v2959
        %v3255 = vunpack.c.l.b16 %v2960
        %v3256 = vunpack.c.l.b16 %v2961
        %v3257 = vunpack.c.l.b16 %v2962
        %v3258 = vunpack.c.l.b16 %v2963
        %v3259 = vunpack.c.l.b16 %v2964
        %v3260 = vunpack.c.l.b16 %v2965
        %v3261 = vunpack.c.l.b16 %v2966
        %v3262 = vunpack.c.l.b16 %v2967
        %v3263 = vunpack.c.l.b16 %v2968
        %v3264 = vunpack.c.l.b16 %v2969
        %v3265 = vunpack.c.l.b16 %v2970
        %v3266 = vunpack.c.l.b16 %v2971
        %v3267 = vunpack.c.l.b16 %v2972
        %v3268 = vunpack.c.l.b16 %v2973
        %v3269 = vunpack.c.l.b16 %v2974
        %v3270 = vunpack.c.l.b16 %v2975
        %v3271 = vpack.c.b16 %v3128, %v3127
        %v3272 = vpack.c.b16 %v3130, %v3129
        %v3273 = vpack.c.b16 %v3132, %v3131
        %v3274 = vpack.c.b16 %v3134, %v3133
        %v3275 = vpack.c.b16 %v3136, %v3135
        %v3276 = vpack.c.b16 %v3138, %v3137
        %v3277 = vpack.c.b16 %v3140, %v3139
        %v3278 = vpack.c.b16 %v3142, %v3141
        %v3279 = vpack.c.b16 %v3144, %v3143
        %v3280 = vpack.c.b16 %v3146, %v3145
        %v3281 = vpack.c.b16 %v3148, %v3147
        %v3282 = vpack.c.b16 %v3150, %v3149
        %v3283 = vpack.c.b16 %v3152, %v3151
        %v3284 = vpack.c.b16 %v3154, %v3153
        %v3285 = vpack.c.b16 %v3156, %v3155
        %v3286 = vpack.c.b16 %v3158, %v3157
        %v3287 = vpack.c.b16 %v3160, %v3159
        %v3288 = vpack.c.b16 %v3162, %v3161
        %v3289 = vpack.c.b16 %v3164, %v3163
        %v3290 = vpack.c.b16 %v3166, %v3165
        %v3291 = vpack.c.b16 %v3168, %v3167
        %v3292 = vpack.c.b16 %v3170, %v3169
        %v3293 = vpack.c.b16 %v3172, %v3171
        %v3294 = vpack.c.b16 %v3174, %v3173
        %v3295 = vpack.c.b16 %v3176, %v3175
        %v3296 = vpack.c.b16 %v3178, %v3177
        %v3297 = vpack.c.b16 %v3180, %v3179
        %v3298 = vpack.c.b16 %v3182, %v3181
        %v3299 = vpack.c.b16 %v3184, %v3183
        %v3300 = vpack.c.b16 %v3186, %v3185
        %v3301 = vpack.c.b16 %v3188, %v3187
        %v3302 = vpack.c.b16 %v3190, %v3189
        %v3303 = vpack.c.b16 %v3192, %v3191
        %v3304 = vpack.c.b16 %v3194, %v3193
        %v3305 = vpack.c.b16 %v3196, %v3195
        %v3306 = vpack.c.b16 %v3198, %v3197
        %v3307 = vpack.c.b16 %v3200, %v3199
        %v3308 = vpack.c.b16 %v3202, %v3201
        %v3309 = vpack.c.b16 %v3204, %v3203
        %v3310 = vpack.c.b16 %v3206, %v3205
        %v3311 = vpack.c.b16 %v3208, %v3207
        %v3312 = vpack.c.b16 %v3210, %v3209
        %v3313 = vpack.c.b16 %v3212, %v3211
        %v3314 = vpack.c.b16 %v3214, %v3213
        %v3315 = vpack.c.b16 %v3216, %v3215
        %v3316 = vpack.c.b16 %v3218, %v3217
        %v3317 = vpack.c.b16 %v3220, %v3219
        %v3318 = vpack.c.b16 %v3222, %v3221
        %v3319 = vpack.c.b16 %v3224, %v3223
        %v3320 = vpack.c.b16 %v3226, %v3225
        %v3321 = vpack.c.b16 %v3228, %v3227
        %v3322 = vpack.c.b16 %v3230, %v3229
        %v3323 = vpack.c.b16 %v3232, %v3231
        %v3324 = vpack.c.b16 %v3234, %v3233
        %v3325 = vpack.c.b16 %v3236, %v3235
        %v3326 = vpack.c.b16 %v3238, %v3237
        %v3327 = vpack.c.b16 %v3240, %v3239
        %v3328 = vpack.c.b16 %v3242, %v3241
        %v3329 = vpack.c.b16 %v3244, %v3243
        %v3330 = vpack.c.b16 %v3246, %v3245
        %v3331 = vpack.c.b16 %v3248, %v3247
        %v3332 = vpack.c.b16 %v3250, %v3249
        %v3333 = vpack.c.b16 %v3252, %v3251
        %v3334 = vpack.c.b16 %v3254, %v3253
        %v3335 = vpack.c.b16 %v3256, %v3255
        %v3336 = vpack.c.b16 %v3258, %v3257
        %v3337 = vpack.c.b16 %v3260, %v3259
        %v3338 = vpack.c.b16 %v3262, %v3261
        %v3339 = vpack.c.b16 %v3264, %v3263
        %v3340 = vpack.c.b16 %v3266, %v3265
        %v3341 = vpack.c.b16 %v3268, %v3267
        %v3342 = vpack.c.b16 %v3270, %v3269
        %3415 = vmatprep.subr.bf16.mxu0 0
        %3416 = vmatpush1.bf16.msra.mxu0 %v3278
        %3417 = vmatprep.subr.bf16.mxu0 0
        %3418 = vmatpush1.bf16.msra.mxu0 %v3277
        %3419 = vmatprep.subr.bf16.mxu0 0
        %3420 = vmatpush1.bf16.msra.mxu0 %v3276
        %3421 = vmatprep.subr.bf16.mxu0 0
        %3422 = vmatpush1.bf16.msra.mxu0 %v3275
        %3423 = vmatprep.subr.bf16.mxu0 0
        %3424 = vmatpush1.bf16.msra.mxu0 %v3274
        %3425 = vmatprep.subr.bf16.mxu0 0
        %3426 = vmatpush1.bf16.msra.mxu0 %v3273
        %3427 = vmatprep.subr.bf16.mxu0 0
        %3428 = vmatpush1.bf16.msra.mxu0 %v3272
        %3429 = vmatprep.subr.bf16.mxu0 0
        %3430 = vmatpush1.bf16.msra.mxu0 %v3271
        %3431 = vmatprep.subr.bf16.mxu0 0
        %3432 = vmatpush2.bf16.msra.mxu0 %v3286
        %3433 = vmatprep.subr.bf16.mxu0 0
        %3434 = vmatpush2.bf16.msra.mxu0 %v3285
        %3435 = vmatprep.subr.bf16.mxu0 0
        %3436 = vmatpush2.bf16.msra.mxu0 %v3284
        %3437 = vmatprep.subr.bf16.mxu0 0
        %3438 = vmatpush2.bf16.msra.mxu0 %v3283
        %3439 = vmatprep.subr.bf16.mxu0 0
        %3440 = vmatpush2.bf16.msra.mxu0 %v3282
        %3441 = vmatprep.subr.bf16.mxu0 0
        %3442 = vmatpush2.bf16.msra.mxu0 %v3281
        %3443 = vmatprep.subr.bf16.mxu0 0
        %3444 = vmatpush2.bf16.msra.mxu0 %v3280
        %3445 = vmatprep.subr.bf16.mxu0 0
        %3446 = vmatpush2.bf16.msra.mxu0 %v3279
        %3447 = vmatprep.mubr.bf16.mxu0 %v1594
        %3448 = vmatmul.mubr.bf16.gmra.mxu0 %v1502
        %v3449 = vpop.f32.mrf.mxu0
        %v3450 = vadd.f32 %v2981, %v3449
        %v3451 = vpop.f32.mrf.mxu0
        %v3452 = vpop.f32.mrf.mxu0
        %v3453 = vadd.f32 %v2981, %v3452
        %v3454 = vpop.f32.mrf.mxu0
        %3455 = vmatprep.mubr.bf16.mxu0 %v1606
        %3456 = vmatmul.mubr.bf16.gmra.mxu0 %v1503
        %v3457 = vpop.f32.mrf.mxu0
        %v3458 = vadd.f32 %v2981, %v3457
        %v3459 = vpop.f32.mrf.mxu0
        %v3460 = vpop.f32.mrf.mxu0
        %v3461 = vadd.f32 %v2981, %v3460
        %v3462 = vpop.f32.mrf.mxu0
        %3463 = vmatprep.mubr.bf16.mxu0 %v1618
        %3464 = vmatmul.mubr.bf16.gmra.mxu0 %v1504
        %v3465 = vpop.f32.mrf.mxu0
        %v3466 = vadd.f32 %v2981, %v3465
        %v3467 = vpop.f32.mrf.mxu0
        %v3468 = vpop.f32.mrf.mxu0
        %v3469 = vadd.f32 %v2981, %v3468
        %v3470 = vpop.f32.mrf.mxu0
        %3471 = vmatprep.mubr.bf16.mxu0 %v1630
        %3472 = vmatmul.mubr.bf16.gmra.mxu0 %v1505
        %v3473 = vpop.f32.mrf.mxu0
        %v3474 = vadd.f32 %v2981, %v3473
        %v3475 = vpop.f32.mrf.mxu0
        %v3476 = vpop.f32.mrf.mxu0
        %v3477 = vadd.f32 %v2981, %v3476
        %v3478 = vpop.f32.mrf.mxu0
        %3479 = vmatprep.mubr.bf16.mxu0 %v1642
        %3480 = vmatmul.mubr.bf16.gmra.mxu0 %v1506
        %v3481 = vpop.f32.mrf.mxu0
        %v3482 = vadd.f32 %v2981, %v3481
        %v3483 = vpop.f32.mrf.mxu0
        %v3484 = vpop.f32.mrf.mxu0
        %v3485 = vadd.f32 %v2981, %v3484
        %v3486 = vpop.f32.mrf.mxu0
        %3487 = vmatprep.mubr.bf16.mxu0 %v1654
        %3488 = vmatmul.mubr.bf16.gmra.mxu0 %v1507
        %v3489 = vpop.f32.mrf.mxu0
        %v3490 = vadd.f32 %v2981, %v3489
        %v3491 = vpop.f32.mrf.mxu0
        %v3492 = vpop.f32.mrf.mxu0
        %v3493 = vadd.f32 %v2981, %v3492
        %v3494 = vpop.f32.mrf.mxu0
        %3495 = vmatprep.mubr.bf16.mxu0 %v1666
        %3496 = vmatmul.mubr.bf16.gmra.mxu0 %v1508
        %v3497 = vpop.f32.mrf.mxu0
        %v3498 = vadd.f32 %v2981, %v3497
        %v3499 = vpop.f32.mrf.mxu0
        %v3500 = vpop.f32.mrf.mxu0
        %v3501 = vadd.f32 %v2981, %v3500
        %v3502 = vpop.f32.mrf.mxu0
        %3503 = vmatprep.mubr.bf16.mxu0 %v1678
        %3504 = vmatmul.mubr.bf16.gmra.mxu0 %v1509
        %v3505 = vpop.f32.mrf.mxu0
        %v3506 = vadd.f32 %v2981, %v3505
        %v3507 = vpop.f32.mrf.mxu0
        %v3508 = vpop.f32.mrf.mxu0
        %v3509 = vadd.f32 %v2981, %v3508
        %v3510 = vpop.f32.mrf.mxu0
        %3511 = vmatprep.mubr.bf16.mxu0 %v1690
        %3512 = vmatmul.mubr.bf16.gmra.mxu0 %v1510
        %v3513 = vpop.f32.mrf.mxu0
        %v3514 = vadd.f32 %v2981, %v3513
        %v3515 = vpop.f32.mrf.mxu0
        %v3516 = vpop.f32.mrf.mxu0
        %v3517 = vadd.f32 %v2981, %v3516
        %v3518 = vpop.f32.mrf.mxu0
        %3519 = vmatprep.mubr.bf16.mxu0 %v1702
        %3520 = vmatmul.mubr.bf16.gmra.mxu0 %v1511
        %v3521 = vpop.f32.mrf.mxu0
        %v3522 = vadd.f32 %v2981, %v3521
        %v3523 = vpop.f32.mrf.mxu0
        %v3524 = vpop.f32.mrf.mxu0
        %v3525 = vadd.f32 %v2981, %v3524
        %v3526 = vpop.f32.mrf.mxu0
        %3527 = vmatprep.mubr.bf16.mxu0 %v1714
        %3528 = vmatmul.mubr.bf16.gmra.mxu0 %v1512
        %v3529 = vpop.f32.mrf.mxu0
        %v3530 = vadd.f32 %v2981, %v3529
        %v3531 = vpop.f32.mrf.mxu0
        %v3532 = vpop.f32.mrf.mxu0
        %v3533 = vadd.f32 %v2981, %v3532
        %v3534 = vpop.f32.mrf.mxu0
        %3535 = vmatprep.mubr.bf16.mxu0 %v1726
        %3536 = vmatmul.mubr.bf16.gmra.mxu0 %v1513
        %v3537 = vpop.f32.mrf.mxu0
        %v3538 = vadd.f32 %v2981, %v3537
        %v3539 = vpop.f32.mrf.mxu0
        %v3540 = vpop.f32.mrf.mxu0
        %v3541 = vadd.f32 %v2981, %v3540
        %v3542 = vpop.f32.mrf.mxu0
        %3543 = vmatprep.mubr.bf16.mxu0 %v1738
        %3544 = vmatmul.mubr.bf16.gmra.mxu0 %v1514
        %v3545 = vpop.f32.mrf.mxu0
        %v3546 = vadd.f32 %v2981, %v3545
        %v3547 = vpop.f32.mrf.mxu0
        %v3548 = vpop.f32.mrf.mxu0
        %v3549 = vadd.f32 %v2981, %v3548
        %v3550 = vpop.f32.mrf.mxu0
        %3551 = vmatprep.mubr.bf16.mxu0 %v1750
        %3552 = vmatmul.mubr.bf16.gmra.mxu0 %v1515
        %v3553 = vpop.f32.mrf.mxu0
        %v3554 = vadd.f32 %v2981, %v3553
        %v3555 = vpop.f32.mrf.mxu0
        %v3556 = vpop.f32.mrf.mxu0
        %v3557 = vadd.f32 %v2981, %v3556
        %v3558 = vpop.f32.mrf.mxu0
        %3559 = vmatprep.mubr.bf16.mxu0 %v1762
        %3560 = vmatmul.mubr.bf16.gmra.mxu0 %v1516
        %v3561 = vpop.f32.mrf.mxu0
        %v3562 = vadd.f32 %v2981, %v3561
        %v3563 = vpop.f32.mrf.mxu0
        %v3564 = vpop.f32.mrf.mxu0
        %v3565 = vadd.f32 %v2981, %v3564
        %v3566 = vpop.f32.mrf.mxu0
        %3567 = vmatprep.mubr.bf16.mxu0 %v1774
        %3568 = vmatmul.mubr.bf16.gmra.mxu0 %v1517
        %v3569 = vpop.f32.mrf.mxu0
        %v3570 = vadd.f32 %v2981, %v3569
        %v3571 = vpop.f32.mrf.mxu0
        %v3572 = vpop.f32.mrf.mxu0
        %v3573 = vadd.f32 %v2981, %v3572
        %v3574 = vpop.f32.mrf.mxu0
        %3575 = vdwg.mxu0
        %3576 = vmatprep.subr.bf16.mxu0 0
        %3577 = vmatpush1.bf16.msra.mxu0 %v3294
        %3578 = vmatprep.subr.bf16.mxu0 0
        %3579 = vmatpush1.bf16.msra.mxu0 %v3293
        %3580 = vmatprep.subr.bf16.mxu0 0
        %3581 = vmatpush1.bf16.msra.mxu0 %v3292
        %3582 = vmatprep.subr.bf16.mxu0 0
        %3583 = vmatpush1.bf16.msra.mxu0 %v3291
        %3584 = vmatprep.subr.bf16.mxu0 0
        %3585 = vmatpush1.bf16.msra.mxu0 %v3290
        %3586 = vmatprep.subr.bf16.mxu0 0
        %3587 = vmatpush1.bf16.msra.mxu0 %v3289
        %3588 = vmatprep.subr.bf16.mxu0 0
        %3589 = vmatpush1.bf16.msra.mxu0 %v3288
        %3590 = vmatprep.subr.bf16.mxu0 0
        %3591 = vmatpush1.bf16.msra.mxu0 %v3287
        %3592 = vmatprep.subr.bf16.mxu0 0
        %3593 = vmatpush2.bf16.msra.mxu0 %v3302
        %3594 = vmatprep.subr.bf16.mxu0 0
        %3595 = vmatpush2.bf16.msra.mxu0 %v3301
        %3596 = vmatprep.subr.bf16.mxu0 0
        %3597 = vmatpush2.bf16.msra.mxu0 %v3300
        %3598 = vmatprep.subr.bf16.mxu0 0
        %3599 = vmatpush2.bf16.msra.mxu0 %v3299
        %3600 = vmatprep.subr.bf16.mxu0 0
        %3601 = vmatpush2.bf16.msra.mxu0 %v3298
        %3602 = vmatprep.subr.bf16.mxu0 0
        %3603 = vmatpush2.bf16.msra.mxu0 %v3297
        %3604 = vmatprep.subr.bf16.mxu0 0
        %3605 = vmatpush2.bf16.msra.mxu0 %v3296
        %3606 = vmatprep.subr.bf16.mxu0 0
        %3607 = vmatpush2.bf16.msra.mxu0 %v3295
        %3608 = vmatprep.mubr.bf16.mxu0 %v1968
        %3609 = vmatmul.mubr.bf16.gmra.mxu0 %v1842
        %v3610 = vpop.f32.mrf.mxu0
        %v3611 = vadd.f32 %v3450, %v3610
        %v3612 = vpop.f32.mrf.mxu0
        %v3613 = vpop.f32.mrf.mxu0
        %v3614 = vadd.f32 %v3453, %v3613
        %v3615 = vpop.f32.mrf.mxu0
        %3616 = vmatprep.mubr.bf16.mxu0 %v1969
        %3617 = vmatmul.mubr.bf16.gmra.mxu0 %v1845
        %v3618 = vpop.f32.mrf.mxu0
        %v3619 = vadd.f32 %v3458, %v3618
        %v3620 = vpop.f32.mrf.mxu0
        %v3621 = vpop.f32.mrf.mxu0
        %v3622 = vadd.f32 %v3461, %v3621
        %v3623 = vpop.f32.mrf.mxu0
        %3624 = vmatprep.mubr.bf16.mxu0 %v1970
        %3625 = vmatmul.mubr.bf16.gmra.mxu0 %v1848
        %v3626 = vpop.f32.mrf.mxu0
        %v3627 = vadd.f32 %v3466, %v3626
        %v3628 = vpop.f32.mrf.mxu0
        %v3629 = vpop.f32.mrf.mxu0
        %v3630 = vadd.f32 %v3469, %v3629
        %v3631 = vpop.f32.mrf.mxu0
        %3632 = vmatprep.mubr.bf16.mxu0 %v1971
        %3633 = vmatmul.mubr.bf16.gmra.mxu0 %v1851
        %v3634 = vpop.f32.mrf.mxu0
        %v3635 = vadd.f32 %v3474, %v3634
        %v3636 = vpop.f32.mrf.mxu0
        %v3637 = vpop.f32.mrf.mxu0
        %v3638 = vadd.f32 %v3477, %v3637
        %v3639 = vpop.f32.mrf.mxu0
        %3640 = vmatprep.mubr.bf16.mxu0 %v1972
        %3641 = vmatmul.mubr.bf16.gmra.mxu0 %v1854
        %v3642 = vpop.f32.mrf.mxu0
        %v3643 = vadd.f32 %v3482, %v3642
        %v3644 = vpop.f32.mrf.mxu0
        %v3645 = vpop.f32.mrf.mxu0
        %v3646 = vadd.f32 %v3485, %v3645
        %v3647 = vpop.f32.mrf.mxu0
        %3648 = vmatprep.mubr.bf16.mxu0 %v1973
        %3649 = vmatmul.mubr.bf16.gmra.mxu0 %v1857
        %v3650 = vpop.f32.mrf.mxu0
        %v3651 = vadd.f32 %v3490, %v3650
        %v3652 = vpop.f32.mrf.mxu0
        %v3653 = vpop.f32.mrf.mxu0
        %v3654 = vadd.f32 %v3493, %v3653
        %v3655 = vpop.f32.mrf.mxu0
        %3656 = vmatprep.mubr.bf16.mxu0 %v1974
        %3657 = vmatmul.mubr.bf16.gmra.mxu0 %v1860
        %v3658 = vpop.f32.mrf.mxu0
        %v3659 = vadd.f32 %v3498, %v3658
        %v3660 = vpop.f32.mrf.mxu0
        %v3661 = vpop.f32.mrf.mxu0
        %v3662 = vadd.f32 %v3501, %v3661
        %v3663 = vpop.f32.mrf.mxu0
        %3664 = vmatprep.mubr.bf16.mxu0 %v1975
        %3665 = vmatmul.mubr.bf16.gmra.mxu0 %v1863
        %v3666 = vpop.f32.mrf.mxu0
        %v3667 = vadd.f32 %v3506, %v3666
        %v3668 = vpop.f32.mrf.mxu0
        %v3669 = vpop.f32.mrf.mxu0
        %v3670 = vadd.f32 %v3509, %v3669
        %v3671 = vpop.f32.mrf.mxu0
        %3672 = vmatprep.mubr.bf16.mxu0 %v1976
        %3673 = vmatmul.mubr.bf16.gmra.mxu0 %v1866
        %v3674 = vpop.f32.mrf.mxu0
        %v3675 = vadd.f32 %v3514, %v3674
        %v3676 = vpop.f32.mrf.mxu0
        %v3677 = vpop.f32.mrf.mxu0
        %v3678 = vadd.f32 %v3517, %v3677
        %v3679 = vpop.f32.mrf.mxu0
        %3680 = vmatprep.mubr.bf16.mxu0 %v1977
        %3681 = vmatmul.mubr.bf16.gmra.mxu0 %v1869
        %v3682 = vpop.f32.mrf.mxu0
        %v3683 = vadd.f32 %v3522, %v3682
        %v3684 = vpop.f32.mrf.mxu0
        %v3685 = vpop.f32.mrf.mxu0
        %v3686 = vadd.f32 %v3525, %v3685
        %v3687 = vpop.f32.mrf.mxu0
        %3688 = vmatprep.mubr.bf16.mxu0 %v1978
        %3689 = vmatmul.mubr.bf16.gmra.mxu0 %v1872
        %v3690 = vpop.f32.mrf.mxu0
        %v3691 = vadd.f32 %v3530, %v3690
        %v3692 = vpop.f32.mrf.mxu0
        %v3693 = vpop.f32.mrf.mxu0
        %v3694 = vadd.f32 %v3533, %v3693
        %v3695 = vpop.f32.mrf.mxu0
        %3696 = vmatprep.mubr.bf16.mxu0 %v1979
        %3697 = vmatmul.mubr.bf16.gmra.mxu0 %v1875
        %v3698 = vpop.f32.mrf.mxu0
        %v3699 = vadd.f32 %v3538, %v3698
        %v3700 = vpop.f32.mrf.mxu0
        %v3701 = vpop.f32.mrf.mxu0
        %v3702 = vadd.f32 %v3541, %v3701
        %v3703 = vpop.f32.mrf.mxu0
        %3704 = vmatprep.mubr.bf16.mxu0 %v1980
        %3705 = vmatmul.mubr.bf16.gmra.mxu0 %v1878
        %v3706 = vpop.f32.mrf.mxu0
        %v3707 = vadd.f32 %v3546, %v3706
        %v3708 = vpop.f32.mrf.mxu0
        %v3709 = vpop.f32.mrf.mxu0
        %v3710 = vadd.f32 %v3549, %v3709
        %v3711 = vpop.f32.mrf.mxu0
        %3712 = vmatprep.mubr.bf16.mxu0 %v1981
        %3713 = vmatmul.mubr.bf16.gmra.mxu0 %v1881
        %v3714 = vpop.f32.mrf.mxu0
        %v3715 = vadd.f32 %v3554, %v3714
        %v3716 = vpop.f32.mrf.mxu0
        %v3717 = vpop.f32.mrf.mxu0
        %v3718 = vadd.f32 %v3557, %v3717
        %v3719 = vpop.f32.mrf.mxu0
        %3720 = vmatprep.mubr.bf16.mxu0 %v1982
        %3721 = vmatmul.mubr.bf16.gmra.mxu0 %v1884
        %v3722 = vpop.f32.mrf.mxu0
        %v3723 = vadd.f32 %v3562, %v3722
        %v3724 = vpop.f32.mrf.mxu0
        %v3725 = vpop.f32.mrf.mxu0
        %v3726 = vadd.f32 %v3565, %v3725
        %v3727 = vpop.f32.mrf.mxu0
        %3728 = vmatprep.mubr.bf16.mxu0 %v1983
        %3729 = vmatmul.mubr.bf16.gmra.mxu0 %v1887
        %v3730 = vpop.f32.mrf.mxu0
        %v3731 = vadd.f32 %v3570, %v3730
        %v3732 = vpop.f32.mrf.mxu0
        %v3733 = vpop.f32.mrf.mxu0
        %v3734 = vadd.f32 %v3573, %v3733
        %v3735 = vpop.f32.mrf.mxu0
        %3736 = vdwg.mxu0
        %3737 = vmatprep.subr.bf16.mxu0 0
        %3738 = vmatpush1.bf16.msra.mxu0 %v3310
        %3739 = vmatprep.subr.bf16.mxu0 0
        %3740 = vmatpush1.bf16.msra.mxu0 %v3309
        %3741 = vmatprep.subr.bf16.mxu0 0
        %3742 = vmatpush1.bf16.msra.mxu0 %v3308
        %3743 = vmatprep.subr.bf16.mxu0 0
        %3744 = vmatpush1.bf16.msra.mxu0 %v3307
        %3745 = vmatprep.subr.bf16.mxu0 0
        %3746 = vmatpush1.bf16.msra.mxu0 %v3306
        %3747 = vmatprep.subr.bf16.mxu0 0
        %3748 = vmatpush1.bf16.msra.mxu0 %v3305
        %3749 = vmatprep.subr.bf16.mxu0 0
        %3750 = vmatpush1.bf16.msra.mxu0 %v3304
        %3751 = vmatprep.subr.bf16.mxu0 0
        %3752 = vmatpush1.bf16.msra.mxu0 %v3303
        %3753 = vmatprep.subr.bf16.mxu0 0
        %3754 = vmatpush2.bf16.msra.mxu0 %v3318
        %3755 = vmatprep.subr.bf16.mxu0 0
        %3756 = vmatpush2.bf16.msra.mxu0 %v3317
        %3757 = vmatprep.subr.bf16.mxu0 0
        %3758 = vmatpush2.bf16.msra.mxu0 %v3316
        %3759 = vmatprep.subr.bf16.mxu0 0
        %3760 = vmatpush2.bf16.msra.mxu0 %v3315
        %3761 = vmatprep.subr.bf16.mxu0 0
        %3762 = vmatpush2.bf16.msra.mxu0 %v3314
        %3763 = vmatprep.subr.bf16.mxu0 0
        %3764 = vmatpush2.bf16.msra.mxu0 %v3313
        %3765 = vmatprep.subr.bf16.mxu0 0
        %3766 = vmatpush2.bf16.msra.mxu0 %v3312
        %3767 = vmatprep.subr.bf16.mxu0 0
        %3768 = vmatpush2.bf16.msra.mxu0 %v3311
        %3769 = vmatprep.mubr.bf16.mxu0 %v2306
        %3770 = vmatmul.mubr.bf16.gmra.mxu0 %v2059
        %v3771 = vpop.f32.mrf.mxu0
        %v3772 = vadd.f32 %v3611, %v3771
        %v3773 = vpop.f32.mrf.mxu0
        %v3774 = vpop.f32.mrf.mxu0
        %v3775 = vadd.f32 %v3614, %v3774
        %v3776 = vpop.f32.mrf.mxu0
        %3777 = vmatprep.mubr.bf16.mxu0 %v2309
        %3778 = vmatmul.mubr.bf16.gmra.mxu0 %v2071
        %v3779 = vpop.f32.mrf.mxu0
        %v3780 = vadd.f32 %v3619, %v3779
        %v3781 = vpop.f32.mrf.mxu0
        %v3782 = vpop.f32.mrf.mxu0
        %v3783 = vadd.f32 %v3622, %v3782
        %v3784 = vpop.f32.mrf.mxu0
        %3785 = vmatprep.mubr.bf16.mxu0 %v2312
        %3786 = vmatmul.mubr.bf16.gmra.mxu0 %v2083
        %v3787 = vpop.f32.mrf.mxu0
        %v3788 = vadd.f32 %v3627, %v3787
        %v3789 = vpop.f32.mrf.mxu0
        %v3790 = vpop.f32.mrf.mxu0
        %v3791 = vadd.f32 %v3630, %v3790
        %v3792 = vpop.f32.mrf.mxu0
        %3793 = vmatprep.mubr.bf16.mxu0 %v2315
        %3794 = vmatmul.mubr.bf16.gmra.mxu0 %v2095
        %v3795 = vpop.f32.mrf.mxu0
        %v3796 = vadd.f32 %v3635, %v3795
        %v3797 = vpop.f32.mrf.mxu0
        %v3798 = vpop.f32.mrf.mxu0
        %v3799 = vadd.f32 %v3638, %v3798
        %v3800 = vpop.f32.mrf.mxu0
        %3801 = vmatprep.mubr.bf16.mxu0 %v2318
        %3802 = vmatmul.mubr.bf16.gmra.mxu0 %v2107
        %v3803 = vpop.f32.mrf.mxu0
        %v3804 = vadd.f32 %v3643, %v3803
        %v3805 = vpop.f32.mrf.mxu0
        %v3806 = vpop.f32.mrf.mxu0
        %v3807 = vadd.f32 %v3646, %v3806
        %v3808 = vpop.f32.mrf.mxu0
        %3809 = vmatprep.mubr.bf16.mxu0 %v2321
        %3810 = vmatmul.mubr.bf16.gmra.mxu0 %v2119
        %v3811 = vpop.f32.mrf.mxu0
        %v3812 = vadd.f32 %v3651, %v3811
        %v3813 = vpop.f32.mrf.mxu0
        %v3814 = vpop.f32.mrf.mxu0
        %v3815 = vadd.f32 %v3654, %v3814
        %v3816 = vpop.f32.mrf.mxu0
        %3817 = vmatprep.mubr.bf16.mxu0 %v2324
        %3818 = vmatmul.mubr.bf16.gmra.mxu0 %v2131
        %v3819 = vpop.f32.mrf.mxu0
        %v3820 = vadd.f32 %v3659, %v3819
        %v3821 = vpop.f32.mrf.mxu0
        %v3822 = vpop.f32.mrf.mxu0
        %v3823 = vadd.f32 %v3662, %v3822
        %v3824 = vpop.f32.mrf.mxu0
        %3825 = vmatprep.mubr.bf16.mxu0 %v2327
        %3826 = vmatmul.mubr.bf16.gmra.mxu0 %v2143
        %v3827 = vpop.f32.mrf.mxu0
        %v3828 = vadd.f32 %v3667, %v3827
        %v3829 = vpop.f32.mrf.mxu0
        %v3830 = vpop.f32.mrf.mxu0
        %v3831 = vadd.f32 %v3670, %v3830
        %v3832 = vpop.f32.mrf.mxu0
        %3833 = vmatprep.mubr.bf16.mxu0 %v2330
        %3834 = vmatmul.mubr.bf16.gmra.mxu0 %v2155
        %v3835 = vpop.f32.mrf.mxu0
        %v3836 = vadd.f32 %v3675, %v3835
        %v3837 = vpop.f32.mrf.mxu0
        %v3838 = vpop.f32.mrf.mxu0
        %v3839 = vadd.f32 %v3678, %v3838
        %v3840 = vpop.f32.mrf.mxu0
        %3841 = vmatprep.mubr.bf16.mxu0 %v2333
        %3842 = vmatmul.mubr.bf16.gmra.mxu0 %v2167
        %v3843 = vpop.f32.mrf.mxu0
        %v3844 = vadd.f32 %v3683, %v3843
        %v3845 = vpop.f32.mrf.mxu0
        %v3846 = vpop.f32.mrf.mxu0
        %v3847 = vadd.f32 %v3686, %v3846
        %v3848 = vpop.f32.mrf.mxu0
        %3849 = vmatprep.mubr.bf16.mxu0 %v2336
        %3850 = vmatmul.mubr.bf16.gmra.mxu0 %v2179
        %v3851 = vpop.f32.mrf.mxu0
        %v3852 = vadd.f32 %v3691, %v3851
        %v3853 = vpop.f32.mrf.mxu0
        %v3854 = vpop.f32.mrf.mxu0
        %v3855 = vadd.f32 %v3694, %v3854
        %v3856 = vpop.f32.mrf.mxu0
        %3857 = vmatprep.mubr.bf16.mxu0 %v2339
        %3858 = vmatmul.mubr.bf16.gmra.mxu0 %v2191
        %v3859 = vpop.f32.mrf.mxu0
        %v3860 = vadd.f32 %v3699, %v3859
        %v3861 = vpop.f32.mrf.mxu0
        %v3862 = vpop.f32.mrf.mxu0
        %v3863 = vadd.f32 %v3702, %v3862
        %v3864 = vpop.f32.mrf.mxu0
        %3865 = vmatprep.mubr.bf16.mxu0 %v2342
        %3866 = vmatmul.mubr.bf16.gmra.mxu0 %v2203
        %v3867 = vpop.f32.mrf.mxu0
        %v3868 = vadd.f32 %v3707, %v3867
        %v3869 = vpop.f32.mrf.mxu0
        %v3870 = vpop.f32.mrf.mxu0
        %v3871 = vadd.f32 %v3710, %v3870
        %v3872 = vpop.f32.mrf.mxu0
        %3873 = vmatprep.mubr.bf16.mxu0 %v2345
        %3874 = vmatmul.mubr.bf16.gmra.mxu0 %v2215
        %v3875 = vpop.f32.mrf.mxu0
        %v3876 = vadd.f32 %v3715, %v3875
        %v3877 = vpop.f32.mrf.mxu0
        %v3878 = vpop.f32.mrf.mxu0
        %v3879 = vadd.f32 %v3718, %v3878
        %v3880 = vpop.f32.mrf.mxu0
        %3881 = vmatprep.mubr.bf16.mxu0 %v2348
        %3882 = vmatmul.mubr.bf16.gmra.mxu0 %v2227
        %v3883 = vpop.f32.mrf.mxu0
        %v3884 = vadd.f32 %v3723, %v3883
        %v3885 = vpop.f32.mrf.mxu0
        %v3886 = vpop.f32.mrf.mxu0
        %v3887 = vadd.f32 %v3726, %v3886
        %v3888 = vpop.f32.mrf.mxu0
        %3889 = vmatprep.mubr.bf16.mxu0 %v2351
        %3890 = vmatmul.mubr.bf16.gmra.mxu0 %v2239
        %v3891 = vpop.f32.mrf.mxu0
        %v3892 = vadd.f32 %v3731, %v3891
        %v3893 = vpop.f32.mrf.mxu0
        %v3894 = vpop.f32.mrf.mxu0
        %v3895 = vadd.f32 %v3734, %v3894
        %v3896 = vpop.f32.mrf.mxu0
        %3897 = vdwg.mxu0
        %3898 = vmatprep.subr.bf16.mxu0 0
        %3899 = vmatpush1.bf16.msra.mxu0 %v3326
        %3900 = vmatprep.subr.bf16.mxu0 0
        %3901 = vmatpush1.bf16.msra.mxu0 %v3325
        %3902 = vmatprep.subr.bf16.mxu0 0
        %3903 = vmatpush1.bf16.msra.mxu0 %v3324
        %3904 = vmatprep.subr.bf16.mxu0 0
        %3905 = vmatpush1.bf16.msra.mxu0 %v3323
        %3906 = vmatprep.subr.bf16.mxu0 0
        %3907 = vmatpush1.bf16.msra.mxu0 %v3322
        %3908 = vmatprep.subr.bf16.mxu0 0
        %3909 = vmatpush1.bf16.msra.mxu0 %v3321
        %3910 = vmatprep.subr.bf16.mxu0 0
        %3911 = vmatpush1.bf16.msra.mxu0 %v3320
        %3912 = vmatprep.subr.bf16.mxu0 0
        %3913 = vmatpush1.bf16.msra.mxu0 %v3319
        %3914 = vmatprep.subr.bf16.mxu0 0
        %3915 = vmatpush2.bf16.msra.mxu0 %v3334
        %3916 = vmatprep.subr.bf16.mxu0 0
        %3917 = vmatpush2.bf16.msra.mxu0 %v3333
        %3918 = vmatprep.subr.bf16.mxu0 0
        %3919 = vmatpush2.bf16.msra.mxu0 %v3332
        %3920 = vmatprep.subr.bf16.mxu0 0
        %3921 = vmatpush2.bf16.msra.mxu0 %v3331
        %3922 = vmatprep.subr.bf16.mxu0 0
        %3923 = vmatpush2.bf16.msra.mxu0 %v3330
        %3924 = vmatprep.subr.bf16.mxu0 0
        %3925 = vmatpush2.bf16.msra.mxu0 %v3329
        %3926 = vmatprep.subr.bf16.mxu0 0
        %3927 = vmatpush2.bf16.msra.mxu0 %v3328
        %3928 = vmatprep.subr.bf16.mxu0 0
        %3929 = vmatpush2.bf16.msra.mxu0 %v3327
        %3930 = vmatprep.mubr.bf16.mxu0 %v2523
        %3931 = vmatmul.mubr.bf16.gmra.mxu0 %v2432
        %v3932 = vpop.f32.mrf.mxu0
        %v3933 = vadd.f32 %v3772, %v3932
        %v3934 = vpop.f32.mrf.mxu0
        %v3935 = vpop.f32.mrf.mxu0
        %v3936 = vadd.f32 %v3775, %v3935
        %v3937 = vpop.f32.mrf.mxu0
        %3938 = vmatprep.mubr.bf16.mxu0 %v2535
        %3939 = vmatmul.mubr.bf16.gmra.mxu0 %v2433
        %v3940 = vpop.f32.mrf.mxu0
        %v3941 = vadd.f32 %v3780, %v3940
        %v3942 = vpop.f32.mrf.mxu0
        %v3943 = vpop.f32.mrf.mxu0
        %v3944 = vadd.f32 %v3783, %v3943
        %v3945 = vpop.f32.mrf.mxu0
        %3946 = vmatprep.mubr.bf16.mxu0 %v2547
        %3947 = vmatmul.mubr.bf16.gmra.mxu0 %v2434
        %v3948 = vpop.f32.mrf.mxu0
        %v3949 = vadd.f32 %v3788, %v3948
        %v3950 = vpop.f32.mrf.mxu0
        %v3951 = vpop.f32.mrf.mxu0
        %v3952 = vadd.f32 %v3791, %v3951
        %v3953 = vpop.f32.mrf.mxu0
        %3954 = vmatprep.mubr.bf16.mxu0 %v2559
        %3955 = vmatmul.mubr.bf16.gmra.mxu0 %v2435
        %v3956 = vpop.f32.mrf.mxu0
        %v3957 = vadd.f32 %v3796, %v3956
        %v3958 = vpop.f32.mrf.mxu0
        %v3959 = vpop.f32.mrf.mxu0
        %v3960 = vadd.f32 %v3799, %v3959
        %v3961 = vpop.f32.mrf.mxu0
        %3962 = vmatprep.mubr.bf16.mxu0 %v2571
        %3963 = vmatmul.mubr.bf16.gmra.mxu0 %v2436
        %v3964 = vpop.f32.mrf.mxu0
        %v3965 = vadd.f32 %v3804, %v3964
        %v3966 = vpop.f32.mrf.mxu0
        %v3967 = vpop.f32.mrf.mxu0
        %v3968 = vadd.f32 %v3807, %v3967
        %v3969 = vpop.f32.mrf.mxu0
        %3970 = vmatprep.mubr.bf16.mxu0 %v2583
        %3971 = vmatmul.mubr.bf16.gmra.mxu0 %v2437
        %v3972 = vpop.f32.mrf.mxu0
        %v3973 = vadd.f32 %v3812, %v3972
        %v3974 = vpop.f32.mrf.mxu0
        %v3975 = vpop.f32.mrf.mxu0
        %v3976 = vadd.f32 %v3815, %v3975
        %v3977 = vpop.f32.mrf.mxu0
        %3978 = vmatprep.mubr.bf16.mxu0 %v2595
        %3979 = vmatmul.mubr.bf16.gmra.mxu0 %v2438
        %v3980 = vpop.f32.mrf.mxu0
        %v3981 = vadd.f32 %v3820, %v3980
        %v3982 = vpop.f32.mrf.mxu0
        %v3983 = vpop.f32.mrf.mxu0
        %v3984 = vadd.f32 %v3823, %v3983
        %v3985 = vpop.f32.mrf.mxu0
        %3986 = vmatprep.mubr.bf16.mxu0 %v2607
        %3987 = vmatmul.mubr.bf16.gmra.mxu0 %v2439
        %v3988 = vpop.f32.mrf.mxu0
        %v3989 = vadd.f32 %v3828, %v3988
        %v3990 = vpop.f32.mrf.mxu0
        %v3991 = vpop.f32.mrf.mxu0
        %v3992 = vadd.f32 %v3831, %v3991
        %v3993 = vpop.f32.mrf.mxu0
        %3994 = vmatprep.mubr.bf16.mxu0 %v2619
        %3995 = vmatmul.mubr.bf16.gmra.mxu0 %v2440
        %v3996 = vpop.f32.mrf.mxu0
        %v3997 = vadd.f32 %v3836, %v3996
        %v3998 = vpop.f32.mrf.mxu0
        %v3999 = vpop.f32.mrf.mxu0
        %v4000 = vadd.f32 %v3839, %v3999
        %v4001 = vpop.f32.mrf.mxu0
        %4002 = vmatprep.mubr.bf16.mxu0 %v2631
        %4003 = vmatmul.mubr.bf16.gmra.mxu0 %v2441
        %v4004 = vpop.f32.mrf.mxu0
        %v4005 = vadd.f32 %v3844, %v4004
        %v4006 = vpop.f32.mrf.mxu0
        %v4007 = vpop.f32.mrf.mxu0
        %v4008 = vadd.f32 %v3847, %v4007
        %v4009 = vpop.f32.mrf.mxu0
        %4010 = vmatprep.mubr.bf16.mxu0 %v2643
        %4011 = vmatmul.mubr.bf16.gmra.mxu0 %v2442
        %v4012 = vpop.f32.mrf.mxu0
        %v4013 = vadd.f32 %v3852, %v4012
        %v4014 = vpop.f32.mrf.mxu0
        %v4015 = vpop.f32.mrf.mxu0
        %v4016 = vadd.f32 %v3855, %v4015
        %v4017 = vpop.f32.mrf.mxu0
        %4018 = vmatprep.mubr.bf16.mxu0 %v2655
        %4019 = vmatmul.mubr.bf16.gmra.mxu0 %v2443
        %v4020 = vpop.f32.mrf.mxu0
        %v4021 = vadd.f32 %v3860, %v4020
        %v4022 = vpop.f32.mrf.mxu0
        %v4023 = vpop.f32.mrf.mxu0
        %v4024 = vadd.f32 %v3863, %v4023
        %v4025 = vpop.f32.mrf.mxu0
        %4026 = vmatprep.mubr.bf16.mxu0 %v2667
        %4027 = vmatmul.mubr.bf16.gmra.mxu0 %v2444
        %v4028 = vpop.f32.mrf.mxu0
        %v4029 = vadd.f32 %v3868, %v4028
        %v4030 = vpop.f32.mrf.mxu0
        %v4031 = vpop.f32.mrf.mxu0
        %v4032 = vadd.f32 %v3871, %v4031
        %v4033 = vpop.f32.mrf.mxu0
        %4034 = vmatprep.mubr.bf16.mxu0 %v2679
        %4035 = vmatmul.mubr.bf16.gmra.mxu0 %v2445
        %v4036 = vpop.f32.mrf.mxu0
        %v4037 = vadd.f32 %v3876, %v4036
        %v4038 = vpop.f32.mrf.mxu0
        %v4039 = vpop.f32.mrf.mxu0
        %v4040 = vadd.f32 %v3879, %v4039
        %v4041 = vpop.f32.mrf.mxu0
        %4042 = vmatprep.mubr.bf16.mxu0 %v2691
        %4043 = vmatmul.mubr.bf16.gmra.mxu0 %v2446
        %v4044 = vpop.f32.mrf.mxu0
        %v4045 = vadd.f32 %v3884, %v4044
        %v4046 = vpop.f32.mrf.mxu0
        %v4047 = vpop.f32.mrf.mxu0
        %v4048 = vadd.f32 %v3887, %v4047
        %v4049 = vpop.f32.mrf.mxu0
        %4050 = vmatprep.mubr.bf16.mxu0 %v2703
        %4051 = vmatmul.mubr.bf16.gmra.mxu0 %v2447
        %v4052 = vpop.f32.mrf.mxu0
        %v4053 = vadd.f32 %v3892, %v4052
        %v4054 = vpop.f32.mrf.mxu0
        %v4055 = vpop.f32.mrf.mxu0
        %v4056 = vadd.f32 %v3895, %v4055
        %v4057 = vpop.f32.mrf.mxu0
        %4058 = vdwg.mxu0
        %4059 = vmatprep.subr.bf16.mxu0 0
        %4060 = vmatpush1.bf16.msra.mxu0 %v3342
        %4061 = vmatprep.subr.bf16.mxu0 0
        %4062 = vmatpush1.bf16.msra.mxu0 %v3341
        %4063 = vmatprep.subr.bf16.mxu0 0
        %4064 = vmatpush1.bf16.msra.mxu0 %v3340
        %4065 = vmatprep.subr.bf16.mxu0 0
        %4066 = vmatpush1.bf16.msra.mxu0 %v3339
        %4067 = vmatprep.subr.bf16.mxu0 0
        %4068 = vmatpush1.bf16.msra.mxu0 %v3338
        %4069 = vmatprep.subr.bf16.mxu0 0
        %4070 = vmatpush1.bf16.msra.mxu0 %v3337
        %4071 = vmatprep.subr.bf16.mxu0 0
        %4072 = vmatpush1.bf16.msra.mxu0 %v3336
        %4073 = vmatprep.subr.bf16.mxu0 0
        %4074 = vmatpush1.bf16.msra.mxu0 %v3335
        %4075 = vmatprep.subr.bf16.mxu0 0
        %4076 = vmatpush2.bf16.msra.mxu0 0
        %4077 = vmatprep.subr.bf16.mxu0 0
        %4078 = vmatpush2.bf16.msra.mxu0 0
        %4079 = vmatprep.subr.bf16.mxu0 0
        %4080 = vmatpush2.bf16.msra.mxu0 0
        %4081 = vmatprep.subr.bf16.mxu0 0
        %4082 = vmatpush2.bf16.msra.mxu0 0
        %4083 = vmatprep.subr.bf16.mxu0 0
        %4084 = vmatpush2.bf16.msra.mxu0 0
        %4085 = vmatprep.subr.bf16.mxu0 0
        %4086 = vmatpush2.bf16.msra.mxu0 0
        %4087 = vmatprep.subr.bf16.mxu0 0
        %4088 = vmatpush2.bf16.msra.mxu0 0
        %4089 = vmatprep.subr.bf16.mxu0 0
        %4090 = vmatpush2.bf16.msra.mxu0 0
        %4091 = vmatprep.mubr.bf16.mxu0 0
        %4092 = vmatmul.mubr.bf16.gmra.mxu0 %v2770
        %v4093 = vpop.f32.mrf.mxu0
        %v4094 = vadd.f32 %v3933, %v4093
        %v4095 = vpop.f32.mrf.mxu0
        %v4096 = vpop.f32.mrf.mxu0
        %v4097 = vadd.f32 %v3936, %v4096
        %v4098 = vpop.f32.mrf.mxu0
        %4099 = vmatprep.mubr.bf16.mxu0 0
        %4100 = vmatmul.mubr.bf16.gmra.mxu0 %v2773
        %v4101 = vpop.f32.mrf.mxu0
        %v4102 = vadd.f32 %v3941, %v4101
        %v4103 = vpop.f32.mrf.mxu0
        %v4104 = vpop.f32.mrf.mxu0
        %v4105 = vadd.f32 %v3944, %v4104
        %v4106 = vpop.f32.mrf.mxu0
        %4107 = vmatprep.mubr.bf16.mxu0 0
        %4108 = vmatmul.mubr.bf16.gmra.mxu0 %v2776
        %v4109 = vpop.f32.mrf.mxu0
        %v4110 = vadd.f32 %v3949, %v4109
        %v4111 = vpop.f32.mrf.mxu0
        %v4112 = vpop.f32.mrf.mxu0
        %v4113 = vadd.f32 %v3952, %v4112
        %v4114 = vpop.f32.mrf.mxu0
        %4115 = vmatprep.mubr.bf16.mxu0 0
        %4116 = vmatmul.mubr.bf16.gmra.mxu0 %v2779
        %v4117 = vpop.f32.mrf.mxu0
        %v4118 = vadd.f32 %v3957, %v4117
        %v4119 = vpop.f32.mrf.mxu0
        %v4120 = vpop.f32.mrf.mxu0
        %v4121 = vadd.f32 %v3960, %v4120
        %v4122 = vpop.f32.mrf.mxu0
        %4123 = vmatprep.mubr.bf16.mxu0 0
        %4124 = vmatmul.mubr.bf16.gmra.mxu0 %v2782
        %v4125 = vpop.f32.mrf.mxu0
        %v4126 = vadd.f32 %v3965, %v4125
        %v4127 = vpop.f32.mrf.mxu0
        %v4128 = vpop.f32.mrf.mxu0
        %v4129 = vadd.f32 %v3968, %v4128
        %v4130 = vpop.f32.mrf.mxu0
        %4131 = vmatprep.mubr.bf16.mxu0 0
        %4132 = vmatmul.mubr.bf16.gmra.mxu0 %v2785
        %v4133 = vpop.f32.mrf.mxu0
        %v4134 = vadd.f32 %v3973, %v4133
        %v4135 = vpop.f32.mrf.mxu0
        %v4136 = vpop.f32.mrf.mxu0
        %v4137 = vadd.f32 %v3976, %v4136
        %v4138 = vpop.f32.mrf.mxu0
        %4139 = vmatprep.mubr.bf16.mxu0 0
        %4140 = vmatmul.mubr.bf16.gmra.mxu0 %v2788
        %v4141 = vpop.f32.mrf.mxu0
        %v4142 = vadd.f32 %v3981, %v4141
        %v4143 = vpop.f32.mrf.mxu0
        %v4144 = vpop.f32.mrf.mxu0
        %v4145 = vadd.f32 %v3984, %v4144
        %v4146 = vpop.f32.mrf.mxu0
        %4147 = vmatprep.mubr.bf16.mxu0 0
        %4148 = vmatmul.mubr.bf16.gmra.mxu0 %v2791
        %v4149 = vpop.f32.mrf.mxu0
        %v4150 = vadd.f32 %v3989, %v4149
        %v4151 = vpop.f32.mrf.mxu0
        %v4152 = vpop.f32.mrf.mxu0
        %v4153 = vadd.f32 %v3992, %v4152
        %v4154 = vpop.f32.mrf.mxu0
        %4155 = vmatprep.mubr.bf16.mxu0 0
        %4156 = vmatmul.mubr.bf16.gmra.mxu0 %v2794
        %v4157 = vpop.f32.mrf.mxu0
        %v4158 = vadd.f32 %v3997, %v4157
        %v4159 = vpop.f32.mrf.mxu0
        %v4160 = vpop.f32.mrf.mxu0
        %v4161 = vadd.f32 %v4000, %v4160
        %v4162 = vpop.f32.mrf.mxu0
        %4163 = vmatprep.mubr.bf16.mxu0 0
        %4164 = vmatmul.mubr.bf16.gmra.mxu0 %v2797
        %v4165 = vpop.f32.mrf.mxu0
        %v4166 = vadd.f32 %v4005, %v4165
        %v4167 = vpop.f32.mrf.mxu0
        %v4168 = vpop.f32.mrf.mxu0
        %v4169 = vadd.f32 %v4008, %v4168
        %v4170 = vpop.f32.mrf.mxu0
        %4171 = vmatprep.mubr.bf16.mxu0 0
        %4172 = vmatmul.mubr.bf16.gmra.mxu0 %v2800
        %v4173 = vpop.f32.mrf.mxu0
        %v4174 = vadd.f32 %v4013, %v4173
        %v4175 = vpop.f32.mrf.mxu0
        %v4176 = vpop.f32.mrf.mxu0
        %v4177 = vadd.f32 %v4016, %v4176
        %v4178 = vpop.f32.mrf.mxu0
        %4179 = vmatprep.mubr.bf16.mxu0 0
        %4180 = vmatmul.mubr.bf16.gmra.mxu0 %v2803
        %v4181 = vpop.f32.mrf.mxu0
        %v4182 = vadd.f32 %v4021, %v4181
        %v4183 = vpop.f32.mrf.mxu0
        %v4184 = vpop.f32.mrf.mxu0
        %v4185 = vadd.f32 %v4024, %v4184
        %v4186 = vpop.f32.mrf.mxu0
        %4187 = vmatprep.mubr.bf16.mxu0 0
        %4188 = vmatmul.mubr.bf16.gmra.mxu0 %v2806
        %v4189 = vpop.f32.mrf.mxu0
        %v4190 = vadd.f32 %v4029, %v4189
        %v4191 = vpop.f32.mrf.mxu0
        %v4192 = vpop.f32.mrf.mxu0
        %v4193 = vadd.f32 %v4032, %v4192
        %v4194 = vpop.f32.mrf.mxu0
        %4195 = vmatprep.mubr.bf16.mxu0 0
        %4196 = vmatmul.mubr.bf16.gmra.mxu0 %v2809
        %v4197 = vpop.f32.mrf.mxu0
        %v4198 = vadd.f32 %v4037, %v4197
        %v4199 = vpop.f32.mrf.mxu0
        %v4200 = vpop.f32.mrf.mxu0
        %v4201 = vadd.f32 %v4040, %v4200
        %v4202 = vpop.f32.mrf.mxu0
        %4203 = vmatprep.mubr.bf16.mxu0 0
        %4204 = vmatmul.mubr.bf16.gmra.mxu0 %v2812
        %v4205 = vpop.f32.mrf.mxu0
        %v4206 = vadd.f32 %v4045, %v4205
        %v4207 = vpop.f32.mrf.mxu0
        %v4208 = vpop.f32.mrf.mxu0
        %v4209 = vadd.f32 %v4048, %v4208
        %v4210 = vpop.f32.mrf.mxu0
        %4211 = vmatprep.mubr.bf16.mxu0 0
        %4212 = vmatmul.mubr.bf16.gmra.mxu0 %v2815
        %v4213 = vpop.f32.mrf.mxu0
        %v4214 = vadd.f32 %v4053, %v4213
        %v4215 = vpop.f32.mrf.mxu0
        %v4216 = vpop.f32.mrf.mxu0
        %v4217 = vadd.f32 %v4056, %v4216
        %v4218 = vpop.f32.mrf.mxu0
        %4219 = vdwg.mxu0
        %v4220 = vmax.f32 %v4094, 0.0
        %v4221 = vmax.f32 %v4097, 0.0
        %v4222 = vmax.f32 %v4102, 0.0
        %v4223 = vmax.f32 %v4105, 0.0
        %v4224 = vmax.f32 %v4110, 0.0
        %v4225 = vmax.f32 %v4113, 0.0
        %v4226 = vmax.f32 %v4118, 0.0
        %v4227 = vmax.f32 %v4121, 0.0
        %v4228 = vmax.f32 %v4126, 0.0
        %v4229 = vmax.f32 %v4129, 0.0
        %v4230 = vmax.f32 %v4134, 0.0
        %v4231 = vmax.f32 %v4137, 0.0
        %v4232 = vmax.f32 %v4142, 0.0
        %v4233 = vmax.f32 %v4145, 0.0
        %v4234 = vmax.f32 %v4150, 0.0
        %v4235 = vmax.f32 %v4153, 0.0
        %v4236 = vmax.f32 %v4158, 0.0
        %v4237 = vmax.f32 %v4161, 0.0
        %v4238 = vmax.f32 %v4166, 0.0
        %v4239 = vmax.f32 %v4169, 0.0
        %v4240 = vmax.f32 %v4174, 0.0
        %v4241 = vmax.f32 %v4177, 0.0
        %v4242 = vmax.f32 %v4182, 0.0
        %v4243 = vmax.f32 %v4185, 0.0
        %v4244 = vmax.f32 %v4190, 0.0
        %v4245 = vmax.f32 %v4193, 0.0
        %v4246 = vmax.f32 %v4198, 0.0
        %v4247 = vmax.f32 %v4201, 0.0
        %v4248 = vmax.f32 %v4206, 0.0
        %v4249 = vmax.f32 %v4209, 0.0
        %v4250 = vmax.f32 %v4214, 0.0
        %v4251 = vmax.f32 %v4217, 0.0
        %v4252 = vpack.c.bf16 %v4221, %v4220
        %v4253 = vpack.c.bf16 %v4223, %v4222
        %v4254 = vpack.c.bf16 %v4225, %v4224
        %v4255 = vpack.c.bf16 %v4227, %v4226
        %v4256 = vpack.c.bf16 %v4229, %v4228
        %v4257 = vpack.c.bf16 %v4231, %v4230
        %v4258 = vpack.c.bf16 %v4233, %v4232
        %v4259 = vpack.c.bf16 %v4235, %v4234
        %v4260 = vpack.c.bf16 %v4237, %v4236
        %v4261 = vpack.c.bf16 %v4239, %v4238
        %v4262 = vpack.c.bf16 %v4241, %v4240
        %v4263 = vpack.c.bf16 %v4243, %v4242
        %v4264 = vpack.c.bf16 %v4245, %v4244
        %v4265 = vpack.c.bf16 %v4247, %v4246
        %v4266 = vpack.c.bf16 %v4249, %v4248
        %v4267 = vpack.c.bf16 %v4251, %v4250
        %v4268 = vld [vmem:[#allocation9] sm:$0xf]
        %v4269 = vld [vmem:[#allocation9 + $0x4] sm:$0xf]
        %v4270 = vld [vmem:[#allocation9 + $0x8] sm:$0xf]
        %v4271 = vld [vmem:[#allocation9 + $0xc] sm:$0xf]
        %v4272 = vld [vmem:[#allocation9 + $0x10] sm:$0xf]
        %v4273 = vld [vmem:[#allocation9 + $0x14] sm:$0xf]
        %v4274 = vld [vmem:[#allocation9 + $0x18] sm:$0xf]
        %v4275 = vld [vmem:[#allocation9 + $0x1c] sm:$0xf]
        %v4276 = vld [vmem:[#allocation9 + $0x20] sm:$0xf]
        %v4277 = vld [vmem:[#allocation9 + $0x24] sm:$0xf]
        %v4278 = vld [vmem:[#allocation9 + $0x28] sm:$0xf]
        %v4279 = vld [vmem:[#allocation9 + $0x2c] sm:$0xf]
        %v4280 = vld [vmem:[#allocation9 + $0x30] sm:$0xf]
        %v4281 = vld [vmem:[#allocation9 + $0x34] sm:$0xf]
        %v4282 = vld [vmem:[#allocation9 + $0x38] sm:$0xf]
        %v4283 = vld [vmem:[#allocation9 + $0x3c] sm:$0xf]
        %v4284 = vld [vmem:[%s6] sm:$0x1]
        %v4286 = vlaneseq
        %v4287 = vshrl.u32 %v4286, 7
        %v4288 = vsub.s32 0, %v4287
        %v4289 = vrot.slane %v4284, %v4288
        %v4307 = vunpack.c.l.b16 %v4268
        %v4308 = vunpack.c.l.b16 %v4269
        %v4309 = vunpack.c.l.b16 %v4270
        %v4310 = vunpack.c.l.b16 %v4271
        %v4311 = vunpack.c.l.b16 %v4272
        %v4312 = vunpack.c.l.b16 %v4273
        %v4313 = vunpack.c.l.b16 %v4274
        %v4314 = vunpack.c.l.b16 %v4275
        %v4315 = vunpack.c.l.b16 %v4276
        %v4316 = vunpack.c.l.b16 %v4277
        %v4317 = vunpack.c.l.b16 %v4278
        %v4318 = vunpack.c.l.b16 %v4279
        %v4319 = vunpack.c.l.b16 %v4280
        %v4320 = vunpack.c.l.b16 %v4281
        %v4321 = vunpack.c.l.b16 %v4282
        %v4322 = vunpack.c.l.b16 %v4283
        %v4323 = vpack.c.b16 %v4308, %v4307
        %v4324 = vpack.c.b16 %v4310, %v4309
        %v4325 = vpack.c.b16 %v4312, %v4311
        %v4326 = vpack.c.b16 %v4314, %v4313
        %v4327 = vpack.c.b16 %v4316, %v4315
        %v4328 = vpack.c.b16 %v4318, %v4317
        %v4329 = vpack.c.b16 %v4320, %v4319
        %v4330 = vpack.c.b16 %v4322, %v4321
        %4339 = vmatprep.subr.bf16.mxu0 0
        %4340 = vmatpush1.bf16.msra.mxu0 %v4330
        %4341 = vmatprep.subr.bf16.mxu0 0
        %4342 = vmatpush1.bf16.msra.mxu0 %v4329
        %4343 = vmatprep.subr.bf16.mxu0 0
        %4344 = vmatpush1.bf16.msra.mxu0 %v4328
        %4345 = vmatprep.subr.bf16.mxu0 0
        %4346 = vmatpush1.bf16.msra.mxu0 %v4327
        %4347 = vmatprep.subr.bf16.mxu0 0
        %4348 = vmatpush1.bf16.msra.mxu0 %v4326
        %4349 = vmatprep.subr.bf16.mxu0 0
        %4350 = vmatpush1.bf16.msra.mxu0 %v4325
        %4351 = vmatprep.subr.bf16.mxu0 0
        %4352 = vmatpush1.bf16.msra.mxu0 %v4324
        %4353 = vmatprep.subr.bf16.mxu0 0
        %4354 = vmatpush1.bf16.msra.mxu0 %v4323
        %4355 = vmatprep.subr.bf16.mxu0 0
        %4356 = vmatpush2.bf16.msra.mxu0 0
        %4357 = vmatprep.subr.bf16.mxu0 0
        %4358 = vmatpush2.bf16.msra.mxu0 0
        %4359 = vmatprep.subr.bf16.mxu0 0
        %4360 = vmatpush2.bf16.msra.mxu0 0
        %4361 = vmatprep.subr.bf16.mxu0 0
        %4362 = vmatpush2.bf16.msra.mxu0 0
        %4363 = vmatprep.subr.bf16.mxu0 0
        %4364 = vmatpush2.bf16.msra.mxu0 0
        %4365 = vmatprep.subr.bf16.mxu0 0
        %4366 = vmatpush2.bf16.msra.mxu0 0
        %4367 = vmatprep.subr.bf16.mxu0 0
        %4368 = vmatpush2.bf16.msra.mxu0 0
        %4369 = vmatprep.subr.bf16.mxu0 0
        %4370 = vmatpush2.bf16.msra.mxu0 0
        %4371 = vmatprep.mubr.bf16.mxu0 0
        %4372 = vmatmul.mubr.bf16.gmra.mxu0 %v4252
        %v4373 = vpop.f32.mrf.mxu0
        %v4374 = vadd.f32 %v4289, %v4373
        %v4375 = vpop.f32.mrf.mxu0
        %v4376 = vpop.f32.mrf.mxu0
        %v4377 = vadd.f32 %v4289, %v4376
        %v4378 = vpop.f32.mrf.mxu0
        %4379 = vmatprep.mubr.bf16.mxu0 0
        %4380 = vmatmul.mubr.bf16.gmra.mxu0 %v4253
        %v4381 = vpop.f32.mrf.mxu0
        %v4382 = vadd.f32 %v4289, %v4381
        %v4383 = vpop.f32.mrf.mxu0
        %v4384 = vpop.f32.mrf.mxu0
        %v4385 = vadd.f32 %v4289, %v4384
        %v4386 = vpop.f32.mrf.mxu0
        %4387 = vmatprep.mubr.bf16.mxu0 0
        %4388 = vmatmul.mubr.bf16.gmra.mxu0 %v4254
        %v4389 = vpop.f32.mrf.mxu0
        %v4390 = vadd.f32 %v4289, %v4389
        %v4391 = vpop.f32.mrf.mxu0
        %v4392 = vpop.f32.mrf.mxu0
        %v4393 = vadd.f32 %v4289, %v4392
        %v4394 = vpop.f32.mrf.mxu0
        %4395 = vmatprep.mubr.bf16.mxu0 0
        %4396 = vmatmul.mubr.bf16.gmra.mxu0 %v4255
        %v4397 = vpop.f32.mrf.mxu0
        %v4398 = vadd.f32 %v4289, %v4397
        %v4399 = vpop.f32.mrf.mxu0
        %v4400 = vpop.f32.mrf.mxu0
        %v4401 = vadd.f32 %v4289, %v4400
        %v4402 = vpop.f32.mrf.mxu0
        %4403 = vmatprep.mubr.bf16.mxu0 0
        %4404 = vmatmul.mubr.bf16.gmra.mxu0 %v4256
        %v4405 = vpop.f32.mrf.mxu0
        %v4406 = vadd.f32 %v4289, %v4405
        %v4407 = vpop.f32.mrf.mxu0
        %v4408 = vpop.f32.mrf.mxu0
        %v4409 = vadd.f32 %v4289, %v4408
        %v4410 = vpop.f32.mrf.mxu0
        %4411 = vmatprep.mubr.bf16.mxu0 0
        %4412 = vmatmul.mubr.bf16.gmra.mxu0 %v4257
        %v4413 = vpop.f32.mrf.mxu0
        %v4414 = vadd.f32 %v4289, %v4413
        %v4415 = vpop.f32.mrf.mxu0
        %v4416 = vpop.f32.mrf.mxu0
        %v4417 = vadd.f32 %v4289, %v4416
        %v4418 = vpop.f32.mrf.mxu0
        %4419 = vmatprep.mubr.bf16.mxu0 0
        %4420 = vmatmul.mubr.bf16.gmra.mxu0 %v4258
        %v4421 = vpop.f32.mrf.mxu0
        %v4422 = vadd.f32 %v4289, %v4421
        %v4423 = vpop.f32.mrf.mxu0
        %v4424 = vpop.f32.mrf.mxu0
        %v4425 = vadd.f32 %v4289, %v4424
        %v4426 = vpop.f32.mrf.mxu0
        %4427 = vmatprep.mubr.bf16.mxu0 0
        %4428 = vmatmul.mubr.bf16.gmra.mxu0 %v4259
        %v4429 = vpop.f32.mrf.mxu0
        %v4430 = vadd.f32 %v4289, %v4429
        %v4431 = vpop.f32.mrf.mxu0
        %v4432 = vpop.f32.mrf.mxu0
        %v4433 = vadd.f32 %v4289, %v4432
        %v4434 = vpop.f32.mrf.mxu0
        %4435 = vmatprep.mubr.bf16.mxu0 0
        %4436 = vmatmul.mubr.bf16.gmra.mxu0 %v4260
        %v4437 = vpop.f32.mrf.mxu0
        %v4438 = vadd.f32 %v4289, %v4437
        %v4439 = vpop.f32.mrf.mxu0
        %v4440 = vpop.f32.mrf.mxu0
        %v4441 = vadd.f32 %v4289, %v4440
        %v4442 = vpop.f32.mrf.mxu0
        %4443 = vmatprep.mubr.bf16.mxu0 0
        %4444 = vmatmul.mubr.bf16.gmra.mxu0 %v4261
        %v4445 = vpop.f32.mrf.mxu0
        %v4446 = vadd.f32 %v4289, %v4445
        %v4447 = vpop.f32.mrf.mxu0
        %v4448 = vpop.f32.mrf.mxu0
        %v4449 = vadd.f32 %v4289, %v4448
        %v4450 = vpop.f32.mrf.mxu0
        %4451 = vmatprep.mubr.bf16.mxu0 0
        %4452 = vmatmul.mubr.bf16.gmra.mxu0 %v4262
        %v4453 = vpop.f32.mrf.mxu0
        %v4454 = vadd.f32 %v4289, %v4453
        %v4455 = vpop.f32.mrf.mxu0
        %v4456 = vpop.f32.mrf.mxu0
        %v4457 = vadd.f32 %v4289, %v4456
        %v4458 = vpop.f32.mrf.mxu0
        %4459 = vmatprep.mubr.bf16.mxu0 0
        %4460 = vmatmul.mubr.bf16.gmra.mxu0 %v4263
        %v4461 = vpop.f32.mrf.mxu0
        %v4462 = vadd.f32 %v4289, %v4461
        %v4463 = vpop.f32.mrf.mxu0
        %v4464 = vpop.f32.mrf.mxu0
        %v4465 = vadd.f32 %v4289, %v4464
        %v4466 = vpop.f32.mrf.mxu0
        %4467 = vmatprep.mubr.bf16.mxu0 0
        %4468 = vmatmul.mubr.bf16.gmra.mxu0 %v4264
        %v4469 = vpop.f32.mrf.mxu0
        %v4470 = vadd.f32 %v4289, %v4469
        %v4471 = vpop.f32.mrf.mxu0
        %v4472 = vpop.f32.mrf.mxu0
        %v4473 = vadd.f32 %v4289, %v4472
        %v4474 = vpop.f32.mrf.mxu0
        %4475 = vmatprep.mubr.bf16.mxu0 0
        %4476 = vmatmul.mubr.bf16.gmra.mxu0 %v4265
        %v4477 = vpop.f32.mrf.mxu0
        %v4478 = vadd.f32 %v4289, %v4477
        %v4479 = vpop.f32.mrf.mxu0
        %v4480 = vpop.f32.mrf.mxu0
        %v4481 = vadd.f32 %v4289, %v4480
        %v4482 = vpop.f32.mrf.mxu0
        %4483 = vmatprep.mubr.bf16.mxu0 0
        %4484 = vmatmul.mubr.bf16.gmra.mxu0 %v4266
        %v4485 = vpop.f32.mrf.mxu0
        %v4486 = vadd.f32 %v4289, %v4485
        %v4487 = vpop.f32.mrf.mxu0
        %v4488 = vpop.f32.mrf.mxu0
        %v4489 = vadd.f32 %v4289, %v4488
        %v4490 = vpop.f32.mrf.mxu0
        %4491 = vmatprep.mubr.bf16.mxu0 0
        %4492 = vmatmul.mubr.bf16.gmra.mxu0 %v4267
        %v4493 = vpop.f32.mrf.mxu0
        %v4494 = vadd.f32 %v4289, %v4493
        %v4495 = vpop.f32.mrf.mxu0
        %v4496 = vpop.f32.mrf.mxu0
        %v4497 = vadd.f32 %v4289, %v4496
        %v4498 = vpop.f32.mrf.mxu0
        %4499 = vdwg.mxu0
        %v4500 = vadd.f32 %v4374, %v342
        %v4501 = vadd.f32 %v4377, %v343
        %v4502 = vadd.f32 %v4382, %v344
        %v4503 = vadd.f32 %v4385, %v345
        %v4504 = vadd.f32 %v4390, %v346
        %v4505 = vadd.f32 %v4393, %v347
        %v4506 = vadd.f32 %v4398, %v348
        %v4507 = vadd.f32 %v4401, %v349
        %v4508 = vadd.f32 %v4406, %v350
        %v4509 = vadd.f32 %v4409, %v351
        %v4510 = vadd.f32 %v4414, %v352
        %v4511 = vadd.f32 %v4417, %v353
        %v4512 = vadd.f32 %v4422, %v354
        %v4513 = vadd.f32 %v4425, %v355
        %v4514 = vadd.f32 %v4430, %v356
        %v4515 = vadd.f32 %v4433, %v357
        %v4516 = vadd.f32 %v4438, %v358
        %v4517 = vadd.f32 %v4441, %v359
        %v4518 = vadd.f32 %v4446, %v360
        %v4519 = vadd.f32 %v4449, %v361
        %v4520 = vadd.f32 %v4454, %v362
        %v4521 = vadd.f32 %v4457, %v363
        %v4522 = vadd.f32 %v4462, %v364
        %v4523 = vadd.f32 %v4465, %v365
        %v4524 = vadd.f32 %v4470, %v366
        %v4525 = vadd.f32 %v4473, %v367
        %v4526 = vadd.f32 %v4478, %v368
        %v4527 = vadd.f32 %v4481, %v369
        %v4528 = vadd.f32 %v4486, %v370
        %v4529 = vadd.f32 %v4489, %v371
        %v4530 = vadd.f32 %v4494, %v372
        %v4531 = vadd.f32 %v4497, %v373
        %v4532 = vmax.f32 %v4500, 0.0
        %v4533 = vmax.f32 %v4501, 0.0
        %v4534 = vmax.f32 %v4502, 0.0
        %v4535 = vmax.f32 %v4503, 0.0
        %v4536 = vmax.f32 %v4504, 0.0
        %v4537 = vmax.f32 %v4505, 0.0
        %v4538 = vmax.f32 %v4506, 0.0
        %v4539 = vmax.f32 %v4507, 0.0
        %v4540 = vmax.f32 %v4508, 0.0
        %v4541 = vmax.f32 %v4509, 0.0
        %v4542 = vmax.f32 %v4510, 0.0
        %v4543 = vmax.f32 %v4511, 0.0
        %v4544 = vmax.f32 %v4512, 0.0
        %v4545 = vmax.f32 %v4513, 0.0
        %v4546 = vmax.f32 %v4514, 0.0
        %v4547 = vmax.f32 %v4515, 0.0
        %v4548 = vmax.f32 %v4516, 0.0
        %v4549 = vmax.f32 %v4517, 0.0
        %v4550 = vmax.f32 %v4518, 0.0
        %v4551 = vmax.f32 %v4519, 0.0
        %v4552 = vmax.f32 %v4520, 0.0
        %v4553 = vmax.f32 %v4521, 0.0
        %v4554 = vmax.f32 %v4522, 0.0
        %v4555 = vmax.f32 %v4523, 0.0
        %v4556 = vmax.f32 %v4524, 0.0
        %v4557 = vmax.f32 %v4525, 0.0
        %v4558 = vmax.f32 %v4526, 0.0
        %v4559 = vmax.f32 %v4527, 0.0
        %v4560 = vmax.f32 %v4528, 0.0
        %v4561 = vmax.f32 %v4529, 0.0
        %v4562 = vmax.f32 %v4530, 0.0
        %v4563 = vmax.f32 %v4531, 0.0
        %v4564 = vpack.c.bf16 %v4533, %v4532
        %v4565 = vpack.c.bf16 %v4535, %v4534
        %v4566 = vpack.c.bf16 %v4537, %v4536
        %v4567 = vpack.c.bf16 %v4539, %v4538
        %v4568 = vpack.c.bf16 %v4541, %v4540
        %v4569 = vpack.c.bf16 %v4543, %v4542
        %v4570 = vpack.c.bf16 %v4545, %v4544
        %v4571 = vpack.c.bf16 %v4547, %v4546
        %v4572 = vpack.c.bf16 %v4549, %v4548
        %v4573 = vpack.c.bf16 %v4551, %v4550
        %v4574 = vpack.c.bf16 %v4553, %v4552
        %v4575 = vpack.c.bf16 %v4555, %v4554
        %v4576 = vpack.c.bf16 %v4557, %v4556
        %v4577 = vpack.c.bf16 %v4559, %v4558
        %v4578 = vpack.c.bf16 %v4561, %v4560
        %v4579 = vpack.c.bf16 %v4563, %v4562
        %v4596 = vunpack.c.l.b16 %v4564
        %v4597 = vunpack.c.h.b16 %v4564
        %v4598 = vunpack.c.l.b16 %v4565
        %v4599 = vunpack.c.h.b16 %v4565
        %v4600 = vunpack.c.l.b16 %v4566
        %v4601 = vunpack.c.h.b16 %v4566
        %v4602 = vunpack.c.l.b16 %v4567
        %v4603 = vunpack.c.h.b16 %v4567
        %v4604 = vunpack.c.l.b16 %v4568
        %v4605 = vunpack.c.h.b16 %v4568
        %v4606 = vunpack.c.l.b16 %v4569
        %v4607 = vunpack.c.h.b16 %v4569
        %v4608 = vunpack.c.l.b16 %v4570
        %v4609 = vunpack.c.h.b16 %v4570
        %v4610 = vunpack.c.l.b16 %v4571
        %v4611 = vunpack.c.h.b16 %v4571
        %v4612 = vunpack.c.l.b16 %v4572
        %v4613 = vunpack.c.h.b16 %v4572
        %v4614 = vunpack.c.l.b16 %v4573
        %v4615 = vunpack.c.h.b16 %v4573
        %v4616 = vunpack.c.l.b16 %v4574
        %v4617 = vunpack.c.h.b16 %v4574
        %v4618 = vunpack.c.l.b16 %v4575
        %v4619 = vunpack.c.h.b16 %v4575
        %v4620 = vunpack.c.l.b16 %v4576
        %v4621 = vunpack.c.h.b16 %v4576
        %v4622 = vunpack.c.l.b16 %v4577
        %v4623 = vunpack.c.h.b16 %v4577
        %v4624 = vunpack.c.l.b16 %v4578
        %v4625 = vunpack.c.h.b16 %v4578
        %v4626 = vunpack.c.l.b16 %v4579
        %v4627 = vunpack.c.h.b16 %v4579
        %v4628 = vpack.c.b16 %v4596, %v4596
        %v4629 = vpack.c.b16 %v4597, %v4597
        %v4630 = vpack.c.b16 %v4598, %v4598
        %v4631 = vpack.c.b16 %v4599, %v4599
        %v4632 = vpack.c.b16 %v4600, %v4600
        %v4633 = vpack.c.b16 %v4601, %v4601
        %v4634 = vpack.c.b16 %v4602, %v4602
        %v4635 = vpack.c.b16 %v4603, %v4603
        %v4636 = vpack.c.b16 %v4604, %v4604
        %v4637 = vpack.c.b16 %v4605, %v4605
        %v4638 = vpack.c.b16 %v4606, %v4606
        %v4639 = vpack.c.b16 %v4607, %v4607
        %v4640 = vpack.c.b16 %v4608, %v4608
        %v4641 = vpack.c.b16 %v4609, %v4609
        %v4642 = vpack.c.b16 %v4610, %v4610
        %v4643 = vpack.c.b16 %v4611, %v4611
        %v4644 = vpack.c.b16 %v4612, %v4612
        %v4645 = vpack.c.b16 %v4613, %v4613
        %v4646 = vpack.c.b16 %v4614, %v4614
        %v4647 = vpack.c.b16 %v4615, %v4615
        %v4648 = vpack.c.b16 %v4616, %v4616
        %v4649 = vpack.c.b16 %v4617, %v4617
        %v4650 = vpack.c.b16 %v4618, %v4618
        %v4651 = vpack.c.b16 %v4619, %v4619
        %v4652 = vpack.c.b16 %v4620, %v4620
        %v4653 = vpack.c.b16 %v4621, %v4621
        %v4654 = vpack.c.b16 %v4622, %v4622
        %v4655 = vpack.c.b16 %v4623, %v4623
        %v4656 = vpack.c.b16 %v4624, %v4624
        %v4657 = vpack.c.b16 %v4625, %v4625
        %v4658 = vpack.c.b16 %v4626, %v4626
        %v4659 = vpack.c.b16 %v4627, %v4627
        %4692 = vst [vmem:[%s340] sm:$0xf] %v4628
        %4693 = vst [vmem:[%s340 + $0x4] sm:$0xf] %v4629
        %4694 = vst [vmem:[%s340 + $0x8] sm:$0xf] %v4630
        %4695 = vst [vmem:[%s340 + $0xc] sm:$0xf] %v4631
        %4696 = vst [vmem:[%s340 + $0x10] sm:$0xf] %v4632
        %4697 = vst [vmem:[%s340 + $0x14] sm:$0xf] %v4633
        %4698 = vst [vmem:[%s340 + $0x18] sm:$0xf] %v4634
        %4699 = vst [vmem:[%s340 + $0x1c] sm:$0xf] %v4635
        %4700 = vst [vmem:[%s340 + $0x20] sm:$0xf] %v4636
        %4701 = vst [vmem:[%s340 + $0x24] sm:$0xf] %v4637
        %4702 = vst [vmem:[%s340 + $0x28] sm:$0xf] %v4638
        %4703 = vst [vmem:[%s340 + $0x2c] sm:$0xf] %v4639
        %4704 = vst [vmem:[%s340 + $0x30] sm:$0xf] %v4640
        %4705 = vst [vmem:[%s340 + $0x34] sm:$0xf] %v4641
        %4706 = vst [vmem:[%s340 + $0x38] sm:$0xf] %v4642
        %4707 = vst [vmem:[%s340 + $0x3c] sm:$0xf] %v4643
        %4708 = vst [vmem:[%s340 + $0x40] sm:$0xf] %v4644
        %4709 = vst [vmem:[%s340 + $0x44] sm:$0xf] %v4645
        %4710 = vst [vmem:[%s340 + $0x48] sm:$0xf] %v4646
        %4711 = vst [vmem:[%s340 + $0x4c] sm:$0xf] %v4647
        %4712 = vst [vmem:[%s340 + $0x50] sm:$0xf] %v4648
        %4713 = vst [vmem:[%s340 + $0x54] sm:$0xf] %v4649
        %4714 = vst [vmem:[%s340 + $0x58] sm:$0xf] %v4650
        %4715 = vst [vmem:[%s340 + $0x5c] sm:$0xf] %v4651
        %4716 = vst [vmem:[%s340 + $0x60] sm:$0xf] %v4652
        %4717 = vst [vmem:[%s340 + $0x64] sm:$0xf] %v4653
        %4718 = vst [vmem:[%s340 + $0x68] sm:$0xf] %v4654
        %4719 = vst [vmem:[%s340 + $0x6c] sm:$0xf] %v4655
        %4720 = vst [vmem:[%s340 + $0x70] sm:$0xf] %v4656
        %4721 = vst [vmem:[%s340 + $0x74] sm:$0xf] %v4657
        %4722 = vst [vmem:[%s340 + $0x78] sm:$0xf] %v4658
        %4723 = vst [vmem:[%s340 + $0x7c] sm:$0xf] %v4659
        %s4724 = sand.u32 %s186, 1
        %s4725 = scalar_lea.sflag [#allocation5], %s4724
        %s4726 = sand.u32 %s186, 1
        %s4727 = smul.addr %s4726, 128
        %s4728 = scalar_lea.vmem [#allocation11], %s4727
        // Predicated region
        $region65: #{tpu_custom_call.1} parent=47 // pred_check
          %p4729 = pneg %p196
        $region66: #{tpu_custom_call.1} parent=47 // pred_check_branch
          %4731 = sbr.rel (%p4729) target = $region68
        $region67: #{tpu_custom_call.1} parent=47 // pred_region
          %s4733 = ssub.s32 2048, 2048
          %4734 = vsyncadd %s4725, %s4733
          %s4735 = smul.addr %s26, 32
          %s4736 = smul.addr %s4735, 64
          %s4737 = scalar_lea.hbm %s7, %s4736
          %s4738 = sshll.u32 %s4728, 4
          %s4739 = int_to_ptr.vmem [resolvable:$true] %s4738
          %4744 = dma.vmem_to_hbm [thread:$0]  %s4739, 2048, %s4737, %s4725, 64, 64, 4
        $region68: #{tpu_custom_call.1} parent=47 // pred_fallthru
          _
      $region48: #{tpu_custom_call.1} parent=5 // pred_fallthru
        _
      %p4745 = scmp.le.s32.totalorder 2, %s21
      // Predicated region
      $region69: #{tpu_custom_call.1} parent=5 // pred_check
        %p4746 = pneg %p4745
      $region70: #{tpu_custom_call.1} parent=5 // pred_check_branch
        %4748 = sbr.rel (%p4746) target = $region72
      $region71: #{tpu_custom_call.1} parent=5 // pred_region
        %s4749 = ssub.s32 %s21, 2
        // Predicated region
        $region73: #{tpu_custom_call.1} parent=71 // pred_check
          %p4750 = pneg %p202
        $region74: #{tpu_custom_call.1} parent=71 // pred_check_branch
          %4752 = sbr.rel (%p4750) target = $region76
        $region75: #{tpu_custom_call.1} parent=71 // pred_region
          %s4753 = sand.u32 %s187, 1
          %s4754 = scalar_lea.sflag [#allocation5], %s4753
          %s4755 = sand.u32 %s187, 1
          %s4756 = smul.addr %s4755, 128
          %s4757 = scalar_lea.vmem [#allocation11], %s4756
          %4758 = dma.done %s4754, 2048
        $region76: #{tpu_custom_call.1} parent=71 // pred_fallthru
          _
      $region72: #{tpu_custom_call.1} parent=5 // pred_fallthru
        _
    $region6: #{tpu_custom_call.1} parent=1 // loop_footer
      %s25 = sadd.s32 1, %s21
    $region7: #{tpu_custom_call.1} parent=1 // loop_footer_branch
      %20 = sbr.rel target = $region3
    $region8: #{tpu_custom_call.1} parent=1 // loop_exit
      _
    %4759 = vsyncpa [#allocation4], 1
    %s4760 = scalar_lea.sflag [#allocation4], 1
    %4761 = vsyncpa %s4760, 1
    %4762 = vsyncpa [#allocation7], 1
    %4763 = vsyncpa [#allocation10], 1
    %4764 = vsyncpa [#allocation5], 1
    %s4765 = scalar_lea.sflag [#allocation5], 1
    %4766 = vsyncpa %s4765, 1

</llo_original>
